<compile_context>
chip_gen: v5e
topology: v5e:2x2
jax: 0.10.0
libtpu: 0.0.40
codegen_flags: <defaults>
</compile_context>

<pallas_src>
import functools

import numpy as np
import jax
import jax.numpy as jnp
from jax.experimental import pallas as pl
from jax.experimental.pallas import tpu as pltpu

EPS = 1e-5
LAMDA = 0.05


def _gauss_head_kernel(num_att_map, c, hw, k, pad_w,
                       fea_ref, pool_ref, wcls_ref, bcls_ref, wtr_ref, btr_ref,
                       cx_ref, cy_ref, out_ref):
    tn = fea_ref.shape[0]
    f32 = jnp.float32

    fea_flat = fea_ref[...]                                       # (TN, C*HW)

    # --- all theta/ro MLPs fused into one MXU pass contracting the CHW lane
    # axis of both operands (A @ B.T form, no weight transpose materialized).
    # wtr rows per attention map i: [theta_i (4 rows), ro_i (1 row)].
    tr = jax.lax.dot_general(
        fea_flat, wtr_ref[...], dimension_numbers=(((1,), (1,)), ((), ())),
        preferred_element_type=f32) + btr_ref[...]                # (TN, 5*num_att_map)

    # Hoisted coordinate broadcasts (JAX does not CSE broadcast_in_dim).
    cx = jnp.broadcast_to(cx_ref[...], (tn, hw))
    cy = jnp.broadcast_to(cy_ref[...], (tn, hw))

    # --- Gaussian attention maps (ro path of generate_gaussian_att_map).
    att_map = jnp.zeros((tn, hw), dtype=f32)
    for i in range(num_att_map):                                  # static tiny loop
        base = 5 * i
        theta = jax.nn.sigmoid(tr[:, base:base + 4])
        ro = jnp.tanh(tr[:, base + 4:base + 5])
        # mu = theta[:, ::2] -> cols (0, 2); delta = theta[:, 2:] -> cols (2, 3).
        # (mu1 and d0 intentionally share theta column 2 -- that is exactly
        #  what the PyTorch module does.)
        mu0 = theta[:, 0:1]
        mu1 = theta[:, 2:3]
        d0 = theta[:, 2:3] + EPS
        d1 = theta[:, 3:4] + EPS
        r = ro * 0.5
        frac = 1.0 / (2.0 * LAMDA * (1.0 - r * r))
        u = (cx - mu0) / d0
        v = (cy - mu1) / d1
        att_map = att_map + jnp.exp(-frac * (u * u - 2.0 * r * u * v + v * v))

    # --- ONE fused channel-pooling matmul for [mean-pool rows ; attention rows]:
    #   pooled[n, ch] = sum_q rows[n, ch*HW + q_local] (one-hot pool matrix).
    # att_rep pieces are hw=multiple-of-128 wide -> tile-aligned lane concat
    # (kept as concatenate; proven lowering, same bytes as jnp.tile would move).
    att_rep = jnp.concatenate([att_map] * c, axis=1)              # (TN, C*HW)
    rows = jnp.concatenate([fea_flat, fea_flat * att_rep], axis=0)  # (2TN, C*HW)
    pooled = jax.lax.dot_general(
        rows, pool_ref[...], dimension_numbers=(((1,), (1,)), ((), ())),
        preferred_element_type=f32)                               # (2TN, C)
    # First TN rows are AvgPool2d -> scale by 1/HW; last TN rows are the
    # attention-weighted sums. The result IS the classifier input stack.
    row_id = jax.lax.broadcasted_iota(jnp.int32, (2 * tn, 1), 0)
    feats = pooled * jnp.where(row_id < tn, 1.0 / hw, 1.0)        # (2TN, C)

    # --- classifier_att is None -> classifier_ori on both feature sets,
    # stacked so Linear + Softmax run once. Exact normalization.
    logits = jnp.dot(feats, wcls_ref[...],
                     preferred_element_type=f32) + bcls_ref[...]
    e = jnp.exp(logits - jnp.max(logits, axis=-1, keepdims=True))
    probs = e / jnp.sum(e, axis=-1, keepdims=True)

    # --- single lane-dense unmasked store (one writeback DMA per grid step).
    pieces = [feats[:tn], feats[tn:], probs[:tn], probs[tn:]]
    pad_cols = pad_w - (2 * c + 2 * k)
    if pad_cols:
        pieces.append(jnp.zeros((tn, pad_cols), dtype=f32))
    out_ref[...] = jnp.concatenate(pieces, axis=1)


def gaussian_attention_cluster_head(fea, params, *, num_att_map, tile_n=None):
    """Forward pass. fea: (N, C, H, W) float32 NCHW.

    Returns (feature_ori, cluster_prob_ori, feature_att, cluster_prob_att).
    """
    N, C, H, W = fea.shape
    HW = H * W
    CHW = C * HW
    K = params["w_cls"].shape[1]
    ncols = 5 * num_att_map

    fea_flat = fea.astype(jnp.float32).reshape(N, CHW)   # the only fea copy DMAed

    # Fuse all theta/ro weights into one lane-major (CHW-last) matrix so the
    # kernel does a single well-shaped MXU pass and VMEM is not lane-padded.
    w_tr = jnp.concatenate(
        [jnp.concatenate([params["w_theta"][i].T, params["w_ro"][i].T], axis=0)
         for i in range(num_att_map)], axis=0)            # (5*num_att_map, CHW)
    b_tr = jnp.concatenate(
        [jnp.concatenate([params["b_theta"][i], params["b_ro"][i]], axis=1)
         for i in range(num_att_map)], axis=1)            # (1, 5*num_att_map)

    # Grid-invariant one-hot channel-pooling matrix, built ONCE in the wrapper
    # (review: do not rebuild it inside the kernel each grid step). The constant
    # index_map means the pipeline fetches it a single time across all steps.
    pool = (jnp.arange(CHW, dtype=jnp.int32)[None, :] // HW
            == jnp.arange(C, dtype=jnp.int32)[:, None]).astype(jnp.float32)  # (C, CHW)

    out_w = 2 * C + 2 * K
    pad_w = ((out_w + 127) // 128) * 128       # lane-dense writeback slab width

    # VMEM budget made explicit (32 MiB is safe on v5e/v6e/v7x; the scoped
    # default on v5e is only 16 MiB so we raise it via compiler_params).
    vmem_limit = 32 << 20
    fixed_bytes = 4 * (C * CHW + ncols * CHW + C * K + K + ncols + 2 * HW)

    if tile_n is None:
        # Single grid step by default: the kernel is latency / fixed-cost bound,
        # so extra steps only add per-step overhead on single-TC chips.
        # Split only if the (conservatively double-buffered) fea tile + output
        # slab would threaten the VMEM budget.
        tile_n = N
        while (tile_n % 2 == 0
               and 2 * tile_n * (CHW + pad_w) * 4 + 2 * fixed_bytes > vmem_limit // 2):
            tile_n //= 2
    assert N % tile_n == 0
    grid = (N // tile_n,)

    kernel = functools.partial(_gauss_head_kernel, num_att_map, C, HW, K, pad_w)

    slab = pl.pallas_call(
        kernel,
        out_shape=jax.ShapeDtypeStruct((N, pad_w), jnp.float32),
        grid=grid,
        in_specs=[
            pl.BlockSpec((tile_n, CHW), lambda i: (i, 0)),   # fea (flat, lane-dense)
            pl.BlockSpec((C, CHW), lambda i: (0, 0)),        # one-hot pooling matrix
            pl.BlockSpec((C, K), lambda i: (0, 0)),          # w_cls
            pl.BlockSpec((1, K), lambda i: (0, 0)),          # b_cls
            pl.BlockSpec((ncols, CHW), lambda i: (0, 0)),    # fused theta/ro weight
            pl.BlockSpec((1, ncols), lambda i: (0, 0)),      # fused theta/ro bias
            pl.BlockSpec((1, HW), lambda i: (0, 0)),         # coords x
            pl.BlockSpec((1, HW), lambda i: (0, 0)),         # coords y
        ],
        out_specs=pl.BlockSpec((tile_n, pad_w), lambda i: (i, 0)),
        compiler_params=pltpu.CompilerParams(
            dimension_semantics=("parallel",),
            vmem_limit_bytes=vmem_limit),
    )(fea_flat, pool, params["w_cls"], params["b_cls"], w_tr, b_tr,
      params["coords_x"], params["coords_y"])

    feature_ori = slab[:, 0:C]
    feature_att = slab[:, C:2 * C]
    prob_ori = slab[:, 2 * C:2 * C + K]
    prob_att = slab[:, 2 * C + K:2 * C + 2 * K]
    return feature_ori, prob_ori, feature_att, prob_att


def _make_fea_coords(fea_height, fea_width):
    # Exact replica of the module's __init__ fea_coords loop. Note the original
    # mixes `i*fea_height + j` (x) and `i*fea_width + j` (y); this is only
    # consistent for square maps, so we require H == W like the module implies.
    assert fea_height == fea_width
    coords = np.zeros((fea_height * fea_width, 2), dtype=np.float32)
    for i in range(fea_height):
        for j in range(fea_width):
            coords[i * fea_height + j, 0] = i / float(fea_height - 1)
            coords[i * fea_width + j, 1] = j / float(fea_width - 1)
    return jnp.asarray(coords)


def _reference_forward(fea, params, num_att_map):
    """Pure-JAX mirror of the PyTorch forward (for correctness check)."""
    N, C, H, W = fea.shape
    HW = H * W
    fea3 = fea.reshape(N, C, HW)
    fea_flat = fea.reshape(N, C * HW)

    feature_ori = jnp.mean(fea3, axis=-1)
    prob_ori = jax.nn.softmax(feature_ori @ params["w_cls"] + params["b_cls"][0], axis=-1)

    cx = params["coords_x"][0]
    cy = params["coords_y"][0]
    att_map = jnp.zeros((N, HW), dtype=jnp.float32)
    for i in range(num_att_map):
        theta = jax.nn.sigmoid(fea_flat @ params["w_theta"][i] + params["b_theta"][i][0])
        ro = jnp.tanh(fea_flat @ params["w_ro"][i] + params["b_ro"][i][0])
        mu0, mu1 = theta[:, 0:1], theta[:, 2:3]
        d0, d1 = theta[:, 2:3] + EPS, theta[:, 3:4] + EPS
        r = ro * 0.5
        frac = 1.0 / (2.0 * LAMDA * (1.0 - r ** 2))
        u = (cx[None, :] - mu0) / d0
        v = (cy[None, :] - mu1) / d1
        att_map = att_map + jnp.exp(-frac * (u ** 2 - 2.0 * r * u * v + v ** 2))

    feature_att = jnp.sum(fea3 * att_map[:, None, :], axis=-1)
    prob_att = jax.nn.softmax(feature_att @ params["w_cls"] + params["b_cls"][0], axis=-1)
    return feature_ori, prob_ori, feature_att, prob_att


if __name__ == "__main__":
    # Small shapes consistent with the forward: batch=16, channels=32, 16x16 map.
    N, C, H, W = 16, 32, 16, 16
    NUM_CLUSTER = 10
    NUM_ATT_MAP = 2
    CHW = C * H * W

    key = jax.random.PRNGKey(0)
    k_x, k_wc, k_wt, k_wr = jax.random.split(key, 4)

    x = jax.random.normal(k_x, (N, C, H, W), dtype=jnp.float32)

    # Deterministic synthetic parameters (Linear init: normal(0, 0.01), zero bias).
    params = {
        "w_cls": 0.01 * jax.random.normal(k_wc, (C, NUM_CLUSTER), dtype=jnp.float32),
        "b_cls": jnp.zeros((1, NUM_CLUSTER), dtype=jnp.float32),
        "w_theta": 0.01 * jax.random.normal(k_wt, (NUM_ATT_MAP, CHW, 4), dtype=jnp.float32),
        "b_theta": jnp.zeros((NUM_ATT_MAP, 1, 4), dtype=jnp.float32),
        "w_ro": 0.01 * jax.random.normal(k_wr, (NUM_ATT_MAP, CHW, 1), dtype=jnp.float32),
        "b_ro": jnp.zeros((NUM_ATT_MAP, 1, 1), dtype=jnp.float32),
    }
    coords = _make_fea_coords(H, W)              # (H*W, 2)
    params["coords_x"] = coords[:, 0].reshape(1, H * W)
    params["coords_y"] = coords[:, 1].reshape(1, H * W)

    outs = gaussian_attention_cluster_head(x, params, num_att_map=NUM_ATT_MAP)
    outs = jax.block_until_ready(outs)

    refs = _reference_forward(x, params, NUM_ATT_MAP)

    names = ("feature_ori", "prob_ori", "feature_att", "prob_att")
    # feature_ori goes through an exact one-hot pooling matmul -> tight check.
    # The attention path re-orders f32 accumulation (fused MLP matmul, fused
    # pooling matmul, MXU f32-via-bf16 passes) and runs through exp(), so the
    # remaining outputs are compared at 1e-3.
    tols = {"feature_ori": 1e-4, "prob_ori": 1e-3, "feature_att": 1e-3, "prob_att": 1e-3}
    for name, o, r in zip(names, outs, refs):
        assert o.shape == r.shape and o.dtype == r.dtype, name
        tol = tols[name]
        assert jnp.allclose(o, r, rtol=tol, atol=tol), f"mismatch vs reference: {name}"

    print("KERNEL_OK")
</pallas_src>

<mosaic_0001>
module attributes {stable_mosaic.version = 11 : i64} {
  func.func @_gauss_head_kernel(%arg0: i32, %arg1: memref<16x8192xf32, #tpu.memory_space<vmem>>, %arg2: memref<32x8192xf32, #tpu.memory_space<vmem>>, %arg3: memref<32x10xf32, #tpu.memory_space<vmem>>, %arg4: memref<1x10xf32, #tpu.memory_space<vmem>>, %arg5: memref<10x8192xf32, #tpu.memory_space<vmem>>, %arg6: memref<1x10xf32, #tpu.memory_space<vmem>>, %arg7: memref<1x256xf32, #tpu.memory_space<vmem>>, %arg8: memref<1x256xf32, #tpu.memory_space<vmem>>, %arg9: memref<16x128xf32, #tpu.memory_space<vmem>>) attributes {dimension_semantics = [#tpu.dimension_semantics<parallel>], iteration_bounds = array<i64: 1>, scalar_prefetch = 0 : i64, scratch_operands = 0 : i64, tpu.core_type = #tpu.core_type<tc>, window_params = [{transform_indices = @transform_0, window_bounds = array<i64: 16, 8192>}, {pipeline_mode = #tpu.pipeline_mode<synchronous>, transform_indices = @transform_1, window_bounds = array<i64: 32, 8192>}, {pipeline_mode = #tpu.pipeline_mode<synchronous>, transform_indices = @transform_2, window_bounds = array<i64: 32, 10>}, {pipeline_mode = #tpu.pipeline_mode<synchronous>, transform_indices = @transform_3, window_bounds = array<i64: 1, 10>}, {pipeline_mode = #tpu.pipeline_mode<synchronous>, transform_indices = @transform_4, window_bounds = array<i64: 10, 8192>}, {pipeline_mode = #tpu.pipeline_mode<synchronous>, transform_indices = @transform_5, window_bounds = array<i64: 1, 10>}, {pipeline_mode = #tpu.pipeline_mode<synchronous>, transform_indices = @transform_6, window_bounds = array<i64: 1, 256>}, {pipeline_mode = #tpu.pipeline_mode<synchronous>, transform_indices = @transform_7, window_bounds = array<i64: 1, 256>}, {transform_indices = @transform_8, window_bounds = array<i64: 16, 128>}]} {
    %c0 = arith.constant 0 : index
    %c0_0 = arith.constant 0 : index
    %0 = vector.load %arg1[%c0, %c0_0] : memref<16x8192xf32, #tpu.memory_space<vmem>>, vector<16x8192xf32>
    %c0_1 = arith.constant 0 : index
    %c0_2 = arith.constant 0 : index
    %1 = vector.load %arg5[%c0_1, %c0_2] : memref<10x8192xf32, #tpu.memory_space<vmem>>, vector<10x8192xf32>
    %cst = arith.constant dense<0.000000e+00> : vector<16x10xf32>
    %2 = tpu.matmul %0, %1, %cst {dimension_numbers = #tpu.dot_dimension_numbers<[1], [1], [0], [0], [0, 0, 1, 0], [], []>} : vector<16x8192xf32>, vector<10x8192xf32>, vector<16x10xf32> -> vector<16x10xf32>
    %c0_3 = arith.constant 0 : index
    %c0_4 = arith.constant 0 : index
    %3 = vector.load %arg6[%c0_3, %c0_4] : memref<1x10xf32, #tpu.memory_space<vmem>>, vector<1x10xf32>
    %4 = vector.broadcast %3 : vector<1x10xf32> to vector<16x10xf32>
    %5 = arith.addf %2, %4 : vector<16x10xf32>
    %c0_5 = arith.constant 0 : index
    %c0_6 = arith.constant 0 : index
    %6 = vector.load %arg7[%c0_5, %c0_6] : memref<1x256xf32, #tpu.memory_space<vmem>>, vector<1x256xf32>
    %7 = vector.shape_cast %6 : vector<1x256xf32> to vector<1x256xf32>
    %8 = vector.broadcast %7 : vector<1x256xf32> to vector<16x256xf32>
    %c0_7 = arith.constant 0 : index
    %c0_8 = arith.constant 0 : index
    %9 = vector.load %arg8[%c0_7, %c0_8] : memref<1x256xf32, #tpu.memory_space<vmem>>, vector<1x256xf32>
    %10 = vector.shape_cast %9 : vector<1x256xf32> to vector<1x256xf32>
    %11 = vector.broadcast %10 : vector<1x256xf32> to vector<16x256xf32>
    %cst_9 = arith.constant 0.000000e+00 : f32
    %12 = vector.broadcast %cst_9 : f32 to vector<16x256xf32>
    %13 = vector.extract_strided_slice %5 {offsets = [0, 0], sizes = [16, 4], strides = [1, 1]} : vector<16x10xf32> to vector<16x4xf32>
    %14 = arith.negf %13 : vector<16x4xf32>
    %15 = math.exp %14 : vector<16x4xf32>
    %cst_10 = arith.constant 1.000000e+00 : f32
    %16 = vector.broadcast %cst_10 : f32 to vector<16x4xf32>
    %17 = arith.addf %16, %15 : vector<16x4xf32>
    %18 = arith.divf %16, %17 : vector<16x4xf32>
    %19 = vector.extract_strided_slice %5 {offsets = [0, 4], sizes = [16, 1], strides = [1, 1]} : vector<16x10xf32> to vector<16x1xf32>
    %20 = math.tanh %19 : vector<16x1xf32>
    %21 = vector.extract_strided_slice %18 {offsets = [0, 0], sizes = [16, 1], strides = [1, 1]} : vector<16x4xf32> to vector<16x1xf32>
    %22 = vector.extract_strided_slice %18 {offsets = [0, 2], sizes = [16, 1], strides = [1, 1]} : vector<16x4xf32> to vector<16x1xf32>
    %23 = vector.extract_strided_slice %18 {offsets = [0, 2], sizes = [16, 1], strides = [1, 1]} : vector<16x4xf32> to vector<16x1xf32>
    %cst_11 = arith.constant 9.99999974E-6 : f32
    %24 = vector.broadcast %cst_11 : f32 to vector<16x1xf32>
    %25 = arith.addf %23, %24 : vector<16x1xf32>
    %26 = vector.extract_strided_slice %18 {offsets = [0, 3], sizes = [16, 1], strides = [1, 1]} : vector<16x4xf32> to vector<16x1xf32>
    %cst_12 = arith.constant 9.99999974E-6 : f32
    %27 = vector.broadcast %cst_12 : f32 to vector<16x1xf32>
    %28 = arith.addf %26, %27 : vector<16x1xf32>
    %cst_13 = arith.constant 5.000000e-01 : f32
    %29 = vector.broadcast %cst_13 : f32 to vector<16x1xf32>
    %30 = arith.mulf %20, %29 : vector<16x1xf32>
    %31 = arith.mulf %30, %30 : vector<16x1xf32>
    %cst_14 = arith.constant 1.000000e+00 : f32
    %32 = vector.broadcast %cst_14 : f32 to vector<16x1xf32>
    %33 = arith.subf %32, %31 : vector<16x1xf32>
    %cst_15 = arith.constant 1.000000e-01 : f32
    %34 = vector.broadcast %cst_15 : f32 to vector<16x1xf32>
    %35 = arith.mulf %34, %33 : vector<16x1xf32>
    %cst_16 = arith.constant 1.000000e+00 : f32
    %36 = vector.broadcast %cst_16 : f32 to vector<16x1xf32>
    %37 = arith.divf %36, %35 : vector<16x1xf32>
    %38 = vector.broadcast %21 : vector<16x1xf32> to vector<16x256xf32>
    %39 = arith.subf %8, %38 : vector<16x256xf32>
    %40 = vector.broadcast %25 : vector<16x1xf32> to vector<16x256xf32>
    %41 = arith.divf %39, %40 : vector<16x256xf32>
    %42 = vector.broadcast %22 : vector<16x1xf32> to vector<16x256xf32>
    %43 = arith.subf %11, %42 : vector<16x256xf32>
    %44 = vector.broadcast %28 : vector<16x1xf32> to vector<16x256xf32>
    %45 = arith.divf %43, %44 : vector<16x256xf32>
    %cst_17 = arith.constant 0.000000e+00 : f32
    %46 = vector.broadcast %cst_17 : f32 to vector<16x1xf32>
    %47 = arith.subf %46, %37 : vector<16x1xf32>
    %48 = arith.mulf %41, %41 : vector<16x256xf32>
    %cst_18 = arith.constant 2.000000e+00 : f32
    %49 = vector.broadcast %cst_18 : f32 to vector<16x1xf32>
    %50 = arith.mulf %49, %30 : vector<16x1xf32>
    %51 = vector.broadcast %50 : vector<16x1xf32> to vector<16x256xf32>
    %52 = arith.mulf %51, %41 : vector<16x256xf32>
    %53 = arith.mulf %52, %45 : vector<16x256xf32>
    %54 = arith.subf %48, %53 : vector<16x256xf32>
    %55 = arith.mulf %45, %45 : vector<16x256xf32>
    %56 = arith.addf %54, %55 : vector<16x256xf32>
    %57 = vector.broadcast %47 : vector<16x1xf32> to vector<16x256xf32>
    %58 = arith.mulf %57, %56 : vector<16x256xf32>
    %59 = math.exp %58 : vector<16x256xf32>
    %60 = arith.addf %12, %59 : vector<16x256xf32>
    %61 = vector.extract_strided_slice %5 {offsets = [0, 5], sizes = [16, 4], strides = [1, 1]} : vector<16x10xf32> to vector<16x4xf32>
    %62 = arith.negf %61 : vector<16x4xf32>
    %63 = math.exp %62 : vector<16x4xf32>
    %cst_19 = arith.constant 1.000000e+00 : f32
    %64 = vector.broadcast %cst_19 : f32 to vector<16x4xf32>
    %65 = arith.addf %64, %63 : vector<16x4xf32>
    %66 = arith.divf %64, %65 : vector<16x4xf32>
    %67 = vector.extract_strided_slice %5 {offsets = [0, 9], sizes = [16, 1], strides = [1, 1]} : vector<16x10xf32> to vector<16x1xf32>
    %68 = math.tanh %67 : vector<16x1xf32>
    %69 = vector.extract_strided_slice %66 {offsets = [0, 0], sizes = [16, 1], strides = [1, 1]} : vector<16x4xf32> to vector<16x1xf32>
    %70 = vector.extract_strided_slice %66 {offsets = [0, 2], sizes = [16, 1], strides = [1, 1]} : vector<16x4xf32> to vector<16x1xf32>
    %71 = vector.extract_strided_slice %66 {offsets = [0, 2], sizes = [16, 1], strides = [1, 1]} : vector<16x4xf32> to vector<16x1xf32>
    %cst_20 = arith.constant 9.99999974E-6 : f32
    %72 = vector.broadcast %cst_20 : f32 to vector<16x1xf32>
    %73 = arith.addf %71, %72 : vector<16x1xf32>
    %74 = vector.extract_strided_slice %66 {offsets = [0, 3], sizes = [16, 1], strides = [1, 1]} : vector<16x4xf32> to vector<16x1xf32>
    %cst_21 = arith.constant 9.99999974E-6 : f32
    %75 = vector.broadcast %cst_21 : f32 to vector<16x1xf32>
    %76 = arith.addf %74, %75 : vector<16x1xf32>
    %cst_22 = arith.constant 5.000000e-01 : f32
    %77 = vector.broadcast %cst_22 : f32 to vector<16x1xf32>
    %78 = arith.mulf %68, %77 : vector<16x1xf32>
    %79 = arith.mulf %78, %78 : vector<16x1xf32>
    %cst_23 = arith.constant 1.000000e+00 : f32
    %80 = vector.broadcast %cst_23 : f32 to vector<16x1xf32>
    %81 = arith.subf %80, %79 : vector<16x1xf32>
    %cst_24 = arith.constant 1.000000e-01 : f32
    %82 = vector.broadcast %cst_24 : f32 to vector<16x1xf32>
    %83 = arith.mulf %82, %81 : vector<16x1xf32>
    %cst_25 = arith.constant 1.000000e+00 : f32
    %84 = vector.broadcast %cst_25 : f32 to vector<16x1xf32>
    %85 = arith.divf %84, %83 : vector<16x1xf32>
    %86 = vector.broadcast %69 : vector<16x1xf32> to vector<16x256xf32>
    %87 = arith.subf %8, %86 : vector<16x256xf32>
    %88 = vector.broadcast %73 : vector<16x1xf32> to vector<16x256xf32>
    %89 = arith.divf %87, %88 : vector<16x256xf32>
    %90 = vector.broadcast %70 : vector<16x1xf32> to vector<16x256xf32>
    %91 = arith.subf %11, %90 : vector<16x256xf32>
    %92 = vector.broadcast %76 : vector<16x1xf32> to vector<16x256xf32>
    %93 = arith.divf %91, %92 : vector<16x256xf32>
    %cst_26 = arith.constant 0.000000e+00 : f32
    %94 = vector.broadcast %cst_26 : f32 to vector<16x1xf32>
    %95 = arith.subf %94, %85 : vector<16x1xf32>
    %96 = arith.mulf %89, %89 : vector<16x256xf32>
    %cst_27 = arith.constant 2.000000e+00 : f32
    %97 = vector.broadcast %cst_27 : f32 to vector<16x1xf32>
    %98 = arith.mulf %97, %78 : vector<16x1xf32>
    %99 = vector.broadcast %98 : vector<16x1xf32> to vector<16x256xf32>
    %100 = arith.mulf %99, %89 : vector<16x256xf32>
    %101 = arith.mulf %100, %93 : vector<16x256xf32>
    %102 = arith.subf %96, %101 : vector<16x256xf32>
    %103 = arith.mulf %93, %93 : vector<16x256xf32>
    %104 = arith.addf %102, %103 : vector<16x256xf32>
    %105 = vector.broadcast %95 : vector<16x1xf32> to vector<16x256xf32>
    %106 = arith.mulf %105, %104 : vector<16x256xf32>
    %107 = math.exp %106 : vector<16x256xf32>
    %108 = arith.addf %60, %107 : vector<16x256xf32>
    %109 = tpu.concatenate %108, %108, %108, %108, %108, %108, %108, %108, %108, %108, %108, %108, %108, %108, %108, %108 in 1 : vector<16x256xf32>, vector<16x256xf32>, vector<16x256xf32>, vector<16x256xf32>, vector<16x256xf32>, vector<16x256xf32>, vector<16x256xf32>, vector<16x256xf32>, vector<16x256xf32>, vector<16x256xf32>, vector<16x256xf32>, vector<16x256xf32>, vector<16x256xf32>, vector<16x256xf32>, vector<16x256xf32>, vector<16x256xf32> -> vector<16x4096xf32>
    %110 = tpu.concatenate %108, %108, %108, %108, %108, %108, %108, %108, %108, %108, %108, %108, %108, %108, %108, %108 in 1 : vector<16x256xf32>, vector<16x256xf32>, vector<16x256xf32>, vector<16x256xf32>, vector<16x256xf32>, vector<16x256xf32>, vector<16x256xf32>, vector<16x256xf32>, vector<16x256xf32>, vector<16x256xf32>, vector<16x256xf32>, vector<16x256xf32>, vector<16x256xf32>, vector<16x256xf32>, vector<16x256xf32>, vector<16x256xf32> -> vector<16x4096xf32>
    %111 = tpu.concatenate %109, %110 in 1 : vector<16x4096xf32>, vector<16x4096xf32> -> vector<16x8192xf32>
    %112 = arith.mulf %0, %111 : vector<16x8192xf32>
    %113 = tpu.concatenate %0, %112 in 0 : vector<16x8192xf32>, vector<16x8192xf32> -> vector<32x8192xf32>
    %c0_28 = arith.constant 0 : index
    %c0_29 = arith.constant 0 : index
    %114 = vector.load %arg2[%c0_28, %c0_29] : memref<32x8192xf32, #tpu.memory_space<vmem>>, vector<32x8192xf32>
    %cst_30 = arith.constant dense<0.000000e+00> : vector<32x32xf32>
    %115 = tpu.matmul %113, %114, %cst_30 {dimension_numbers = #tpu.dot_dimension_numbers<[1], [1], [0], [0], [0, 0, 1, 0], [], []>} : vector<32x8192xf32>, vector<32x8192xf32>, vector<32x32xf32> -> vector<32x32xf32>
    %116 = tpu.iota {dimensions = array<i32: 0>} : vector<32x1xi32>
    %c16_i32 = arith.constant 16 : i32
    %117 = vector.broadcast %c16_i32 : i32 to vector<32x1xi32>
    %118 = arith.cmpi slt, %116, %117 : vector<32x1xi32>
    %cst_31 = arith.constant 3.906250e-03 : f32
    %cst_32 = arith.constant 1.000000e+00 : f32
    %119 = vector.broadcast %cst_31 : f32 to vector<32x1xf32>
    %120 = vector.broadcast %cst_32 : f32 to vector<32x1xf32>
    %121 = arith.select %118, %119, %120 : vector<32x1xi1>, vector<32x1xf32>
    %122 = vector.broadcast %121 : vector<32x1xf32> to vector<32x32xf32>
    %123 = arith.mulf %115, %122 : vector<32x32xf32>
    %c0_33 = arith.constant 0 : index
    %c0_34 = arith.constant 0 : index
    %124 = vector.load %arg3[%c0_33, %c0_34] : memref<32x10xf32, #tpu.memory_space<vmem>>, vector<32x10xf32>
    %cst_35 = arith.constant dense<0.000000e+00> : vector<32x10xf32>
    %125 = tpu.matmul %123, %124, %cst_35 {dimension_numbers = #tpu.dot_dimension_numbers<[1], [0], [0], [1], [0, 0, 1, 1], [], []>} : vector<32x32xf32>, vector<32x10xf32>, vector<32x10xf32> -> vector<32x10xf32>
    %c0_36 = arith.constant 0 : index
    %c0_37 = arith.constant 0 : index
    %126 = vector.load %arg4[%c0_36, %c0_37] : memref<1x10xf32, #tpu.memory_space<vmem>>, vector<1x10xf32>
    %127 = vector.broadcast %126 : vector<1x10xf32> to vector<32x10xf32>
    %128 = arith.addf %125, %127 : vector<32x10xf32>
    %cst_38 = arith.constant dense<0xFF800000> : vector<32xf32>
    %129 = vector.multi_reduction <maximumf>, %128, %cst_38 [1] : vector<32x10xf32> to vector<32xf32>
    %130 = vector.shape_cast %129 : vector<32xf32> to vector<32x1xf32>
    %131 = vector.broadcast %130 : vector<32x1xf32> to vector<32x10xf32>
    %132 = arith.subf %128, %131 : vector<32x10xf32>
    %133 = math.exp %132 : vector<32x10xf32>
    %cst_39 = arith.constant dense<0.000000e+00> : vector<32xf32>
    %134 = vector.multi_reduction <add>, %133, %cst_39 [1] : vector<32x10xf32> to vector<32xf32>
    %135 = vector.shape_cast %134 : vector<32xf32> to vector<32x1xf32>
    %136 = vector.broadcast %135 : vector<32x1xf32> to vector<32x10xf32>
    %137 = arith.divf %133, %136 : vector<32x10xf32>
    %138 = vector.extract_strided_slice %123 {offsets = [0, 0], sizes = [16, 32], strides = [1, 1]} : vector<32x32xf32> to vector<16x32xf32>
    %139 = vector.extract_strided_slice %123 {offsets = [16, 0], sizes = [16, 32], strides = [1, 1]} : vector<32x32xf32> to vector<16x32xf32>
    %140 = vector.extract_strided_slice %137 {offsets = [0, 0], sizes = [16, 10], strides = [1, 1]} : vector<32x10xf32> to vector<16x10xf32>
    %141 = vector.extract_strided_slice %137 {offsets = [16, 0], sizes = [16, 10], strides = [1, 1]} : vector<32x10xf32> to vector<16x10xf32>
    %cst_40 = arith.constant 0.000000e+00 : f32
    %142 = vector.broadcast %cst_40 : f32 to vector<16x44xf32>
    %143 = tpu.concatenate %138, %139, %140, %141, %142 in 1 : vector<16x32xf32>, vector<16x32xf32>, vector<16x10xf32>, vector<16x10xf32>, vector<16x44xf32> -> vector<16x128xf32>
    %c0_41 = arith.constant 0 : index
    %c0_42 = arith.constant 0 : index
    %144 = vector.load %arg9[%c0_41, %c0_42] : memref<16x128xf32, #tpu.memory_space<vmem>>, vector<16x128xf32>
    tpu.vector_store %arg9[%c0_41, %c0_42], %143 {strides = array<i32>} : memref<16x128xf32, #tpu.memory_space<vmem>>, vector<16x128xf32>,
    return
  }
  func.func @transform_0(%arg0: i32) -> (i32, i32) {
    %c0_i32 = arith.constant 0 : i32
    %c0_i32_0 = arith.constant 0 : i32
    return %arg0, %c0_i32 : i32, i32
  }
  func.func @transform_1(%arg0: i32) -> (i32, i32) {
    %c0_i32 = arith.constant 0 : i32
    %c0_i32_0 = arith.constant 0 : i32
    %c0_i32_1 = arith.constant 0 : i32
    return %c0_i32, %c0_i32_0 : i32, i32
  }
  func.func @transform_2(%arg0: i32) -> (i32, i32) {
    %c0_i32 = arith.constant 0 : i32
    %c0_i32_0 = arith.constant 0 : i32
    %c0_i32_1 = arith.constant 0 : i32
    return %c0_i32, %c0_i32_0 : i32, i32
  }
  func.func @transform_3(%arg0: i32) -> (i32, i32) {
    %c0_i32 = arith.constant 0 : i32
    %c0_i32_0 = arith.constant 0 : i32
    %c0_i32_1 = arith.constant 0 : i32
    return %c0_i32, %c0_i32_0 : i32, i32
  }
  func.func @transform_4(%arg0: i32) -> (i32, i32) {
    %c0_i32 = arith.constant 0 : i32
    %c0_i32_0 = arith.constant 0 : i32
    %c0_i32_1 = arith.constant 0 : i32
    return %c0_i32, %c0_i32_0 : i32, i32
  }
  func.func @transform_5(%arg0: i32) -> (i32, i32) {
    %c0_i32 = arith.constant 0 : i32
    %c0_i32_0 = arith.constant 0 : i32
    %c0_i32_1 = arith.constant 0 : i32
    return %c0_i32, %c0_i32_0 : i32, i32
  }
  func.func @transform_6(%arg0: i32) -> (i32, i32) {
    %c0_i32 = arith.constant 0 : i32
    %c0_i32_0 = arith.constant 0 : i32
    %c0_i32_1 = arith.constant 0 : i32
    return %c0_i32, %c0_i32_0 : i32, i32
  }
  func.func @transform_7(%arg0: i32) -> (i32, i32) {
    %c0_i32 = arith.constant 0 : i32
    %c0_i32_0 = arith.constant 0 : i32
    %c0_i32_1 = arith.constant 0 : i32
    return %c0_i32, %c0_i32_0 : i32, i32
  }
  func.func @transform_8(%arg0: i32) -> (i32, i32) {
    %c0_i32 = arith.constant 0 : i32
    %c0_i32_0 = arith.constant 0 : i32
    return %arg0, %c0_i32 : i32, i32
  }
}

</mosaic_0001>

<llo_original>
// kernel: tpu_custom_call.1
$region0: #{tpu_custom_call.1}
  #allocation0 [shape = 'u32[]', space=smem, size = 0x4, offset = 0x4, fixed_abs, tag = 'smem constant byte address 0x4 - core index']
  #allocation1 [shape = 'u32[72,128]{1,0:T(1,128)}', space=vmem, size = 0x9000, scoped, tag = 'internal scratch']
  %s0 = inlined_call_operand.hbm [shape: f32[16,8192], index: 0, kind: input, shape index: {}]
  %s1 = inlined_call_operand.hbm [shape: f32[32,8192], index: 1, kind: input, shape index: {}]
  %s2 = inlined_call_operand.vmem [shape: f32[32,10], index: 2, kind: input, shape index: {}]
  %s3 = inlined_call_operand.vmem [shape: f32[1,10], index: 3, kind: input, shape index: {}]
  %s4 = inlined_call_operand.hbm [shape: f32[10,8192], index: 4, kind: input, shape index: {}]
  %s5 = inlined_call_operand.vmem [shape: f32[1,10], index: 5, kind: input, shape index: {}]
  %s6 = inlined_call_operand.vmem [shape: f32[1,256], index: 6, kind: input, shape index: {}]
  %s7 = inlined_call_operand.vmem [shape: f32[1,256], index: 7, kind: input, shape index: {}]
  %s8 = inlined_call_operand.hbm [shape: f32[16,128], index: 8, kind: output, shape index: {}]
  %s9 = sld [smem:[#allocation0]]
  $region54: #{tpu_custom_call.1} parent=0
    _
  %s11 = ssub.s32 1, %s9
  %s12 = scalar_select 0, %s11, %s9
  $region1: #{tpu_custom_call.1} parent=0
    #allocation2 [shape = 'u8[524288]{0}', space=vmem, size = 0x80000, scoped, tag = 'input window, operand 0, single buffered']
    #allocation3 [shape = 's32[1]{0}', space=sflag, size = 0x4, scoped, tag = 'scoped memory for tpu_custom_call.1']
    #allocation4 [shape = 's32[1]{0}', space=sflag, size = 0x4, scoped, tag = 'scoped memory for tpu_custom_call.1']
    #allocation5 [shape = 'u8[1048576]{0}', space=vmem, size = 0x100000, scoped, tag = 'input window, operand 1, single buffered']
    #allocation6 [shape = 's32[1]{0}', space=sflag, size = 0x4, scoped, tag = 'scoped memory for tpu_custom_call.1']
    #allocation7 [shape = 'u8[524288]{0}', space=vmem, size = 0x80000, scoped, tag = 'input window, operand 4, single buffered']
    #allocation8 [shape = 'u8[8192]{0}', space=vmem, size = 0x2000, scoped, tag = 'output window, operand 0, single buffered']
    %13 = vsyncpa [#allocation3], 0
    %14 = vsyncpa [#allocation6], 0
    %15 = vsyncpa [#allocation4], 0
    // Predicated region
    $region2: #{tpu_custom_call.1} parent=1 // pred_check
      _
    $region3: #{tpu_custom_call.1} parent=1 // pred_check_branch
      %17 = sbr.rel (0) target = $region5
    $region4: #{tpu_custom_call.1} parent=1 // pred_region
      %19 = vsyncadd [#allocation3], 0
      %s20 = sshll.u32 %s0, 4
      %s21 = int_to_ptr.hbm [resolvable:$true] %s20
      %s22 = sshll.u32 [#allocation2], 4
      %s23 = int_to_ptr.vmem [resolvable:$true] %s22
      %28 = dma.hbm_to_vmem [thread:$0]  %s21, 16384, %s23, [#allocation3], 8192, 8192, 512
    $region5: #{tpu_custom_call.1} parent=1 // pred_fallthru
      _
    // Predicated region
    $region6: #{tpu_custom_call.1} parent=1 // pred_check
      _
    $region7: #{tpu_custom_call.1} parent=1 // pred_check_branch
      %30 = sbr.rel (0) target = $region9
    $region8: #{tpu_custom_call.1} parent=1 // pred_region
      %32 = vsyncadd [#allocation6], 0
      %s33 = sshll.u32 %s1, 4
      %s34 = int_to_ptr.hbm [resolvable:$true] %s33
      %s35 = sshll.u32 [#allocation5], 4
      %s36 = int_to_ptr.vmem [resolvable:$true] %s35
      %41 = dma.hbm_to_vmem [thread:$0]  %s34, 32768, %s36, [#allocation6], 8192, 8192, 512
    $region9: #{tpu_custom_call.1} parent=1 // pred_fallthru
      _
    // Predicated region
    $region10: #{tpu_custom_call.1} parent=1 // pred_check
      _
    $region11: #{tpu_custom_call.1} parent=1 // pred_check_branch
      %43 = sbr.rel (0) target = $region13
    $region12: #{tpu_custom_call.1} parent=1 // pred_region
      _
    $region13: #{tpu_custom_call.1} parent=1 // pred_fallthru
      _
    // Predicated region
    $region14: #{tpu_custom_call.1} parent=1 // pred_check
      _
    $region15: #{tpu_custom_call.1} parent=1 // pred_check_branch
      %45 = sbr.rel (0) target = $region17
    $region16: #{tpu_custom_call.1} parent=1 // pred_region
      _
    $region17: #{tpu_custom_call.1} parent=1 // pred_fallthru
      _
    // Predicated region
    $region18: #{tpu_custom_call.1} parent=1 // pred_check
      _
    $region19: #{tpu_custom_call.1} parent=1 // pred_check_branch
      %47 = sbr.rel (0) target = $region21
    $region20: #{tpu_custom_call.1} parent=1 // pred_region
      %49 = vsyncadd [#allocation6], 0
      %s50 = sshll.u32 %s4, 4
      %s51 = int_to_ptr.hbm [resolvable:$true] %s50
      %s52 = sshll.u32 [#allocation7], 4
      %s53 = int_to_ptr.vmem [resolvable:$true] %s52
      %58 = dma.hbm_to_vmem [thread:$0]  %s51, 16384, %s53, [#allocation6], 8192, 8192, 512
    $region21: #{tpu_custom_call.1} parent=1 // pred_fallthru
      _
    // Predicated region
    $region22: #{tpu_custom_call.1} parent=1 // pred_check
      _
    $region23: #{tpu_custom_call.1} parent=1 // pred_check_branch
      %60 = sbr.rel (0) target = $region25
    $region24: #{tpu_custom_call.1} parent=1 // pred_region
      _
    $region25: #{tpu_custom_call.1} parent=1 // pred_fallthru
      _
    // Predicated region
    $region26: #{tpu_custom_call.1} parent=1 // pred_check
      _
    $region27: #{tpu_custom_call.1} parent=1 // pred_check_branch
      %62 = sbr.rel (0) target = $region29
    $region28: #{tpu_custom_call.1} parent=1 // pred_region
      _
    $region29: #{tpu_custom_call.1} parent=1 // pred_fallthru
      _
    // Predicated region
    $region30: #{tpu_custom_call.1} parent=1 // pred_check
      _
    $region31: #{tpu_custom_call.1} parent=1 // pred_check_branch
      %64 = sbr.rel (0) target = $region33
    $region32: #{tpu_custom_call.1} parent=1 // pred_region
      _
    $region33: #{tpu_custom_call.1} parent=1 // pred_fallthru
      _
    // Predicated region
    $region34: #{tpu_custom_call.1} parent=1 // pred_check
      _
    $region35: #{tpu_custom_call.1} parent=1 // pred_check_branch
      %66 = sbr.rel (0) target = $region37
    $region36: #{tpu_custom_call.1} parent=1 // pred_region
      %68 = dma.done [#allocation3], 16384
    $region37: #{tpu_custom_call.1} parent=1 // pred_fallthru
      _
    // Predicated region
    $region38: #{tpu_custom_call.1} parent=1 // pred_check
      _
    $region39: #{tpu_custom_call.1} parent=1 // pred_check_branch
      %70 = sbr.rel (0) target = $region41
    $region40: #{tpu_custom_call.1} parent=1 // pred_region
      %72 = dma.done [#allocation6], 32768
    $region41: #{tpu_custom_call.1} parent=1 // pred_fallthru
      _
    // Predicated region
    $region42: #{tpu_custom_call.1} parent=1 // pred_check
      _
    $region43: #{tpu_custom_call.1} parent=1 // pred_check_branch
      %74 = sbr.rel (0) target = $region45
    $region44: #{tpu_custom_call.1} parent=1 // pred_region
      %76 = dma.done [#allocation6], 16384
    $region45: #{tpu_custom_call.1} parent=1 // pred_fallthru
      _
    %v77 = vld [vmem:[#allocation2] sm:$0xff]
    %v78 = vld [vmem:[#allocation2 + $0x8] sm:$0xff]
    %v79 = vld [vmem:[#allocation2 + $0x10] sm:$0xff]
    %v80 = vld [vmem:[#allocation2 + $0x18] sm:$0xff]
    %v81 = vld [vmem:[#allocation2 + $0x20] sm:$0xff]
    %v82 = vld [vmem:[#allocation2 + $0x28] sm:$0xff]
    %v83 = vld [vmem:[#allocation2 + $0x30] sm:$0xff]
    %v84 = vld [vmem:[#allocation2 + $0x38] sm:$0xff]
    %v85 = vld [vmem:[#allocation2 + $0x40] sm:$0xff]
    %v86 = vld [vmem:[#allocation2 + $0x48] sm:$0xff]
    %v87 = vld [vmem:[#allocation2 + $0x50] sm:$0xff]
    %v88 = vld [vmem:[#allocation2 + $0x58] sm:$0xff]
    %v89 = vld [vmem:[#allocation2 + $0x60] sm:$0xff]
    %v90 = vld [vmem:[#allocation2 + $0x68] sm:$0xff]
    %v91 = vld [vmem:[#allocation2 + $0x70] sm:$0xff]
    %v92 = vld [vmem:[#allocation2 + $0x78] sm:$0xff]
    %v93 = vld [vmem:[#allocation2 + $0x80] sm:$0xff]
    %v94 = vld [vmem:[#allocation2 + $0x88] sm:$0xff]
    %v95 = vld [vmem:[#allocation2 + $0x90] sm:$0xff]
    %v96 = vld [vmem:[#allocation2 + $0x98] sm:$0xff]
    %v97 = vld [vmem:[#allocation2 + $0xa0] sm:$0xff]
    %v98 = vld [vmem:[#allocation2 + $0xa8] sm:$0xff]
    %v99 = vld [vmem:[#allocation2 + $0xb0] sm:$0xff]
    %v100 = vld [vmem:[#allocation2 + $0xb8] sm:$0xff]
    %v101 = vld [vmem:[#allocation2 + $0xc0] sm:$0xff]
    %v102 = vld [vmem:[#allocation2 + $0xc8] sm:$0xff]
    %v103 = vld [vmem:[#allocation2 + $0xd0] sm:$0xff]
    %v104 = vld [vmem:[#allocation2 + $0xd8] sm:$0xff]
    %v105 = vld [vmem:[#allocation2 + $0xe0] sm:$0xff]
    %v106 = vld [vmem:[#allocation2 + $0xe8] sm:$0xff]
    %v107 = vld [vmem:[#allocation2 + $0xf0] sm:$0xff]
    %v108 = vld [vmem:[#allocation2 + $0xf8] sm:$0xff]
    %v109 = vld [vmem:[#allocation2 + $0x100] sm:$0xff]
    %v110 = vld [vmem:[#allocation2 + $0x108] sm:$0xff]
    %v111 = vld [vmem:[#allocation2 + $0x110] sm:$0xff]
    %v112 = vld [vmem:[#allocation2 + $0x118] sm:$0xff]
    %v113 = vld [vmem:[#allocation2 + $0x120] sm:$0xff]
    %v114 = vld [vmem:[#allocation2 + $0x128] sm:$0xff]
    %v115 = vld [vmem:[#allocation2 + $0x130] sm:$0xff]
    %v116 = vld [vmem:[#allocation2 + $0x138] sm:$0xff]
    %v117 = vld [vmem:[#allocation2 + $0x140] sm:$0xff]
    %v118 = vld [vmem:[#allocation2 + $0x148] sm:$0xff]
    %v119 = vld [vmem:[#allocation2 + $0x150] sm:$0xff]
    %v120 = vld [vmem:[#allocation2 + $0x158] sm:$0xff]
    %v121 = vld [vmem:[#allocation2 + $0x160] sm:$0xff]
    %v122 = vld [vmem:[#allocation2 + $0x168] sm:$0xff]
    %v123 = vld [vmem:[#allocation2 + $0x170] sm:$0xff]
    %v124 = vld [vmem:[#allocation2 + $0x178] sm:$0xff]
    %v125 = vld [vmem:[#allocation2 + $0x180] sm:$0xff]
    %v126 = vld [vmem:[#allocation2 + $0x188] sm:$0xff]
    %v127 = vld [vmem:[#allocation2 + $0x190] sm:$0xff]
    %v128 = vld [vmem:[#allocation2 + $0x198] sm:$0xff]
    %v129 = vld [vmem:[#allocation2 + $0x1a0] sm:$0xff]
    %v130 = vld [vmem:[#allocation2 + $0x1a8] sm:$0xff]
    %v131 = vld [vmem:[#allocation2 + $0x1b0] sm:$0xff]
    %v132 = vld [vmem:[#allocation2 + $0x1b8] sm:$0xff]
    %v133 = vld [vmem:[#allocation2 + $0x1c0] sm:$0xff]
    %v134 = vld [vmem:[#allocation2 + $0x1c8] sm:$0xff]
    %v135 = vld [vmem:[#allocation2 + $0x1d0] sm:$0xff]
    %v136 = vld [vmem:[#allocation2 + $0x1d8] sm:$0xff]
    %v137 = vld [vmem:[#allocation2 + $0x1e0] sm:$0xff]
    %v138 = vld [vmem:[#allocation2 + $0x1e8] sm:$0xff]
    %v139 = vld [vmem:[#allocation2 + $0x1f0] sm:$0xff]
    %v140 = vld [vmem:[#allocation2 + $0x1f8] sm:$0xff]
    %v141 = vld [vmem:[#allocation2 + $0x200] sm:$0xff]
    %v142 = vld [vmem:[#allocation2 + $0x208] sm:$0xff]
    %v143 = vld [vmem:[#allocation2 + $0x210] sm:$0xff]
    %v144 = vld [vmem:[#allocation2 + $0x218] sm:$0xff]
    %v145 = vld [vmem:[#allocation2 + $0x220] sm:$0xff]
    %v146 = vld [vmem:[#allocation2 + $0x228] sm:$0xff]
    %v147 = vld [vmem:[#allocation2 + $0x230] sm:$0xff]
    %v148 = vld [vmem:[#allocation2 + $0x238] sm:$0xff]
    %v149 = vld [vmem:[#allocation2 + $0x240] sm:$0xff]
    %v150 = vld [vmem:[#allocation2 + $0x248] sm:$0xff]
    %v151 = vld [vmem:[#allocation2 + $0x250] sm:$0xff]
    %v152 = vld [vmem:[#allocation2 + $0x258] sm:$0xff]
    %v153 = vld [vmem:[#allocation2 + $0x260] sm:$0xff]
    %v154 = vld [vmem:[#allocation2 + $0x268] sm:$0xff]
    %v155 = vld [vmem:[#allocation2 + $0x270] sm:$0xff]
    %v156 = vld [vmem:[#allocation2 + $0x278] sm:$0xff]
    %v157 = vld [vmem:[#allocation2 + $0x280] sm:$0xff]
    %v158 = vld [vmem:[#allocation2 + $0x288] sm:$0xff]
    %v159 = vld [vmem:[#allocation2 + $0x290] sm:$0xff]
    %v160 = vld [vmem:[#allocation2 + $0x298] sm:$0xff]
    %v161 = vld [vmem:[#allocation2 + $0x2a0] sm:$0xff]
    %v162 = vld [vmem:[#allocation2 + $0x2a8] sm:$0xff]
    %v163 = vld [vmem:[#allocation2 + $0x2b0] sm:$0xff]
    %v164 = vld [vmem:[#allocation2 + $0x2b8] sm:$0xff]
    %v165 = vld [vmem:[#allocation2 + $0x2c0] sm:$0xff]
    %v166 = vld [vmem:[#allocation2 + $0x2c8] sm:$0xff]
    %v167 = vld [vmem:[#allocation2 + $0x2d0] sm:$0xff]
    %v168 = vld [vmem:[#allocation2 + $0x2d8] sm:$0xff]
    %v169 = vld [vmem:[#allocation2 + $0x2e0] sm:$0xff]
    %v170 = vld [vmem:[#allocation2 + $0x2e8] sm:$0xff]
    %v171 = vld [vmem:[#allocation2 + $0x2f0] sm:$0xff]
    %v172 = vld [vmem:[#allocation2 + $0x2f8] sm:$0xff]
    %v173 = vld [vmem:[#allocation2 + $0x300] sm:$0xff]
    %v174 = vld [vmem:[#allocation2 + $0x308] sm:$0xff]
    %v175 = vld [vmem:[#allocation2 + $0x310] sm:$0xff]
    %v176 = vld [vmem:[#allocation2 + $0x318] sm:$0xff]
    %v177 = vld [vmem:[#allocation2 + $0x320] sm:$0xff]
    %v178 = vld [vmem:[#allocation2 + $0x328] sm:$0xff]
    %v179 = vld [vmem:[#allocation2 + $0x330] sm:$0xff]
    %v180 = vld [vmem:[#allocation2 + $0x338] sm:$0xff]
    %v181 = vld [vmem:[#allocation2 + $0x340] sm:$0xff]
    %v182 = vld [vmem:[#allocation2 + $0x348] sm:$0xff]
    %v183 = vld [vmem:[#allocation2 + $0x350] sm:$0xff]
    %v184 = vld [vmem:[#allocation2 + $0x358] sm:$0xff]
    %v185 = vld [vmem:[#allocation2 + $0x360] sm:$0xff]
    %v186 = vld [vmem:[#allocation2 + $0x368] sm:$0xff]
    %v187 = vld [vmem:[#allocation2 + $0x370] sm:$0xff]
    %v188 = vld [vmem:[#allocation2 + $0x378] sm:$0xff]
    %v189 = vld [vmem:[#allocation2 + $0x380] sm:$0xff]
    %v190 = vld [vmem:[#allocation2 + $0x388] sm:$0xff]
    %v191 = vld [vmem:[#allocation2 + $0x390] sm:$0xff]
    %v192 = vld [vmem:[#allocation2 + $0x398] sm:$0xff]
    %v193 = vld [vmem:[#allocation2 + $0x3a0] sm:$0xff]
    %v194 = vld [vmem:[#allocation2 + $0x3a8] sm:$0xff]
    %v195 = vld [vmem:[#allocation2 + $0x3b0] sm:$0xff]
    %v196 = vld [vmem:[#allocation2 + $0x3b8] sm:$0xff]
    %v197 = vld [vmem:[#allocation2 + $0x3c0] sm:$0xff]
    %v198 = vld [vmem:[#allocation2 + $0x3c8] sm:$0xff]
    %v199 = vld [vmem:[#allocation2 + $0x3d0] sm:$0xff]
    %v200 = vld [vmem:[#allocation2 + $0x3d8] sm:$0xff]
    %v201 = vld [vmem:[#allocation2 + $0x3e0] sm:$0xff]
    %v202 = vld [vmem:[#allocation2 + $0x3e8] sm:$0xff]
    %v203 = vld [vmem:[#allocation2 + $0x3f0] sm:$0xff]
    %v204 = vld [vmem:[#allocation2 + $0x3f8] sm:$0xff]
    %v205 = vld [vmem:[#allocation7] sm:$0xff]
    %v206 = vld [vmem:[#allocation7 + $0x8] sm:$0xff]
    %v207 = vld [vmem:[#allocation7 + $0x10] sm:$0xff]
    %v208 = vld [vmem:[#allocation7 + $0x18] sm:$0xff]
    %v209 = vld [vmem:[#allocation7 + $0x20] sm:$0xff]
    %v210 = vld [vmem:[#allocation7 + $0x28] sm:$0xff]
    %v211 = vld [vmem:[#allocation7 + $0x30] sm:$0xff]
    %v212 = vld [vmem:[#allocation7 + $0x38] sm:$0xff]
    %v213 = vld [vmem:[#allocation7 + $0x40] sm:$0xff]
    %v214 = vld [vmem:[#allocation7 + $0x48] sm:$0xff]
    %v215 = vld [vmem:[#allocation7 + $0x50] sm:$0xff]
    %v216 = vld [vmem:[#allocation7 + $0x58] sm:$0xff]
    %v217 = vld [vmem:[#allocation7 + $0x60] sm:$0xff]
    %v218 = vld [vmem:[#allocation7 + $0x68] sm:$0xff]
    %v219 = vld [vmem:[#allocation7 + $0x70] sm:$0xff]
    %v220 = vld [vmem:[#allocation7 + $0x78] sm:$0xff]
    %v221 = vld [vmem:[#allocation7 + $0x80] sm:$0xff]
    %v222 = vld [vmem:[#allocation7 + $0x88] sm:$0xff]
    %v223 = vld [vmem:[#allocation7 + $0x90] sm:$0xff]
    %v224 = vld [vmem:[#allocation7 + $0x98] sm:$0xff]
    %v225 = vld [vmem:[#allocation7 + $0xa0] sm:$0xff]
    %v226 = vld [vmem:[#allocation7 + $0xa8] sm:$0xff]
    %v227 = vld [vmem:[#allocation7 + $0xb0] sm:$0xff]
    %v228 = vld [vmem:[#allocation7 + $0xb8] sm:$0xff]
    %v229 = vld [vmem:[#allocation7 + $0xc0] sm:$0xff]
    %v230 = vld [vmem:[#allocation7 + $0xc8] sm:$0xff]
    %v231 = vld [vmem:[#allocation7 + $0xd0] sm:$0xff]
    %v232 = vld [vmem:[#allocation7 + $0xd8] sm:$0xff]
    %v233 = vld [vmem:[#allocation7 + $0xe0] sm:$0xff]
    %v234 = vld [vmem:[#allocation7 + $0xe8] sm:$0xff]
    %v235 = vld [vmem:[#allocation7 + $0xf0] sm:$0xff]
    %v236 = vld [vmem:[#allocation7 + $0xf8] sm:$0xff]
    %v237 = vld [vmem:[#allocation7 + $0x100] sm:$0xff]
    %v238 = vld [vmem:[#allocation7 + $0x108] sm:$0xff]
    %v239 = vld [vmem:[#allocation7 + $0x110] sm:$0xff]
    %v240 = vld [vmem:[#allocation7 + $0x118] sm:$0xff]
    %v241 = vld [vmem:[#allocation7 + $0x120] sm:$0xff]
    %v242 = vld [vmem:[#allocation7 + $0x128] sm:$0xff]
    %v243 = vld [vmem:[#allocation7 + $0x130] sm:$0xff]
    %v244 = vld [vmem:[#allocation7 + $0x138] sm:$0xff]
    %v245 = vld [vmem:[#allocation7 + $0x140] sm:$0xff]
    %v246 = vld [vmem:[#allocation7 + $0x148] sm:$0xff]
    %v247 = vld [vmem:[#allocation7 + $0x150] sm:$0xff]
    %v248 = vld [vmem:[#allocation7 + $0x158] sm:$0xff]
    %v249 = vld [vmem:[#allocation7 + $0x160] sm:$0xff]
    %v250 = vld [vmem:[#allocation7 + $0x168] sm:$0xff]
    %v251 = vld [vmem:[#allocation7 + $0x170] sm:$0xff]
    %v252 = vld [vmem:[#allocation7 + $0x178] sm:$0xff]
    %v253 = vld [vmem:[#allocation7 + $0x180] sm:$0xff]
    %v254 = vld [vmem:[#allocation7 + $0x188] sm:$0xff]
    %v255 = vld [vmem:[#allocation7 + $0x190] sm:$0xff]
    %v256 = vld [vmem:[#allocation7 + $0x198] sm:$0xff]
    %v257 = vld [vmem:[#allocation7 + $0x1a0] sm:$0xff]
    %v258 = vld [vmem:[#allocation7 + $0x1a8] sm:$0xff]
    %v259 = vld [vmem:[#allocation7 + $0x1b0] sm:$0xff]
    %v260 = vld [vmem:[#allocation7 + $0x1b8] sm:$0xff]
    %v261 = vld [vmem:[#allocation7 + $0x1c0] sm:$0xff]
    %v262 = vld [vmem:[#allocation7 + $0x1c8] sm:$0xff]
    %v263 = vld [vmem:[#allocation7 + $0x1d0] sm:$0xff]
    %v264 = vld [vmem:[#allocation7 + $0x1d8] sm:$0xff]
    %v265 = vld [vmem:[#allocation7 + $0x1e0] sm:$0xff]
    %v266 = vld [vmem:[#allocation7 + $0x1e8] sm:$0xff]
    %v267 = vld [vmem:[#allocation7 + $0x1f0] sm:$0xff]
    %v268 = vld [vmem:[#allocation7 + $0x1f8] sm:$0xff]
    %v269 = vld [vmem:[#allocation7 + $0x200] sm:$0x3]
    %v270 = vld [vmem:[#allocation7 + $0x208] sm:$0x3]
    %v271 = vld [vmem:[#allocation7 + $0x210] sm:$0x3]
    %v272 = vld [vmem:[#allocation7 + $0x218] sm:$0x3]
    %v273 = vld [vmem:[#allocation7 + $0x220] sm:$0x3]
    %v274 = vld [vmem:[#allocation7 + $0x228] sm:$0x3]
    %v275 = vld [vmem:[#allocation7 + $0x230] sm:$0x3]
    %v276 = vld [vmem:[#allocation7 + $0x238] sm:$0x3]
    %v277 = vld [vmem:[#allocation7 + $0x240] sm:$0x3]
    %v278 = vld [vmem:[#allocation7 + $0x248] sm:$0x3]
    %v279 = vld [vmem:[#allocation7 + $0x250] sm:$0x3]
    %v280 = vld [vmem:[#allocation7 + $0x258] sm:$0x3]
    %v281 = vld [vmem:[#allocation7 + $0x260] sm:$0x3]
    %v282 = vld [vmem:[#allocation7 + $0x268] sm:$0x3]
    %v283 = vld [vmem:[#allocation7 + $0x270] sm:$0x3]
    %v284 = vld [vmem:[#allocation7 + $0x278] sm:$0x3]
    %v285 = vld [vmem:[#allocation7 + $0x280] sm:$0x3]
    %v286 = vld [vmem:[#allocation7 + $0x288] sm:$0x3]
    %v287 = vld [vmem:[#allocation7 + $0x290] sm:$0x3]
    %v288 = vld [vmem:[#allocation7 + $0x298] sm:$0x3]
    %v289 = vld [vmem:[#allocation7 + $0x2a0] sm:$0x3]
    %v290 = vld [vmem:[#allocation7 + $0x2a8] sm:$0x3]
    %v291 = vld [vmem:[#allocation7 + $0x2b0] sm:$0x3]
    %v292 = vld [vmem:[#allocation7 + $0x2b8] sm:$0x3]
    %v293 = vld [vmem:[#allocation7 + $0x2c0] sm:$0x3]
    %v294 = vld [vmem:[#allocation7 + $0x2c8] sm:$0x3]
    %v295 = vld [vmem:[#allocation7 + $0x2d0] sm:$0x3]
    %v296 = vld [vmem:[#allocation7 + $0x2d8] sm:$0x3]
    %v297 = vld [vmem:[#allocation7 + $0x2e0] sm:$0x3]
    %v298 = vld [vmem:[#allocation7 + $0x2e8] sm:$0x3]
    %v299 = vld [vmem:[#allocation7 + $0x2f0] sm:$0x3]
    %v300 = vld [vmem:[#allocation7 + $0x2f8] sm:$0x3]
    %v301 = vld [vmem:[#allocation7 + $0x300] sm:$0x3]
    %v302 = vld [vmem:[#allocation7 + $0x308] sm:$0x3]
    %v303 = vld [vmem:[#allocation7 + $0x310] sm:$0x3]
    %v304 = vld [vmem:[#allocation7 + $0x318] sm:$0x3]
    %v305 = vld [vmem:[#allocation7 + $0x320] sm:$0x3]
    %v306 = vld [vmem:[#allocation7 + $0x328] sm:$0x3]
    %v307 = vld [vmem:[#allocation7 + $0x330] sm:$0x3]
    %v308 = vld [vmem:[#allocation7 + $0x338] sm:$0x3]
    %v309 = vld [vmem:[#allocation7 + $0x340] sm:$0x3]
    %v310 = vld [vmem:[#allocation7 + $0x348] sm:$0x3]
    %v311 = vld [vmem:[#allocation7 + $0x350] sm:$0x3]
    %v312 = vld [vmem:[#allocation7 + $0x358] sm:$0x3]
    %v313 = vld [vmem:[#allocation7 + $0x360] sm:$0x3]
    %v314 = vld [vmem:[#allocation7 + $0x368] sm:$0x3]
    %v315 = vld [vmem:[#allocation7 + $0x370] sm:$0x3]
    %v316 = vld [vmem:[#allocation7 + $0x378] sm:$0x3]
    %v317 = vld [vmem:[#allocation7 + $0x380] sm:$0x3]
    %v318 = vld [vmem:[#allocation7 + $0x388] sm:$0x3]
    %v319 = vld [vmem:[#allocation7 + $0x390] sm:$0x3]
    %v320 = vld [vmem:[#allocation7 + $0x398] sm:$0x3]
    %v321 = vld [vmem:[#allocation7 + $0x3a0] sm:$0x3]
    %v322 = vld [vmem:[#allocation7 + $0x3a8] sm:$0x3]
    %v323 = vld [vmem:[#allocation7 + $0x3b0] sm:$0x3]
    %v324 = vld [vmem:[#allocation7 + $0x3b8] sm:$0x3]
    %v325 = vld [vmem:[#allocation7 + $0x3c0] sm:$0x3]
    %v326 = vld [vmem:[#allocation7 + $0x3c8] sm:$0x3]
    %v327 = vld [vmem:[#allocation7 + $0x3d0] sm:$0x3]
    %v328 = vld [vmem:[#allocation7 + $0x3d8] sm:$0x3]
    %v329 = vld [vmem:[#allocation7 + $0x3e0] sm:$0x3]
    %v330 = vld [vmem:[#allocation7 + $0x3e8] sm:$0x3]
    %v331 = vld [vmem:[#allocation7 + $0x3f0] sm:$0x3]
    %v332 = vld [vmem:[#allocation7 + $0x3f8] sm:$0x3]
    %v333 = vld [vmem:[%s5] sm:$0x1]
    %v335 = vperm.slane %v333, 0
    %337 = vmatpush.xpose.msra.mxu0 0.0
    %338 = vmatpush.xpose.msra.mxu0 0.0
    %339 = vmatpush.xpose.msra.mxu0 0.0
    %340 = vmatpush.xpose.msra.mxu0 0.0
    %341 = vmatpush.xpose.msra.mxu0 0.0
    %342 = vmatpush.xpose.msra.mxu0 0.0
    %343 = vmatpush.xpose.msra.mxu0 0.0
    %344 = vmatpush.xpose.msra.mxu0 0.0
    %345 = vmatpush.xpose.msra.mxu0 0.0
    %346 = vmatpush.xpose.msra.mxu0 0.0
    %347 = vmatpush.xpose.msra.mxu0 0.0
    %348 = vmatpush.xpose.msra.mxu0 0.0
    %349 = vmatpush.xpose.msra.mxu0 0.0
    %350 = vmatpush.xpose.msra.mxu0 0.0
    %351 = vmatpush.xpose.msra.mxu0 %v269
    %352 = vmatpush.xpose.msra.mxu0 %v205
    %353 = vmatmul.f32.gmra.mxu0 %v77
    %v354 = vpop.f32.mrf.mxu0
    %v355 = vadd.f32 %v335, %v354
    %356 = vmatmul.f32.gmra.mxu0 %v141
    %v357 = vpop.f32.mrf.mxu0
    %v358 = vadd.f32 %v335, %v357
    %359 = vdwg.mxu0
    %360 = vmatpush.xpose.msra.mxu0 0.0
    %361 = vmatpush.xpose.msra.mxu0 0.0
    %362 = vmatpush.xpose.msra.mxu0 0.0
    %363 = vmatpush.xpose.msra.mxu0 0.0
    %364 = vmatpush.xpose.msra.mxu0 0.0
    %365 = vmatpush.xpose.msra.mxu0 0.0
    %366 = vmatpush.xpose.msra.mxu0 0.0
    %367 = vmatpush.xpose.msra.mxu0 0.0
    %368 = vmatpush.xpose.msra.mxu0 0.0
    %369 = vmatpush.xpose.msra.mxu0 0.0
    %370 = vmatpush.xpose.msra.mxu0 0.0
    %371 = vmatpush.xpose.msra.mxu0 0.0
    %372 = vmatpush.xpose.msra.mxu0 0.0
    %373 = vmatpush.xpose.msra.mxu0 0.0
    %374 = vmatpush.xpose.msra.mxu0 %v270
    %375 = vmatpush.xpose.msra.mxu0 %v206
    %376 = vmatmul.f32.gmra.mxu0 %v78
    %v377 = vpop.f32.mrf.mxu0
    %v378 = vadd.f32 %v355, %v377
    %379 = vmatmul.f32.gmra.mxu0 %v142
    %v380 = vpop.f32.mrf.mxu0
    %v381 = vadd.f32 %v358, %v380
    %382 = vdwg.mxu0
    %383 = vmatpush.xpose.msra.mxu0 0.0
    %384 = vmatpush.xpose.msra.mxu0 0.0
    %385 = vmatpush.xpose.msra.mxu0 0.0
    %386 = vmatpush.xpose.msra.mxu0 0.0
    %387 = vmatpush.xpose.msra.mxu0 0.0
    %388 = vmatpush.xpose.msra.mxu0 0.0
    %389 = vmatpush.xpose.msra.mxu0 0.0
    %390 = vmatpush.xpose.msra.mxu0 0.0
    %391 = vmatpush.xpose.msra.mxu0 0.0
    %392 = vmatpush.xpose.msra.mxu0 0.0
    %393 = vmatpush.xpose.msra.mxu0 0.0
    %394 = vmatpush.xpose.msra.mxu0 0.0
    %395 = vmatpush.xpose.msra.mxu0 0.0
    %396 = vmatpush.xpose.msra.mxu0 0.0
    %397 = vmatpush.xpose.msra.mxu0 %v271
    %398 = vmatpush.xpose.msra.mxu0 %v207
    %399 = vmatmul.f32.gmra.mxu0 %v79
    %v400 = vpop.f32.mrf.mxu0
    %v401 = vadd.f32 %v378, %v400
    %402 = vmatmul.f32.gmra.mxu0 %v143
    %v403 = vpop.f32.mrf.mxu0
    %v404 = vadd.f32 %v381, %v403
    %405 = vdwg.mxu0
    %406 = vmatpush.xpose.msra.mxu0 0.0
    %407 = vmatpush.xpose.msra.mxu0 0.0
    %408 = vmatpush.xpose.msra.mxu0 0.0
    %409 = vmatpush.xpose.msra.mxu0 0.0
    %410 = vmatpush.xpose.msra.mxu0 0.0
    %411 = vmatpush.xpose.msra.mxu0 0.0
    %412 = vmatpush.xpose.msra.mxu0 0.0
    %413 = vmatpush.xpose.msra.mxu0 0.0
    %414 = vmatpush.xpose.msra.mxu0 0.0
    %415 = vmatpush.xpose.msra.mxu0 0.0
    %416 = vmatpush.xpose.msra.mxu0 0.0
    %417 = vmatpush.xpose.msra.mxu0 0.0
    %418 = vmatpush.xpose.msra.mxu0 0.0
    %419 = vmatpush.xpose.msra.mxu0 0.0
    %420 = vmatpush.xpose.msra.mxu0 %v272
    %421 = vmatpush.xpose.msra.mxu0 %v208
    %422 = vmatmul.f32.gmra.mxu0 %v80
    %v423 = vpop.f32.mrf.mxu0
    %v424 = vadd.f32 %v401, %v423
    %425 = vmatmul.f32.gmra.mxu0 %v144
    %v426 = vpop.f32.mrf.mxu0
    %v427 = vadd.f32 %v404, %v426
    %428 = vdwg.mxu0
    %429 = vmatpush.xpose.msra.mxu0 0.0
    %430 = vmatpush.xpose.msra.mxu0 0.0
    %431 = vmatpush.xpose.msra.mxu0 0.0
    %432 = vmatpush.xpose.msra.mxu0 0.0
    %433 = vmatpush.xpose.msra.mxu0 0.0
    %434 = vmatpush.xpose.msra.mxu0 0.0
    %435 = vmatpush.xpose.msra.mxu0 0.0
    %436 = vmatpush.xpose.msra.mxu0 0.0
    %437 = vmatpush.xpose.msra.mxu0 0.0
    %438 = vmatpush.xpose.msra.mxu0 0.0
    %439 = vmatpush.xpose.msra.mxu0 0.0
    %440 = vmatpush.xpose.msra.mxu0 0.0
    %441 = vmatpush.xpose.msra.mxu0 0.0
    %442 = vmatpush.xpose.msra.mxu0 0.0
    %443 = vmatpush.xpose.msra.mxu0 %v273
    %444 = vmatpush.xpose.msra.mxu0 %v209
    %445 = vmatmul.f32.gmra.mxu0 %v81
    %v446 = vpop.f32.mrf.mxu0
    %v447 = vadd.f32 %v424, %v446
    %448 = vmatmul.f32.gmra.mxu0 %v145
    %v449 = vpop.f32.mrf.mxu0
    %v450 = vadd.f32 %v427, %v449
    %451 = vdwg.mxu0
    %452 = vmatpush.xpose.msra.mxu0 0.0
    %453 = vmatpush.xpose.msra.mxu0 0.0
    %454 = vmatpush.xpose.msra.mxu0 0.0
    %455 = vmatpush.xpose.msra.mxu0 0.0
    %456 = vmatpush.xpose.msra.mxu0 0.0
    %457 = vmatpush.xpose.msra.mxu0 0.0
    %458 = vmatpush.xpose.msra.mxu0 0.0
    %459 = vmatpush.xpose.msra.mxu0 0.0
    %460 = vmatpush.xpose.msra.mxu0 0.0
    %461 = vmatpush.xpose.msra.mxu0 0.0
    %462 = vmatpush.xpose.msra.mxu0 0.0
    %463 = vmatpush.xpose.msra.mxu0 0.0
    %464 = vmatpush.xpose.msra.mxu0 0.0
    %465 = vmatpush.xpose.msra.mxu0 0.0
    %466 = vmatpush.xpose.msra.mxu0 %v274
    %467 = vmatpush.xpose.msra.mxu0 %v210
    %468 = vmatmul.f32.gmra.mxu0 %v82
    %v469 = vpop.f32.mrf.mxu0
    %v470 = vadd.f32 %v447, %v469
    %471 = vmatmul.f32.gmra.mxu0 %v146
    %v472 = vpop.f32.mrf.mxu0
    %v473 = vadd.f32 %v450, %v472
    %474 = vdwg.mxu0
    %475 = vmatpush.xpose.msra.mxu0 0.0
    %476 = vmatpush.xpose.msra.mxu0 0.0
    %477 = vmatpush.xpose.msra.mxu0 0.0
    %478 = vmatpush.xpose.msra.mxu0 0.0
    %479 = vmatpush.xpose.msra.mxu0 0.0
    %480 = vmatpush.xpose.msra.mxu0 0.0
    %481 = vmatpush.xpose.msra.mxu0 0.0
    %482 = vmatpush.xpose.msra.mxu0 0.0
    %483 = vmatpush.xpose.msra.mxu0 0.0
    %484 = vmatpush.xpose.msra.mxu0 0.0
    %485 = vmatpush.xpose.msra.mxu0 0.0
    %486 = vmatpush.xpose.msra.mxu0 0.0
    %487 = vmatpush.xpose.msra.mxu0 0.0
    %488 = vmatpush.xpose.msra.mxu0 0.0
    %489 = vmatpush.xpose.msra.mxu0 %v275
    %490 = vmatpush.xpose.msra.mxu0 %v211
    %491 = vmatmul.f32.gmra.mxu0 %v83
    %v492 = vpop.f32.mrf.mxu0
    %v493 = vadd.f32 %v470, %v492
    %494 = vmatmul.f32.gmra.mxu0 %v147
    %v495 = vpop.f32.mrf.mxu0
    %v496 = vadd.f32 %v473, %v495
    %497 = vdwg.mxu0
    %498 = vmatpush.xpose.msra.mxu0 0.0
    %499 = vmatpush.xpose.msra.mxu0 0.0
    %500 = vmatpush.xpose.msra.mxu0 0.0
    %501 = vmatpush.xpose.msra.mxu0 0.0
    %502 = vmatpush.xpose.msra.mxu0 0.0
    %503 = vmatpush.xpose.msra.mxu0 0.0
    %504 = vmatpush.xpose.msra.mxu0 0.0
    %505 = vmatpush.xpose.msra.mxu0 0.0
    %506 = vmatpush.xpose.msra.mxu0 0.0
    %507 = vmatpush.xpose.msra.mxu0 0.0
    %508 = vmatpush.xpose.msra.mxu0 0.0
    %509 = vmatpush.xpose.msra.mxu0 0.0
    %510 = vmatpush.xpose.msra.mxu0 0.0
    %511 = vmatpush.xpose.msra.mxu0 0.0
    %512 = vmatpush.xpose.msra.mxu0 %v276
    %513 = vmatpush.xpose.msra.mxu0 %v212
    %514 = vmatmul.f32.gmra.mxu0 %v84
    %v515 = vpop.f32.mrf.mxu0
    %v516 = vadd.f32 %v493, %v515
    %517 = vmatmul.f32.gmra.mxu0 %v148
    %v518 = vpop.f32.mrf.mxu0
    %v519 = vadd.f32 %v496, %v518
    %520 = vdwg.mxu0
    %521 = vmatpush.xpose.msra.mxu0 0.0
    %522 = vmatpush.xpose.msra.mxu0 0.0
    %523 = vmatpush.xpose.msra.mxu0 0.0
    %524 = vmatpush.xpose.msra.mxu0 0.0
    %525 = vmatpush.xpose.msra.mxu0 0.0
    %526 = vmatpush.xpose.msra.mxu0 0.0
    %527 = vmatpush.xpose.msra.mxu0 0.0
    %528 = vmatpush.xpose.msra.mxu0 0.0
    %529 = vmatpush.xpose.msra.mxu0 0.0
    %530 = vmatpush.xpose.msra.mxu0 0.0
    %531 = vmatpush.xpose.msra.mxu0 0.0
    %532 = vmatpush.xpose.msra.mxu0 0.0
    %533 = vmatpush.xpose.msra.mxu0 0.0
    %534 = vmatpush.xpose.msra.mxu0 0.0
    %535 = vmatpush.xpose.msra.mxu0 %v277
    %536 = vmatpush.xpose.msra.mxu0 %v213
    %537 = vmatmul.f32.gmra.mxu0 %v85
    %v538 = vpop.f32.mrf.mxu0
    %v539 = vadd.f32 %v516, %v538
    %540 = vmatmul.f32.gmra.mxu0 %v149
    %v541 = vpop.f32.mrf.mxu0
    %v542 = vadd.f32 %v519, %v541
    %543 = vdwg.mxu0
    %544 = vmatpush.xpose.msra.mxu0 0.0
    %545 = vmatpush.xpose.msra.mxu0 0.0
    %546 = vmatpush.xpose.msra.mxu0 0.0
    %547 = vmatpush.xpose.msra.mxu0 0.0
    %548 = vmatpush.xpose.msra.mxu0 0.0
    %549 = vmatpush.xpose.msra.mxu0 0.0
    %550 = vmatpush.xpose.msra.mxu0 0.0
    %551 = vmatpush.xpose.msra.mxu0 0.0
    %552 = vmatpush.xpose.msra.mxu0 0.0
    %553 = vmatpush.xpose.msra.mxu0 0.0
    %554 = vmatpush.xpose.msra.mxu0 0.0
    %555 = vmatpush.xpose.msra.mxu0 0.0
    %556 = vmatpush.xpose.msra.mxu0 0.0
    %557 = vmatpush.xpose.msra.mxu0 0.0
    %558 = vmatpush.xpose.msra.mxu0 %v278
    %559 = vmatpush.xpose.msra.mxu0 %v214
    %560 = vmatmul.f32.gmra.mxu0 %v86
    %v561 = vpop.f32.mrf.mxu0
    %v562 = vadd.f32 %v539, %v561
    %563 = vmatmul.f32.gmra.mxu0 %v150
    %v564 = vpop.f32.mrf.mxu0
    %v565 = vadd.f32 %v542, %v564
    %566 = vdwg.mxu0
    %567 = vmatpush.xpose.msra.mxu0 0.0
    %568 = vmatpush.xpose.msra.mxu0 0.0
    %569 = vmatpush.xpose.msra.mxu0 0.0
    %570 = vmatpush.xpose.msra.mxu0 0.0
    %571 = vmatpush.xpose.msra.mxu0 0.0
    %572 = vmatpush.xpose.msra.mxu0 0.0
    %573 = vmatpush.xpose.msra.mxu0 0.0
    %574 = vmatpush.xpose.msra.mxu0 0.0
    %575 = vmatpush.xpose.msra.mxu0 0.0
    %576 = vmatpush.xpose.msra.mxu0 0.0
    %577 = vmatpush.xpose.msra.mxu0 0.0
    %578 = vmatpush.xpose.msra.mxu0 0.0
    %579 = vmatpush.xpose.msra.mxu0 0.0
    %580 = vmatpush.xpose.msra.mxu0 0.0
    %581 = vmatpush.xpose.msra.mxu0 %v279
    %582 = vmatpush.xpose.msra.mxu0 %v215
    %583 = vmatmul.f32.gmra.mxu0 %v87
    %v584 = vpop.f32.mrf.mxu0
    %v585 = vadd.f32 %v562, %v584
    %586 = vmatmul.f32.gmra.mxu0 %v151
    %v587 = vpop.f32.mrf.mxu0
    %v588 = vadd.f32 %v565, %v587
    %589 = vdwg.mxu0
    %590 = vmatpush.xpose.msra.mxu0 0.0
    %591 = vmatpush.xpose.msra.mxu0 0.0
    %592 = vmatpush.xpose.msra.mxu0 0.0
    %593 = vmatpush.xpose.msra.mxu0 0.0
    %594 = vmatpush.xpose.msra.mxu0 0.0
    %595 = vmatpush.xpose.msra.mxu0 0.0
    %596 = vmatpush.xpose.msra.mxu0 0.0
    %597 = vmatpush.xpose.msra.mxu0 0.0
    %598 = vmatpush.xpose.msra.mxu0 0.0
    %599 = vmatpush.xpose.msra.mxu0 0.0
    %600 = vmatpush.xpose.msra.mxu0 0.0
    %601 = vmatpush.xpose.msra.mxu0 0.0
    %602 = vmatpush.xpose.msra.mxu0 0.0
    %603 = vmatpush.xpose.msra.mxu0 0.0
    %604 = vmatpush.xpose.msra.mxu0 %v280
    %605 = vmatpush.xpose.msra.mxu0 %v216
    %606 = vmatmul.f32.gmra.mxu0 %v88
    %v607 = vpop.f32.mrf.mxu0
    %v608 = vadd.f32 %v585, %v607
    %609 = vmatmul.f32.gmra.mxu0 %v152
    %v610 = vpop.f32.mrf.mxu0
    %v611 = vadd.f32 %v588, %v610
    %612 = vdwg.mxu0
    %613 = vmatpush.xpose.msra.mxu0 0.0
    %614 = vmatpush.xpose.msra.mxu0 0.0
    %615 = vmatpush.xpose.msra.mxu0 0.0
    %616 = vmatpush.xpose.msra.mxu0 0.0
    %617 = vmatpush.xpose.msra.mxu0 0.0
    %618 = vmatpush.xpose.msra.mxu0 0.0
    %619 = vmatpush.xpose.msra.mxu0 0.0
    %620 = vmatpush.xpose.msra.mxu0 0.0
    %621 = vmatpush.xpose.msra.mxu0 0.0
    %622 = vmatpush.xpose.msra.mxu0 0.0
    %623 = vmatpush.xpose.msra.mxu0 0.0
    %624 = vmatpush.xpose.msra.mxu0 0.0
    %625 = vmatpush.xpose.msra.mxu0 0.0
    %626 = vmatpush.xpose.msra.mxu0 0.0
    %627 = vmatpush.xpose.msra.mxu0 %v281
    %628 = vmatpush.xpose.msra.mxu0 %v217
    %629 = vmatmul.f32.gmra.mxu0 %v89
    %v630 = vpop.f32.mrf.mxu0
    %v631 = vadd.f32 %v608, %v630
    %632 = vmatmul.f32.gmra.mxu0 %v153
    %v633 = vpop.f32.mrf.mxu0
    %v634 = vadd.f32 %v611, %v633
    %635 = vdwg.mxu0
    %636 = vmatpush.xpose.msra.mxu0 0.0
    %637 = vmatpush.xpose.msra.mxu0 0.0
    %638 = vmatpush.xpose.msra.mxu0 0.0
    %639 = vmatpush.xpose.msra.mxu0 0.0
    %640 = vmatpush.xpose.msra.mxu0 0.0
    %641 = vmatpush.xpose.msra.mxu0 0.0
    %642 = vmatpush.xpose.msra.mxu0 0.0
    %643 = vmatpush.xpose.msra.mxu0 0.0
    %644 = vmatpush.xpose.msra.mxu0 0.0
    %645 = vmatpush.xpose.msra.mxu0 0.0
    %646 = vmatpush.xpose.msra.mxu0 0.0
    %647 = vmatpush.xpose.msra.mxu0 0.0
    %648 = vmatpush.xpose.msra.mxu0 0.0
    %649 = vmatpush.xpose.msra.mxu0 0.0
    %650 = vmatpush.xpose.msra.mxu0 %v282
    %651 = vmatpush.xpose.msra.mxu0 %v218
    %652 = vmatmul.f32.gmra.mxu0 %v90
    %v653 = vpop.f32.mrf.mxu0
    %v654 = vadd.f32 %v631, %v653
    %655 = vmatmul.f32.gmra.mxu0 %v154
    %v656 = vpop.f32.mrf.mxu0
    %v657 = vadd.f32 %v634, %v656
    %658 = vdwg.mxu0
    %659 = vmatpush.xpose.msra.mxu0 0.0
    %660 = vmatpush.xpose.msra.mxu0 0.0
    %661 = vmatpush.xpose.msra.mxu0 0.0
    %662 = vmatpush.xpose.msra.mxu0 0.0
    %663 = vmatpush.xpose.msra.mxu0 0.0
    %664 = vmatpush.xpose.msra.mxu0 0.0
    %665 = vmatpush.xpose.msra.mxu0 0.0
    %666 = vmatpush.xpose.msra.mxu0 0.0
    %667 = vmatpush.xpose.msra.mxu0 0.0
    %668 = vmatpush.xpose.msra.mxu0 0.0
    %669 = vmatpush.xpose.msra.mxu0 0.0
    %670 = vmatpush.xpose.msra.mxu0 0.0
    %671 = vmatpush.xpose.msra.mxu0 0.0
    %672 = vmatpush.xpose.msra.mxu0 0.0
    %673 = vmatpush.xpose.msra.mxu0 %v283
    %674 = vmatpush.xpose.msra.mxu0 %v219
    %675 = vmatmul.f32.gmra.mxu0 %v91
    %v676 = vpop.f32.mrf.mxu0
    %v677 = vadd.f32 %v654, %v676
    %678 = vmatmul.f32.gmra.mxu0 %v155
    %v679 = vpop.f32.mrf.mxu0
    %v680 = vadd.f32 %v657, %v679
    %681 = vdwg.mxu0
    %682 = vmatpush.xpose.msra.mxu0 0.0
    %683 = vmatpush.xpose.msra.mxu0 0.0
    %684 = vmatpush.xpose.msra.mxu0 0.0
    %685 = vmatpush.xpose.msra.mxu0 0.0
    %686 = vmatpush.xpose.msra.mxu0 0.0
    %687 = vmatpush.xpose.msra.mxu0 0.0
    %688 = vmatpush.xpose.msra.mxu0 0.0
    %689 = vmatpush.xpose.msra.mxu0 0.0
    %690 = vmatpush.xpose.msra.mxu0 0.0
    %691 = vmatpush.xpose.msra.mxu0 0.0
    %692 = vmatpush.xpose.msra.mxu0 0.0
    %693 = vmatpush.xpose.msra.mxu0 0.0
    %694 = vmatpush.xpose.msra.mxu0 0.0
    %695 = vmatpush.xpose.msra.mxu0 0.0
    %696 = vmatpush.xpose.msra.mxu0 %v284
    %697 = vmatpush.xpose.msra.mxu0 %v220
    %698 = vmatmul.f32.gmra.mxu0 %v92
    %v699 = vpop.f32.mrf.mxu0
    %v700 = vadd.f32 %v677, %v699
    %701 = vmatmul.f32.gmra.mxu0 %v156
    %v702 = vpop.f32.mrf.mxu0
    %v703 = vadd.f32 %v680, %v702
    %704 = vdwg.mxu0
    %705 = vmatpush.xpose.msra.mxu0 0.0
    %706 = vmatpush.xpose.msra.mxu0 0.0
    %707 = vmatpush.xpose.msra.mxu0 0.0
    %708 = vmatpush.xpose.msra.mxu0 0.0
    %709 = vmatpush.xpose.msra.mxu0 0.0
    %710 = vmatpush.xpose.msra.mxu0 0.0
    %711 = vmatpush.xpose.msra.mxu0 0.0
    %712 = vmatpush.xpose.msra.mxu0 0.0
    %713 = vmatpush.xpose.msra.mxu0 0.0
    %714 = vmatpush.xpose.msra.mxu0 0.0
    %715 = vmatpush.xpose.msra.mxu0 0.0
    %716 = vmatpush.xpose.msra.mxu0 0.0
    %717 = vmatpush.xpose.msra.mxu0 0.0
    %718 = vmatpush.xpose.msra.mxu0 0.0
    %719 = vmatpush.xpose.msra.mxu0 %v285
    %720 = vmatpush.xpose.msra.mxu0 %v221
    %721 = vmatmul.f32.gmra.mxu0 %v93
    %v722 = vpop.f32.mrf.mxu0
    %v723 = vadd.f32 %v700, %v722
    %724 = vmatmul.f32.gmra.mxu0 %v157
    %v725 = vpop.f32.mrf.mxu0
    %v726 = vadd.f32 %v703, %v725
    %727 = vdwg.mxu0
    %728 = vmatpush.xpose.msra.mxu0 0.0
    %729 = vmatpush.xpose.msra.mxu0 0.0
    %730 = vmatpush.xpose.msra.mxu0 0.0
    %731 = vmatpush.xpose.msra.mxu0 0.0
    %732 = vmatpush.xpose.msra.mxu0 0.0
    %733 = vmatpush.xpose.msra.mxu0 0.0
    %734 = vmatpush.xpose.msra.mxu0 0.0
    %735 = vmatpush.xpose.msra.mxu0 0.0
    %736 = vmatpush.xpose.msra.mxu0 0.0
    %737 = vmatpush.xpose.msra.mxu0 0.0
    %738 = vmatpush.xpose.msra.mxu0 0.0
    %739 = vmatpush.xpose.msra.mxu0 0.0
    %740 = vmatpush.xpose.msra.mxu0 0.0
    %741 = vmatpush.xpose.msra.mxu0 0.0
    %742 = vmatpush.xpose.msra.mxu0 %v286
    %743 = vmatpush.xpose.msra.mxu0 %v222
    %744 = vmatmul.f32.gmra.mxu0 %v94
    %v745 = vpop.f32.mrf.mxu0
    %v746 = vadd.f32 %v723, %v745
    %747 = vmatmul.f32.gmra.mxu0 %v158
    %v748 = vpop.f32.mrf.mxu0
    %v749 = vadd.f32 %v726, %v748
    %750 = vdwg.mxu0
    %751 = vmatpush.xpose.msra.mxu0 0.0
    %752 = vmatpush.xpose.msra.mxu0 0.0
    %753 = vmatpush.xpose.msra.mxu0 0.0
    %754 = vmatpush.xpose.msra.mxu0 0.0
    %755 = vmatpush.xpose.msra.mxu0 0.0
    %756 = vmatpush.xpose.msra.mxu0 0.0
    %757 = vmatpush.xpose.msra.mxu0 0.0
    %758 = vmatpush.xpose.msra.mxu0 0.0
    %759 = vmatpush.xpose.msra.mxu0 0.0
    %760 = vmatpush.xpose.msra.mxu0 0.0
    %761 = vmatpush.xpose.msra.mxu0 0.0
    %762 = vmatpush.xpose.msra.mxu0 0.0
    %763 = vmatpush.xpose.msra.mxu0 0.0
    %764 = vmatpush.xpose.msra.mxu0 0.0
    %765 = vmatpush.xpose.msra.mxu0 %v287
    %766 = vmatpush.xpose.msra.mxu0 %v223
    %767 = vmatmul.f32.gmra.mxu0 %v95
    %v768 = vpop.f32.mrf.mxu0
    %v769 = vadd.f32 %v746, %v768
    %770 = vmatmul.f32.gmra.mxu0 %v159
    %v771 = vpop.f32.mrf.mxu0
    %v772 = vadd.f32 %v749, %v771
    %773 = vdwg.mxu0
    %774 = vmatpush.xpose.msra.mxu0 0.0
    %775 = vmatpush.xpose.msra.mxu0 0.0
    %776 = vmatpush.xpose.msra.mxu0 0.0
    %777 = vmatpush.xpose.msra.mxu0 0.0
    %778 = vmatpush.xpose.msra.mxu0 0.0
    %779 = vmatpush.xpose.msra.mxu0 0.0
    %780 = vmatpush.xpose.msra.mxu0 0.0
    %781 = vmatpush.xpose.msra.mxu0 0.0
    %782 = vmatpush.xpose.msra.mxu0 0.0
    %783 = vmatpush.xpose.msra.mxu0 0.0
    %784 = vmatpush.xpose.msra.mxu0 0.0
    %785 = vmatpush.xpose.msra.mxu0 0.0
    %786 = vmatpush.xpose.msra.mxu0 0.0
    %787 = vmatpush.xpose.msra.mxu0 0.0
    %788 = vmatpush.xpose.msra.mxu0 %v288
    %789 = vmatpush.xpose.msra.mxu0 %v224
    %790 = vmatmul.f32.gmra.mxu0 %v96
    %v791 = vpop.f32.mrf.mxu0
    %v792 = vadd.f32 %v769, %v791
    %793 = vmatmul.f32.gmra.mxu0 %v160
    %v794 = vpop.f32.mrf.mxu0
    %v795 = vadd.f32 %v772, %v794
    %796 = vdwg.mxu0
    %797 = vmatpush.xpose.msra.mxu0 0.0
    %798 = vmatpush.xpose.msra.mxu0 0.0
    %799 = vmatpush.xpose.msra.mxu0 0.0
    %800 = vmatpush.xpose.msra.mxu0 0.0
    %801 = vmatpush.xpose.msra.mxu0 0.0
    %802 = vmatpush.xpose.msra.mxu0 0.0
    %803 = vmatpush.xpose.msra.mxu0 0.0
    %804 = vmatpush.xpose.msra.mxu0 0.0
    %805 = vmatpush.xpose.msra.mxu0 0.0
    %806 = vmatpush.xpose.msra.mxu0 0.0
    %807 = vmatpush.xpose.msra.mxu0 0.0
    %808 = vmatpush.xpose.msra.mxu0 0.0
    %809 = vmatpush.xpose.msra.mxu0 0.0
    %810 = vmatpush.xpose.msra.mxu0 0.0
    %811 = vmatpush.xpose.msra.mxu0 %v289
    %812 = vmatpush.xpose.msra.mxu0 %v225
    %813 = vmatmul.f32.gmra.mxu0 %v97
    %v814 = vpop.f32.mrf.mxu0
    %v815 = vadd.f32 %v792, %v814
    %816 = vmatmul.f32.gmra.mxu0 %v161
    %v817 = vpop.f32.mrf.mxu0
    %v818 = vadd.f32 %v795, %v817
    %819 = vdwg.mxu0
    %820 = vmatpush.xpose.msra.mxu0 0.0
    %821 = vmatpush.xpose.msra.mxu0 0.0
    %822 = vmatpush.xpose.msra.mxu0 0.0
    %823 = vmatpush.xpose.msra.mxu0 0.0
    %824 = vmatpush.xpose.msra.mxu0 0.0
    %825 = vmatpush.xpose.msra.mxu0 0.0
    %826 = vmatpush.xpose.msra.mxu0 0.0
    %827 = vmatpush.xpose.msra.mxu0 0.0
    %828 = vmatpush.xpose.msra.mxu0 0.0
    %829 = vmatpush.xpose.msra.mxu0 0.0
    %830 = vmatpush.xpose.msra.mxu0 0.0
    %831 = vmatpush.xpose.msra.mxu0 0.0
    %832 = vmatpush.xpose.msra.mxu0 0.0
    %833 = vmatpush.xpose.msra.mxu0 0.0
    %834 = vmatpush.xpose.msra.mxu0 %v290
    %835 = vmatpush.xpose.msra.mxu0 %v226
    %836 = vmatmul.f32.gmra.mxu0 %v98
    %v837 = vpop.f32.mrf.mxu0
    %v838 = vadd.f32 %v815, %v837
    %839 = vmatmul.f32.gmra.mxu0 %v162
    %v840 = vpop.f32.mrf.mxu0
    %v841 = vadd.f32 %v818, %v840
    %842 = vdwg.mxu0
    %843 = vmatpush.xpose.msra.mxu0 0.0
    %844 = vmatpush.xpose.msra.mxu0 0.0
    %845 = vmatpush.xpose.msra.mxu0 0.0
    %846 = vmatpush.xpose.msra.mxu0 0.0
    %847 = vmatpush.xpose.msra.mxu0 0.0
    %848 = vmatpush.xpose.msra.mxu0 0.0
    %849 = vmatpush.xpose.msra.mxu0 0.0
    %850 = vmatpush.xpose.msra.mxu0 0.0
    %851 = vmatpush.xpose.msra.mxu0 0.0
    %852 = vmatpush.xpose.msra.mxu0 0.0
    %853 = vmatpush.xpose.msra.mxu0 0.0
    %854 = vmatpush.xpose.msra.mxu0 0.0
    %855 = vmatpush.xpose.msra.mxu0 0.0
    %856 = vmatpush.xpose.msra.mxu0 0.0
    %857 = vmatpush.xpose.msra.mxu0 %v291
    %858 = vmatpush.xpose.msra.mxu0 %v227
    %859 = vmatmul.f32.gmra.mxu0 %v99
    %v860 = vpop.f32.mrf.mxu0
    %v861 = vadd.f32 %v838, %v860
    %862 = vmatmul.f32.gmra.mxu0 %v163
    %v863 = vpop.f32.mrf.mxu0
    %v864 = vadd.f32 %v841, %v863
    %865 = vdwg.mxu0
    %866 = vmatpush.xpose.msra.mxu0 0.0
    %867 = vmatpush.xpose.msra.mxu0 0.0
    %868 = vmatpush.xpose.msra.mxu0 0.0
    %869 = vmatpush.xpose.msra.mxu0 0.0
    %870 = vmatpush.xpose.msra.mxu0 0.0
    %871 = vmatpush.xpose.msra.mxu0 0.0
    %872 = vmatpush.xpose.msra.mxu0 0.0
    %873 = vmatpush.xpose.msra.mxu0 0.0
    %874 = vmatpush.xpose.msra.mxu0 0.0
    %875 = vmatpush.xpose.msra.mxu0 0.0
    %876 = vmatpush.xpose.msra.mxu0 0.0
    %877 = vmatpush.xpose.msra.mxu0 0.0
    %878 = vmatpush.xpose.msra.mxu0 0.0
    %879 = vmatpush.xpose.msra.mxu0 0.0
    %880 = vmatpush.xpose.msra.mxu0 %v292
    %881 = vmatpush.xpose.msra.mxu0 %v228
    %882 = vmatmul.f32.gmra.mxu0 %v100
    %v883 = vpop.f32.mrf.mxu0
    %v884 = vadd.f32 %v861, %v883
    %885 = vmatmul.f32.gmra.mxu0 %v164
    %v886 = vpop.f32.mrf.mxu0
    %v887 = vadd.f32 %v864, %v886
    %888 = vdwg.mxu0
    %889 = vmatpush.xpose.msra.mxu0 0.0
    %890 = vmatpush.xpose.msra.mxu0 0.0
    %891 = vmatpush.xpose.msra.mxu0 0.0
    %892 = vmatpush.xpose.msra.mxu0 0.0
    %893 = vmatpush.xpose.msra.mxu0 0.0
    %894 = vmatpush.xpose.msra.mxu0 0.0
    %895 = vmatpush.xpose.msra.mxu0 0.0
    %896 = vmatpush.xpose.msra.mxu0 0.0
    %897 = vmatpush.xpose.msra.mxu0 0.0
    %898 = vmatpush.xpose.msra.mxu0 0.0
    %899 = vmatpush.xpose.msra.mxu0 0.0
    %900 = vmatpush.xpose.msra.mxu0 0.0
    %901 = vmatpush.xpose.msra.mxu0 0.0
    %902 = vmatpush.xpose.msra.mxu0 0.0
    %903 = vmatpush.xpose.msra.mxu0 %v293
    %904 = vmatpush.xpose.msra.mxu0 %v229
    %905 = vmatmul.f32.gmra.mxu0 %v101
    %v906 = vpop.f32.mrf.mxu0
    %v907 = vadd.f32 %v884, %v906
    %908 = vmatmul.f32.gmra.mxu0 %v165
    %v909 = vpop.f32.mrf.mxu0
    %v910 = vadd.f32 %v887, %v909
    %911 = vdwg.mxu0
    %912 = vmatpush.xpose.msra.mxu0 0.0
    %913 = vmatpush.xpose.msra.mxu0 0.0
    %914 = vmatpush.xpose.msra.mxu0 0.0
    %915 = vmatpush.xpose.msra.mxu0 0.0
    %916 = vmatpush.xpose.msra.mxu0 0.0
    %917 = vmatpush.xpose.msra.mxu0 0.0
    %918 = vmatpush.xpose.msra.mxu0 0.0
    %919 = vmatpush.xpose.msra.mxu0 0.0
    %920 = vmatpush.xpose.msra.mxu0 0.0
    %921 = vmatpush.xpose.msra.mxu0 0.0
    %922 = vmatpush.xpose.msra.mxu0 0.0
    %923 = vmatpush.xpose.msra.mxu0 0.0
    %924 = vmatpush.xpose.msra.mxu0 0.0
    %925 = vmatpush.xpose.msra.mxu0 0.0
    %926 = vmatpush.xpose.msra.mxu0 %v294
    %927 = vmatpush.xpose.msra.mxu0 %v230
    %928 = vmatmul.f32.gmra.mxu0 %v102
    %v929 = vpop.f32.mrf.mxu0
    %v930 = vadd.f32 %v907, %v929
    %931 = vmatmul.f32.gmra.mxu0 %v166
    %v932 = vpop.f32.mrf.mxu0
    %v933 = vadd.f32 %v910, %v932
    %934 = vdwg.mxu0
    %935 = vmatpush.xpose.msra.mxu0 0.0
    %936 = vmatpush.xpose.msra.mxu0 0.0
    %937 = vmatpush.xpose.msra.mxu0 0.0
    %938 = vmatpush.xpose.msra.mxu0 0.0
    %939 = vmatpush.xpose.msra.mxu0 0.0
    %940 = vmatpush.xpose.msra.mxu0 0.0
    %941 = vmatpush.xpose.msra.mxu0 0.0
    %942 = vmatpush.xpose.msra.mxu0 0.0
    %943 = vmatpush.xpose.msra.mxu0 0.0
    %944 = vmatpush.xpose.msra.mxu0 0.0
    %945 = vmatpush.xpose.msra.mxu0 0.0
    %946 = vmatpush.xpose.msra.mxu0 0.0
    %947 = vmatpush.xpose.msra.mxu0 0.0
    %948 = vmatpush.xpose.msra.mxu0 0.0
    %949 = vmatpush.xpose.msra.mxu0 %v295
    %950 = vmatpush.xpose.msra.mxu0 %v231
    %951 = vmatmul.f32.gmra.mxu0 %v103
    %v952 = vpop.f32.mrf.mxu0
    %v953 = vadd.f32 %v930, %v952
    %954 = vmatmul.f32.gmra.mxu0 %v167
    %v955 = vpop.f32.mrf.mxu0
    %v956 = vadd.f32 %v933, %v955
    %957 = vdwg.mxu0
    %958 = vmatpush.xpose.msra.mxu0 0.0
    %959 = vmatpush.xpose.msra.mxu0 0.0
    %960 = vmatpush.xpose.msra.mxu0 0.0
    %961 = vmatpush.xpose.msra.mxu0 0.0
    %962 = vmatpush.xpose.msra.mxu0 0.0
    %963 = vmatpush.xpose.msra.mxu0 0.0
    %964 = vmatpush.xpose.msra.mxu0 0.0
    %965 = vmatpush.xpose.msra.mxu0 0.0
    %966 = vmatpush.xpose.msra.mxu0 0.0
    %967 = vmatpush.xpose.msra.mxu0 0.0
    %968 = vmatpush.xpose.msra.mxu0 0.0
    %969 = vmatpush.xpose.msra.mxu0 0.0
    %970 = vmatpush.xpose.msra.mxu0 0.0
    %971 = vmatpush.xpose.msra.mxu0 0.0
    %972 = vmatpush.xpose.msra.mxu0 %v296
    %973 = vmatpush.xpose.msra.mxu0 %v232
    %974 = vmatmul.f32.gmra.mxu0 %v104
    %v975 = vpop.f32.mrf.mxu0
    %v976 = vadd.f32 %v953, %v975
    %977 = vmatmul.f32.gmra.mxu0 %v168
    %v978 = vpop.f32.mrf.mxu0
    %v979 = vadd.f32 %v956, %v978
    %980 = vdwg.mxu0
    %981 = vmatpush.xpose.msra.mxu0 0.0
    %982 = vmatpush.xpose.msra.mxu0 0.0
    %983 = vmatpush.xpose.msra.mxu0 0.0
    %984 = vmatpush.xpose.msra.mxu0 0.0
    %985 = vmatpush.xpose.msra.mxu0 0.0
    %986 = vmatpush.xpose.msra.mxu0 0.0
    %987 = vmatpush.xpose.msra.mxu0 0.0
    %988 = vmatpush.xpose.msra.mxu0 0.0
    %989 = vmatpush.xpose.msra.mxu0 0.0
    %990 = vmatpush.xpose.msra.mxu0 0.0
    %991 = vmatpush.xpose.msra.mxu0 0.0
    %992 = vmatpush.xpose.msra.mxu0 0.0
    %993 = vmatpush.xpose.msra.mxu0 0.0
    %994 = vmatpush.xpose.msra.mxu0 0.0
    %995 = vmatpush.xpose.msra.mxu0 %v297
    %996 = vmatpush.xpose.msra.mxu0 %v233
    %997 = vmatmul.f32.gmra.mxu0 %v105
    %v998 = vpop.f32.mrf.mxu0
    %v999 = vadd.f32 %v976, %v998
    %1000 = vmatmul.f32.gmra.mxu0 %v169
    %v1001 = vpop.f32.mrf.mxu0
    %v1002 = vadd.f32 %v979, %v1001
    %1003 = vdwg.mxu0
    %1004 = vmatpush.xpose.msra.mxu0 0.0
    %1005 = vmatpush.xpose.msra.mxu0 0.0
    %1006 = vmatpush.xpose.msra.mxu0 0.0
    %1007 = vmatpush.xpose.msra.mxu0 0.0
    %1008 = vmatpush.xpose.msra.mxu0 0.0
    %1009 = vmatpush.xpose.msra.mxu0 0.0
    %1010 = vmatpush.xpose.msra.mxu0 0.0
    %1011 = vmatpush.xpose.msra.mxu0 0.0
    %1012 = vmatpush.xpose.msra.mxu0 0.0
    %1013 = vmatpush.xpose.msra.mxu0 0.0
    %1014 = vmatpush.xpose.msra.mxu0 0.0
    %1015 = vmatpush.xpose.msra.mxu0 0.0
    %1016 = vmatpush.xpose.msra.mxu0 0.0
    %1017 = vmatpush.xpose.msra.mxu0 0.0
    %1018 = vmatpush.xpose.msra.mxu0 %v298
    %1019 = vmatpush.xpose.msra.mxu0 %v234
    %1020 = vmatmul.f32.gmra.mxu0 %v106
    %v1021 = vpop.f32.mrf.mxu0
    %v1022 = vadd.f32 %v999, %v1021
    %1023 = vmatmul.f32.gmra.mxu0 %v170
    %v1024 = vpop.f32.mrf.mxu0
    %v1025 = vadd.f32 %v1002, %v1024
    %1026 = vdwg.mxu0
    %1027 = vmatpush.xpose.msra.mxu0 0.0
    %1028 = vmatpush.xpose.msra.mxu0 0.0
    %1029 = vmatpush.xpose.msra.mxu0 0.0
    %1030 = vmatpush.xpose.msra.mxu0 0.0
    %1031 = vmatpush.xpose.msra.mxu0 0.0
    %1032 = vmatpush.xpose.msra.mxu0 0.0
    %1033 = vmatpush.xpose.msra.mxu0 0.0
    %1034 = vmatpush.xpose.msra.mxu0 0.0
    %1035 = vmatpush.xpose.msra.mxu0 0.0
    %1036 = vmatpush.xpose.msra.mxu0 0.0
    %1037 = vmatpush.xpose.msra.mxu0 0.0
    %1038 = vmatpush.xpose.msra.mxu0 0.0
    %1039 = vmatpush.xpose.msra.mxu0 0.0
    %1040 = vmatpush.xpose.msra.mxu0 0.0
    %1041 = vmatpush.xpose.msra.mxu0 %v299
    %1042 = vmatpush.xpose.msra.mxu0 %v235
    %1043 = vmatmul.f32.gmra.mxu0 %v107
    %v1044 = vpop.f32.mrf.mxu0
    %v1045 = vadd.f32 %v1022, %v1044
    %1046 = vmatmul.f32.gmra.mxu0 %v171
    %v1047 = vpop.f32.mrf.mxu0
    %v1048 = vadd.f32 %v1025, %v1047
    %1049 = vdwg.mxu0
    %1050 = vmatpush.xpose.msra.mxu0 0.0
    %1051 = vmatpush.xpose.msra.mxu0 0.0
    %1052 = vmatpush.xpose.msra.mxu0 0.0
    %1053 = vmatpush.xpose.msra.mxu0 0.0
    %1054 = vmatpush.xpose.msra.mxu0 0.0
    %1055 = vmatpush.xpose.msra.mxu0 0.0
    %1056 = vmatpush.xpose.msra.mxu0 0.0
    %1057 = vmatpush.xpose.msra.mxu0 0.0
    %1058 = vmatpush.xpose.msra.mxu0 0.0
    %1059 = vmatpush.xpose.msra.mxu0 0.0
    %1060 = vmatpush.xpose.msra.mxu0 0.0
    %1061 = vmatpush.xpose.msra.mxu0 0.0
    %1062 = vmatpush.xpose.msra.mxu0 0.0
    %1063 = vmatpush.xpose.msra.mxu0 0.0
    %1064 = vmatpush.xpose.msra.mxu0 %v300
    %1065 = vmatpush.xpose.msra.mxu0 %v236
    %1066 = vmatmul.f32.gmra.mxu0 %v108
    %v1067 = vpop.f32.mrf.mxu0
    %v1068 = vadd.f32 %v1045, %v1067
    %1069 = vmatmul.f32.gmra.mxu0 %v172
    %v1070 = vpop.f32.mrf.mxu0
    %v1071 = vadd.f32 %v1048, %v1070
    %1072 = vdwg.mxu0
    %1073 = vmatpush.xpose.msra.mxu0 0.0
    %1074 = vmatpush.xpose.msra.mxu0 0.0
    %1075 = vmatpush.xpose.msra.mxu0 0.0
    %1076 = vmatpush.xpose.msra.mxu0 0.0
    %1077 = vmatpush.xpose.msra.mxu0 0.0
    %1078 = vmatpush.xpose.msra.mxu0 0.0
    %1079 = vmatpush.xpose.msra.mxu0 0.0
    %1080 = vmatpush.xpose.msra.mxu0 0.0
    %1081 = vmatpush.xpose.msra.mxu0 0.0
    %1082 = vmatpush.xpose.msra.mxu0 0.0
    %1083 = vmatpush.xpose.msra.mxu0 0.0
    %1084 = vmatpush.xpose.msra.mxu0 0.0
    %1085 = vmatpush.xpose.msra.mxu0 0.0
    %1086 = vmatpush.xpose.msra.mxu0 0.0
    %1087 = vmatpush.xpose.msra.mxu0 %v301
    %1088 = vmatpush.xpose.msra.mxu0 %v237
    %1089 = vmatmul.f32.gmra.mxu0 %v109
    %v1090 = vpop.f32.mrf.mxu0
    %v1091 = vadd.f32 %v1068, %v1090
    %1092 = vmatmul.f32.gmra.mxu0 %v173
    %v1093 = vpop.f32.mrf.mxu0
    %v1094 = vadd.f32 %v1071, %v1093
    %1095 = vdwg.mxu0
    %1096 = vmatpush.xpose.msra.mxu0 0.0
    %1097 = vmatpush.xpose.msra.mxu0 0.0
    %1098 = vmatpush.xpose.msra.mxu0 0.0
    %1099 = vmatpush.xpose.msra.mxu0 0.0
    %1100 = vmatpush.xpose.msra.mxu0 0.0
    %1101 = vmatpush.xpose.msra.mxu0 0.0
    %1102 = vmatpush.xpose.msra.mxu0 0.0
    %1103 = vmatpush.xpose.msra.mxu0 0.0
    %1104 = vmatpush.xpose.msra.mxu0 0.0
    %1105 = vmatpush.xpose.msra.mxu0 0.0
    %1106 = vmatpush.xpose.msra.mxu0 0.0
    %1107 = vmatpush.xpose.msra.mxu0 0.0
    %1108 = vmatpush.xpose.msra.mxu0 0.0
    %1109 = vmatpush.xpose.msra.mxu0 0.0
    %1110 = vmatpush.xpose.msra.mxu0 %v302
    %1111 = vmatpush.xpose.msra.mxu0 %v238
    %1112 = vmatmul.f32.gmra.mxu0 %v110
    %v1113 = vpop.f32.mrf.mxu0
    %v1114 = vadd.f32 %v1091, %v1113
    %1115 = vmatmul.f32.gmra.mxu0 %v174
    %v1116 = vpop.f32.mrf.mxu0
    %v1117 = vadd.f32 %v1094, %v1116
    %1118 = vdwg.mxu0
    %1119 = vmatpush.xpose.msra.mxu0 0.0
    %1120 = vmatpush.xpose.msra.mxu0 0.0
    %1121 = vmatpush.xpose.msra.mxu0 0.0
    %1122 = vmatpush.xpose.msra.mxu0 0.0
    %1123 = vmatpush.xpose.msra.mxu0 0.0
    %1124 = vmatpush.xpose.msra.mxu0 0.0
    %1125 = vmatpush.xpose.msra.mxu0 0.0
    %1126 = vmatpush.xpose.msra.mxu0 0.0
    %1127 = vmatpush.xpose.msra.mxu0 0.0
    %1128 = vmatpush.xpose.msra.mxu0 0.0
    %1129 = vmatpush.xpose.msra.mxu0 0.0
    %1130 = vmatpush.xpose.msra.mxu0 0.0
    %1131 = vmatpush.xpose.msra.mxu0 0.0
    %1132 = vmatpush.xpose.msra.mxu0 0.0
    %1133 = vmatpush.xpose.msra.mxu0 %v303
    %1134 = vmatpush.xpose.msra.mxu0 %v239
    %1135 = vmatmul.f32.gmra.mxu0 %v111
    %v1136 = vpop.f32.mrf.mxu0
    %v1137 = vadd.f32 %v1114, %v1136
    %1138 = vmatmul.f32.gmra.mxu0 %v175
    %v1139 = vpop.f32.mrf.mxu0
    %v1140 = vadd.f32 %v1117, %v1139
    %1141 = vdwg.mxu0
    %1142 = vmatpush.xpose.msra.mxu0 0.0
    %1143 = vmatpush.xpose.msra.mxu0 0.0
    %1144 = vmatpush.xpose.msra.mxu0 0.0
    %1145 = vmatpush.xpose.msra.mxu0 0.0
    %1146 = vmatpush.xpose.msra.mxu0 0.0
    %1147 = vmatpush.xpose.msra.mxu0 0.0
    %1148 = vmatpush.xpose.msra.mxu0 0.0
    %1149 = vmatpush.xpose.msra.mxu0 0.0
    %1150 = vmatpush.xpose.msra.mxu0 0.0
    %1151 = vmatpush.xpose.msra.mxu0 0.0
    %1152 = vmatpush.xpose.msra.mxu0 0.0
    %1153 = vmatpush.xpose.msra.mxu0 0.0
    %1154 = vmatpush.xpose.msra.mxu0 0.0
    %1155 = vmatpush.xpose.msra.mxu0 0.0
    %1156 = vmatpush.xpose.msra.mxu0 %v304
    %1157 = vmatpush.xpose.msra.mxu0 %v240
    %1158 = vmatmul.f32.gmra.mxu0 %v112
    %v1159 = vpop.f32.mrf.mxu0
    %v1160 = vadd.f32 %v1137, %v1159
    %1161 = vmatmul.f32.gmra.mxu0 %v176
    %v1162 = vpop.f32.mrf.mxu0
    %v1163 = vadd.f32 %v1140, %v1162
    %1164 = vdwg.mxu0
    %1165 = vmatpush.xpose.msra.mxu0 0.0
    %1166 = vmatpush.xpose.msra.mxu0 0.0
    %1167 = vmatpush.xpose.msra.mxu0 0.0
    %1168 = vmatpush.xpose.msra.mxu0 0.0
    %1169 = vmatpush.xpose.msra.mxu0 0.0
    %1170 = vmatpush.xpose.msra.mxu0 0.0
    %1171 = vmatpush.xpose.msra.mxu0 0.0
    %1172 = vmatpush.xpose.msra.mxu0 0.0
    %1173 = vmatpush.xpose.msra.mxu0 0.0
    %1174 = vmatpush.xpose.msra.mxu0 0.0
    %1175 = vmatpush.xpose.msra.mxu0 0.0
    %1176 = vmatpush.xpose.msra.mxu0 0.0
    %1177 = vmatpush.xpose.msra.mxu0 0.0
    %1178 = vmatpush.xpose.msra.mxu0 0.0
    %1179 = vmatpush.xpose.msra.mxu0 %v305
    %1180 = vmatpush.xpose.msra.mxu0 %v241
    %1181 = vmatmul.f32.gmra.mxu0 %v113
    %v1182 = vpop.f32.mrf.mxu0
    %v1183 = vadd.f32 %v1160, %v1182
    %1184 = vmatmul.f32.gmra.mxu0 %v177
    %v1185 = vpop.f32.mrf.mxu0
    %v1186 = vadd.f32 %v1163, %v1185
    %1187 = vdwg.mxu0
    %1188 = vmatpush.xpose.msra.mxu0 0.0
    %1189 = vmatpush.xpose.msra.mxu0 0.0
    %1190 = vmatpush.xpose.msra.mxu0 0.0
    %1191 = vmatpush.xpose.msra.mxu0 0.0
    %1192 = vmatpush.xpose.msra.mxu0 0.0
    %1193 = vmatpush.xpose.msra.mxu0 0.0
    %1194 = vmatpush.xpose.msra.mxu0 0.0
    %1195 = vmatpush.xpose.msra.mxu0 0.0
    %1196 = vmatpush.xpose.msra.mxu0 0.0
    %1197 = vmatpush.xpose.msra.mxu0 0.0
    %1198 = vmatpush.xpose.msra.mxu0 0.0
    %1199 = vmatpush.xpose.msra.mxu0 0.0
    %1200 = vmatpush.xpose.msra.mxu0 0.0
    %1201 = vmatpush.xpose.msra.mxu0 0.0
    %1202 = vmatpush.xpose.msra.mxu0 %v306
    %1203 = vmatpush.xpose.msra.mxu0 %v242
    %1204 = vmatmul.f32.gmra.mxu0 %v114
    %v1205 = vpop.f32.mrf.mxu0
    %v1206 = vadd.f32 %v1183, %v1205
    %1207 = vmatmul.f32.gmra.mxu0 %v178
    %v1208 = vpop.f32.mrf.mxu0
    %v1209 = vadd.f32 %v1186, %v1208
    %1210 = vdwg.mxu0
    %1211 = vmatpush.xpose.msra.mxu0 0.0
    %1212 = vmatpush.xpose.msra.mxu0 0.0
    %1213 = vmatpush.xpose.msra.mxu0 0.0
    %1214 = vmatpush.xpose.msra.mxu0 0.0
    %1215 = vmatpush.xpose.msra.mxu0 0.0
    %1216 = vmatpush.xpose.msra.mxu0 0.0
    %1217 = vmatpush.xpose.msra.mxu0 0.0
    %1218 = vmatpush.xpose.msra.mxu0 0.0
    %1219 = vmatpush.xpose.msra.mxu0 0.0
    %1220 = vmatpush.xpose.msra.mxu0 0.0
    %1221 = vmatpush.xpose.msra.mxu0 0.0
    %1222 = vmatpush.xpose.msra.mxu0 0.0
    %1223 = vmatpush.xpose.msra.mxu0 0.0
    %1224 = vmatpush.xpose.msra.mxu0 0.0
    %1225 = vmatpush.xpose.msra.mxu0 %v307
    %1226 = vmatpush.xpose.msra.mxu0 %v243
    %1227 = vmatmul.f32.gmra.mxu0 %v115
    %v1228 = vpop.f32.mrf.mxu0
    %v1229 = vadd.f32 %v1206, %v1228
    %1230 = vmatmul.f32.gmra.mxu0 %v179
    %v1231 = vpop.f32.mrf.mxu0
    %v1232 = vadd.f32 %v1209, %v1231
    %1233 = vdwg.mxu0
    %1234 = vmatpush.xpose.msra.mxu0 0.0
    %1235 = vmatpush.xpose.msra.mxu0 0.0
    %1236 = vmatpush.xpose.msra.mxu0 0.0
    %1237 = vmatpush.xpose.msra.mxu0 0.0
    %1238 = vmatpush.xpose.msra.mxu0 0.0
    %1239 = vmatpush.xpose.msra.mxu0 0.0
    %1240 = vmatpush.xpose.msra.mxu0 0.0
    %1241 = vmatpush.xpose.msra.mxu0 0.0
    %1242 = vmatpush.xpose.msra.mxu0 0.0
    %1243 = vmatpush.xpose.msra.mxu0 0.0
    %1244 = vmatpush.xpose.msra.mxu0 0.0
    %1245 = vmatpush.xpose.msra.mxu0 0.0
    %1246 = vmatpush.xpose.msra.mxu0 0.0
    %1247 = vmatpush.xpose.msra.mxu0 0.0
    %1248 = vmatpush.xpose.msra.mxu0 %v308
    %1249 = vmatpush.xpose.msra.mxu0 %v244
    %1250 = vmatmul.f32.gmra.mxu0 %v116
    %v1251 = vpop.f32.mrf.mxu0
    %v1252 = vadd.f32 %v1229, %v1251
    %1253 = vmatmul.f32.gmra.mxu0 %v180
    %v1254 = vpop.f32.mrf.mxu0
    %v1255 = vadd.f32 %v1232, %v1254
    %1256 = vdwg.mxu0
    %1257 = vmatpush.xpose.msra.mxu0 0.0
    %1258 = vmatpush.xpose.msra.mxu0 0.0
    %1259 = vmatpush.xpose.msra.mxu0 0.0
    %1260 = vmatpush.xpose.msra.mxu0 0.0
    %1261 = vmatpush.xpose.msra.mxu0 0.0
    %1262 = vmatpush.xpose.msra.mxu0 0.0
    %1263 = vmatpush.xpose.msra.mxu0 0.0
    %1264 = vmatpush.xpose.msra.mxu0 0.0
    %1265 = vmatpush.xpose.msra.mxu0 0.0
    %1266 = vmatpush.xpose.msra.mxu0 0.0
    %1267 = vmatpush.xpose.msra.mxu0 0.0
    %1268 = vmatpush.xpose.msra.mxu0 0.0
    %1269 = vmatpush.xpose.msra.mxu0 0.0
    %1270 = vmatpush.xpose.msra.mxu0 0.0
    %1271 = vmatpush.xpose.msra.mxu0 %v309
    %1272 = vmatpush.xpose.msra.mxu0 %v245
    %1273 = vmatmul.f32.gmra.mxu0 %v117
    %v1274 = vpop.f32.mrf.mxu0
    %v1275 = vadd.f32 %v1252, %v1274
    %1276 = vmatmul.f32.gmra.mxu0 %v181
    %v1277 = vpop.f32.mrf.mxu0
    %v1278 = vadd.f32 %v1255, %v1277
    %1279 = vdwg.mxu0
    %1280 = vmatpush.xpose.msra.mxu0 0.0
    %1281 = vmatpush.xpose.msra.mxu0 0.0
    %1282 = vmatpush.xpose.msra.mxu0 0.0
    %1283 = vmatpush.xpose.msra.mxu0 0.0
    %1284 = vmatpush.xpose.msra.mxu0 0.0
    %1285 = vmatpush.xpose.msra.mxu0 0.0
    %1286 = vmatpush.xpose.msra.mxu0 0.0
    %1287 = vmatpush.xpose.msra.mxu0 0.0
    %1288 = vmatpush.xpose.msra.mxu0 0.0
    %1289 = vmatpush.xpose.msra.mxu0 0.0
    %1290 = vmatpush.xpose.msra.mxu0 0.0
    %1291 = vmatpush.xpose.msra.mxu0 0.0
    %1292 = vmatpush.xpose.msra.mxu0 0.0
    %1293 = vmatpush.xpose.msra.mxu0 0.0
    %1294 = vmatpush.xpose.msra.mxu0 %v310
    %1295 = vmatpush.xpose.msra.mxu0 %v246
    %1296 = vmatmul.f32.gmra.mxu0 %v118
    %v1297 = vpop.f32.mrf.mxu0
    %v1298 = vadd.f32 %v1275, %v1297
    %1299 = vmatmul.f32.gmra.mxu0 %v182
    %v1300 = vpop.f32.mrf.mxu0
    %v1301 = vadd.f32 %v1278, %v1300
    %1302 = vdwg.mxu0
    %1303 = vmatpush.xpose.msra.mxu0 0.0
    %1304 = vmatpush.xpose.msra.mxu0 0.0
    %1305 = vmatpush.xpose.msra.mxu0 0.0
    %1306 = vmatpush.xpose.msra.mxu0 0.0
    %1307 = vmatpush.xpose.msra.mxu0 0.0
    %1308 = vmatpush.xpose.msra.mxu0 0.0
    %1309 = vmatpush.xpose.msra.mxu0 0.0
    %1310 = vmatpush.xpose.msra.mxu0 0.0
    %1311 = vmatpush.xpose.msra.mxu0 0.0
    %1312 = vmatpush.xpose.msra.mxu0 0.0
    %1313 = vmatpush.xpose.msra.mxu0 0.0
    %1314 = vmatpush.xpose.msra.mxu0 0.0
    %1315 = vmatpush.xpose.msra.mxu0 0.0
    %1316 = vmatpush.xpose.msra.mxu0 0.0
    %1317 = vmatpush.xpose.msra.mxu0 %v311
    %1318 = vmatpush.xpose.msra.mxu0 %v247
    %1319 = vmatmul.f32.gmra.mxu0 %v119
    %v1320 = vpop.f32.mrf.mxu0
    %v1321 = vadd.f32 %v1298, %v1320
    %1322 = vmatmul.f32.gmra.mxu0 %v183
    %v1323 = vpop.f32.mrf.mxu0
    %v1324 = vadd.f32 %v1301, %v1323
    %1325 = vdwg.mxu0
    %1326 = vmatpush.xpose.msra.mxu0 0.0
    %1327 = vmatpush.xpose.msra.mxu0 0.0
    %1328 = vmatpush.xpose.msra.mxu0 0.0
    %1329 = vmatpush.xpose.msra.mxu0 0.0
    %1330 = vmatpush.xpose.msra.mxu0 0.0
    %1331 = vmatpush.xpose.msra.mxu0 0.0
    %1332 = vmatpush.xpose.msra.mxu0 0.0
    %1333 = vmatpush.xpose.msra.mxu0 0.0
    %1334 = vmatpush.xpose.msra.mxu0 0.0
    %1335 = vmatpush.xpose.msra.mxu0 0.0
    %1336 = vmatpush.xpose.msra.mxu0 0.0
    %1337 = vmatpush.xpose.msra.mxu0 0.0
    %1338 = vmatpush.xpose.msra.mxu0 0.0
    %1339 = vmatpush.xpose.msra.mxu0 0.0
    %1340 = vmatpush.xpose.msra.mxu0 %v312
    %1341 = vmatpush.xpose.msra.mxu0 %v248
    %1342 = vmatmul.f32.gmra.mxu0 %v120
    %v1343 = vpop.f32.mrf.mxu0
    %v1344 = vadd.f32 %v1321, %v1343
    %1345 = vmatmul.f32.gmra.mxu0 %v184
    %v1346 = vpop.f32.mrf.mxu0
    %v1347 = vadd.f32 %v1324, %v1346
    %1348 = vdwg.mxu0
    %1349 = vmatpush.xpose.msra.mxu0 0.0
    %1350 = vmatpush.xpose.msra.mxu0 0.0
    %1351 = vmatpush.xpose.msra.mxu0 0.0
    %1352 = vmatpush.xpose.msra.mxu0 0.0
    %1353 = vmatpush.xpose.msra.mxu0 0.0
    %1354 = vmatpush.xpose.msra.mxu0 0.0
    %1355 = vmatpush.xpose.msra.mxu0 0.0
    %1356 = vmatpush.xpose.msra.mxu0 0.0
    %1357 = vmatpush.xpose.msra.mxu0 0.0
    %1358 = vmatpush.xpose.msra.mxu0 0.0
    %1359 = vmatpush.xpose.msra.mxu0 0.0
    %1360 = vmatpush.xpose.msra.mxu0 0.0
    %1361 = vmatpush.xpose.msra.mxu0 0.0
    %1362 = vmatpush.xpose.msra.mxu0 0.0
    %1363 = vmatpush.xpose.msra.mxu0 %v313
    %1364 = vmatpush.xpose.msra.mxu0 %v249
    %1365 = vmatmul.f32.gmra.mxu0 %v121
    %v1366 = vpop.f32.mrf.mxu0
    %v1367 = vadd.f32 %v1344, %v1366
    %1368 = vmatmul.f32.gmra.mxu0 %v185
    %v1369 = vpop.f32.mrf.mxu0
    %v1370 = vadd.f32 %v1347, %v1369
    %1371 = vdwg.mxu0
    %1372 = vmatpush.xpose.msra.mxu0 0.0
    %1373 = vmatpush.xpose.msra.mxu0 0.0
    %1374 = vmatpush.xpose.msra.mxu0 0.0
    %1375 = vmatpush.xpose.msra.mxu0 0.0
    %1376 = vmatpush.xpose.msra.mxu0 0.0
    %1377 = vmatpush.xpose.msra.mxu0 0.0
    %1378 = vmatpush.xpose.msra.mxu0 0.0
    %1379 = vmatpush.xpose.msra.mxu0 0.0
    %1380 = vmatpush.xpose.msra.mxu0 0.0
    %1381 = vmatpush.xpose.msra.mxu0 0.0
    %1382 = vmatpush.xpose.msra.mxu0 0.0
    %1383 = vmatpush.xpose.msra.mxu0 0.0
    %1384 = vmatpush.xpose.msra.mxu0 0.0
    %1385 = vmatpush.xpose.msra.mxu0 0.0
    %1386 = vmatpush.xpose.msra.mxu0 %v314
    %1387 = vmatpush.xpose.msra.mxu0 %v250
    %1388 = vmatmul.f32.gmra.mxu0 %v122
    %v1389 = vpop.f32.mrf.mxu0
    %v1390 = vadd.f32 %v1367, %v1389
    %1391 = vmatmul.f32.gmra.mxu0 %v186
    %v1392 = vpop.f32.mrf.mxu0
    %v1393 = vadd.f32 %v1370, %v1392
    %1394 = vdwg.mxu0
    %1395 = vmatpush.xpose.msra.mxu0 0.0
    %1396 = vmatpush.xpose.msra.mxu0 0.0
    %1397 = vmatpush.xpose.msra.mxu0 0.0
    %1398 = vmatpush.xpose.msra.mxu0 0.0
    %1399 = vmatpush.xpose.msra.mxu0 0.0
    %1400 = vmatpush.xpose.msra.mxu0 0.0
    %1401 = vmatpush.xpose.msra.mxu0 0.0
    %1402 = vmatpush.xpose.msra.mxu0 0.0
    %1403 = vmatpush.xpose.msra.mxu0 0.0
    %1404 = vmatpush.xpose.msra.mxu0 0.0
    %1405 = vmatpush.xpose.msra.mxu0 0.0
    %1406 = vmatpush.xpose.msra.mxu0 0.0
    %1407 = vmatpush.xpose.msra.mxu0 0.0
    %1408 = vmatpush.xpose.msra.mxu0 0.0
    %1409 = vmatpush.xpose.msra.mxu0 %v315
    %1410 = vmatpush.xpose.msra.mxu0 %v251
    %1411 = vmatmul.f32.gmra.mxu0 %v123
    %v1412 = vpop.f32.mrf.mxu0
    %v1413 = vadd.f32 %v1390, %v1412
    %1414 = vmatmul.f32.gmra.mxu0 %v187
    %v1415 = vpop.f32.mrf.mxu0
    %v1416 = vadd.f32 %v1393, %v1415
    %1417 = vdwg.mxu0
    %1418 = vmatpush.xpose.msra.mxu0 0.0
    %1419 = vmatpush.xpose.msra.mxu0 0.0
    %1420 = vmatpush.xpose.msra.mxu0 0.0
    %1421 = vmatpush.xpose.msra.mxu0 0.0
    %1422 = vmatpush.xpose.msra.mxu0 0.0
    %1423 = vmatpush.xpose.msra.mxu0 0.0
    %1424 = vmatpush.xpose.msra.mxu0 0.0
    %1425 = vmatpush.xpose.msra.mxu0 0.0
    %1426 = vmatpush.xpose.msra.mxu0 0.0
    %1427 = vmatpush.xpose.msra.mxu0 0.0
    %1428 = vmatpush.xpose.msra.mxu0 0.0
    %1429 = vmatpush.xpose.msra.mxu0 0.0
    %1430 = vmatpush.xpose.msra.mxu0 0.0
    %1431 = vmatpush.xpose.msra.mxu0 0.0
    %1432 = vmatpush.xpose.msra.mxu0 %v316
    %1433 = vmatpush.xpose.msra.mxu0 %v252
    %1434 = vmatmul.f32.gmra.mxu0 %v124
    %v1435 = vpop.f32.mrf.mxu0
    %v1436 = vadd.f32 %v1413, %v1435
    %1437 = vmatmul.f32.gmra.mxu0 %v188
    %v1438 = vpop.f32.mrf.mxu0
    %v1439 = vadd.f32 %v1416, %v1438
    %1440 = vdwg.mxu0
    %1441 = vmatpush.xpose.msra.mxu0 0.0
    %1442 = vmatpush.xpose.msra.mxu0 0.0
    %1443 = vmatpush.xpose.msra.mxu0 0.0
    %1444 = vmatpush.xpose.msra.mxu0 0.0
    %1445 = vmatpush.xpose.msra.mxu0 0.0
    %1446 = vmatpush.xpose.msra.mxu0 0.0
    %1447 = vmatpush.xpose.msra.mxu0 0.0
    %1448 = vmatpush.xpose.msra.mxu0 0.0
    %1449 = vmatpush.xpose.msra.mxu0 0.0
    %1450 = vmatpush.xpose.msra.mxu0 0.0
    %1451 = vmatpush.xpose.msra.mxu0 0.0
    %1452 = vmatpush.xpose.msra.mxu0 0.0
    %1453 = vmatpush.xpose.msra.mxu0 0.0
    %1454 = vmatpush.xpose.msra.mxu0 0.0
    %1455 = vmatpush.xpose.msra.mxu0 %v317
    %1456 = vmatpush.xpose.msra.mxu0 %v253
    %1457 = vmatmul.f32.gmra.mxu0 %v125
    %v1458 = vpop.f32.mrf.mxu0
    %v1459 = vadd.f32 %v1436, %v1458
    %1460 = vmatmul.f32.gmra.mxu0 %v189
    %v1461 = vpop.f32.mrf.mxu0
    %v1462 = vadd.f32 %v1439, %v1461
    %1463 = vdwg.mxu0
    %1464 = vmatpush.xpose.msra.mxu0 0.0
    %1465 = vmatpush.xpose.msra.mxu0 0.0
    %1466 = vmatpush.xpose.msra.mxu0 0.0
    %1467 = vmatpush.xpose.msra.mxu0 0.0
    %1468 = vmatpush.xpose.msra.mxu0 0.0
    %1469 = vmatpush.xpose.msra.mxu0 0.0
    %1470 = vmatpush.xpose.msra.mxu0 0.0
    %1471 = vmatpush.xpose.msra.mxu0 0.0
    %1472 = vmatpush.xpose.msra.mxu0 0.0
    %1473 = vmatpush.xpose.msra.mxu0 0.0
    %1474 = vmatpush.xpose.msra.mxu0 0.0
    %1475 = vmatpush.xpose.msra.mxu0 0.0
    %1476 = vmatpush.xpose.msra.mxu0 0.0
    %1477 = vmatpush.xpose.msra.mxu0 0.0
    %1478 = vmatpush.xpose.msra.mxu0 %v318
    %1479 = vmatpush.xpose.msra.mxu0 %v254
    %1480 = vmatmul.f32.gmra.mxu0 %v126
    %v1481 = vpop.f32.mrf.mxu0
    %v1482 = vadd.f32 %v1459, %v1481
    %1483 = vmatmul.f32.gmra.mxu0 %v190
    %v1484 = vpop.f32.mrf.mxu0
    %v1485 = vadd.f32 %v1462, %v1484
    %1486 = vdwg.mxu0
    %1487 = vmatpush.xpose.msra.mxu0 0.0
    %1488 = vmatpush.xpose.msra.mxu0 0.0
    %1489 = vmatpush.xpose.msra.mxu0 0.0
    %1490 = vmatpush.xpose.msra.mxu0 0.0
    %1491 = vmatpush.xpose.msra.mxu0 0.0
    %1492 = vmatpush.xpose.msra.mxu0 0.0
    %1493 = vmatpush.xpose.msra.mxu0 0.0
    %1494 = vmatpush.xpose.msra.mxu0 0.0
    %1495 = vmatpush.xpose.msra.mxu0 0.0
    %1496 = vmatpush.xpose.msra.mxu0 0.0
    %1497 = vmatpush.xpose.msra.mxu0 0.0
    %1498 = vmatpush.xpose.msra.mxu0 0.0
    %1499 = vmatpush.xpose.msra.mxu0 0.0
    %1500 = vmatpush.xpose.msra.mxu0 0.0
    %1501 = vmatpush.xpose.msra.mxu0 %v319
    %1502 = vmatpush.xpose.msra.mxu0 %v255
    %1503 = vmatmul.f32.gmra.mxu0 %v127
    %v1504 = vpop.f32.mrf.mxu0
    %v1505 = vadd.f32 %v1482, %v1504
    %1506 = vmatmul.f32.gmra.mxu0 %v191
    %v1507 = vpop.f32.mrf.mxu0
    %v1508 = vadd.f32 %v1485, %v1507
    %1509 = vdwg.mxu0
    %1510 = vmatpush.xpose.msra.mxu0 0.0
    %1511 = vmatpush.xpose.msra.mxu0 0.0
    %1512 = vmatpush.xpose.msra.mxu0 0.0
    %1513 = vmatpush.xpose.msra.mxu0 0.0
    %1514 = vmatpush.xpose.msra.mxu0 0.0
    %1515 = vmatpush.xpose.msra.mxu0 0.0
    %1516 = vmatpush.xpose.msra.mxu0 0.0
    %1517 = vmatpush.xpose.msra.mxu0 0.0
    %1518 = vmatpush.xpose.msra.mxu0 0.0
    %1519 = vmatpush.xpose.msra.mxu0 0.0
    %1520 = vmatpush.xpose.msra.mxu0 0.0
    %1521 = vmatpush.xpose.msra.mxu0 0.0
    %1522 = vmatpush.xpose.msra.mxu0 0.0
    %1523 = vmatpush.xpose.msra.mxu0 0.0
    %1524 = vmatpush.xpose.msra.mxu0 %v320
    %1525 = vmatpush.xpose.msra.mxu0 %v256
    %1526 = vmatmul.f32.gmra.mxu0 %v128
    %v1527 = vpop.f32.mrf.mxu0
    %v1528 = vadd.f32 %v1505, %v1527
    %1529 = vmatmul.f32.gmra.mxu0 %v192
    %v1530 = vpop.f32.mrf.mxu0
    %v1531 = vadd.f32 %v1508, %v1530
    %1532 = vdwg.mxu0
    %1533 = vmatpush.xpose.msra.mxu0 0.0
    %1534 = vmatpush.xpose.msra.mxu0 0.0
    %1535 = vmatpush.xpose.msra.mxu0 0.0
    %1536 = vmatpush.xpose.msra.mxu0 0.0
    %1537 = vmatpush.xpose.msra.mxu0 0.0
    %1538 = vmatpush.xpose.msra.mxu0 0.0
    %1539 = vmatpush.xpose.msra.mxu0 0.0
    %1540 = vmatpush.xpose.msra.mxu0 0.0
    %1541 = vmatpush.xpose.msra.mxu0 0.0
    %1542 = vmatpush.xpose.msra.mxu0 0.0
    %1543 = vmatpush.xpose.msra.mxu0 0.0
    %1544 = vmatpush.xpose.msra.mxu0 0.0
    %1545 = vmatpush.xpose.msra.mxu0 0.0
    %1546 = vmatpush.xpose.msra.mxu0 0.0
    %1547 = vmatpush.xpose.msra.mxu0 %v321
    %1548 = vmatpush.xpose.msra.mxu0 %v257
    %1549 = vmatmul.f32.gmra.mxu0 %v129
    %v1550 = vpop.f32.mrf.mxu0
    %v1551 = vadd.f32 %v1528, %v1550
    %1552 = vmatmul.f32.gmra.mxu0 %v193
    %v1553 = vpop.f32.mrf.mxu0
    %v1554 = vadd.f32 %v1531, %v1553
    %1555 = vdwg.mxu0
    %1556 = vmatpush.xpose.msra.mxu0 0.0
    %1557 = vmatpush.xpose.msra.mxu0 0.0
    %1558 = vmatpush.xpose.msra.mxu0 0.0
    %1559 = vmatpush.xpose.msra.mxu0 0.0
    %1560 = vmatpush.xpose.msra.mxu0 0.0
    %1561 = vmatpush.xpose.msra.mxu0 0.0
    %1562 = vmatpush.xpose.msra.mxu0 0.0
    %1563 = vmatpush.xpose.msra.mxu0 0.0
    %1564 = vmatpush.xpose.msra.mxu0 0.0
    %1565 = vmatpush.xpose.msra.mxu0 0.0
    %1566 = vmatpush.xpose.msra.mxu0 0.0
    %1567 = vmatpush.xpose.msra.mxu0 0.0
    %1568 = vmatpush.xpose.msra.mxu0 0.0
    %1569 = vmatpush.xpose.msra.mxu0 0.0
    %1570 = vmatpush.xpose.msra.mxu0 %v322
    %1571 = vmatpush.xpose.msra.mxu0 %v258
    %1572 = vmatmul.f32.gmra.mxu0 %v130
    %v1573 = vpop.f32.mrf.mxu0
    %v1574 = vadd.f32 %v1551, %v1573
    %1575 = vmatmul.f32.gmra.mxu0 %v194
    %v1576 = vpop.f32.mrf.mxu0
    %v1577 = vadd.f32 %v1554, %v1576
    %1578 = vdwg.mxu0
    %1579 = vmatpush.xpose.msra.mxu0 0.0
    %1580 = vmatpush.xpose.msra.mxu0 0.0
    %1581 = vmatpush.xpose.msra.mxu0 0.0
    %1582 = vmatpush.xpose.msra.mxu0 0.0
    %1583 = vmatpush.xpose.msra.mxu0 0.0
    %1584 = vmatpush.xpose.msra.mxu0 0.0
    %1585 = vmatpush.xpose.msra.mxu0 0.0
    %1586 = vmatpush.xpose.msra.mxu0 0.0
    %1587 = vmatpush.xpose.msra.mxu0 0.0
    %1588 = vmatpush.xpose.msra.mxu0 0.0
    %1589 = vmatpush.xpose.msra.mxu0 0.0
    %1590 = vmatpush.xpose.msra.mxu0 0.0
    %1591 = vmatpush.xpose.msra.mxu0 0.0
    %1592 = vmatpush.xpose.msra.mxu0 0.0
    %1593 = vmatpush.xpose.msra.mxu0 %v323
    %1594 = vmatpush.xpose.msra.mxu0 %v259
    %1595 = vmatmul.f32.gmra.mxu0 %v131
    %v1596 = vpop.f32.mrf.mxu0
    %v1597 = vadd.f32 %v1574, %v1596
    %1598 = vmatmul.f32.gmra.mxu0 %v195
    %v1599 = vpop.f32.mrf.mxu0
    %v1600 = vadd.f32 %v1577, %v1599
    %1601 = vdwg.mxu0
    %1602 = vmatpush.xpose.msra.mxu0 0.0
    %1603 = vmatpush.xpose.msra.mxu0 0.0
    %1604 = vmatpush.xpose.msra.mxu0 0.0
    %1605 = vmatpush.xpose.msra.mxu0 0.0
    %1606 = vmatpush.xpose.msra.mxu0 0.0
    %1607 = vmatpush.xpose.msra.mxu0 0.0
    %1608 = vmatpush.xpose.msra.mxu0 0.0
    %1609 = vmatpush.xpose.msra.mxu0 0.0
    %1610 = vmatpush.xpose.msra.mxu0 0.0
    %1611 = vmatpush.xpose.msra.mxu0 0.0
    %1612 = vmatpush.xpose.msra.mxu0 0.0
    %1613 = vmatpush.xpose.msra.mxu0 0.0
    %1614 = vmatpush.xpose.msra.mxu0 0.0
    %1615 = vmatpush.xpose.msra.mxu0 0.0
    %1616 = vmatpush.xpose.msra.mxu0 %v324
    %1617 = vmatpush.xpose.msra.mxu0 %v260
    %1618 = vmatmul.f32.gmra.mxu0 %v132
    %v1619 = vpop.f32.mrf.mxu0
    %v1620 = vadd.f32 %v1597, %v1619
    %1621 = vmatmul.f32.gmra.mxu0 %v196
    %v1622 = vpop.f32.mrf.mxu0
    %v1623 = vadd.f32 %v1600, %v1622
    %1624 = vdwg.mxu0
    %1625 = vmatpush.xpose.msra.mxu0 0.0
    %1626 = vmatpush.xpose.msra.mxu0 0.0
    %1627 = vmatpush.xpose.msra.mxu0 0.0
    %1628 = vmatpush.xpose.msra.mxu0 0.0
    %1629 = vmatpush.xpose.msra.mxu0 0.0
    %1630 = vmatpush.xpose.msra.mxu0 0.0
    %1631 = vmatpush.xpose.msra.mxu0 0.0
    %1632 = vmatpush.xpose.msra.mxu0 0.0
    %1633 = vmatpush.xpose.msra.mxu0 0.0
    %1634 = vmatpush.xpose.msra.mxu0 0.0
    %1635 = vmatpush.xpose.msra.mxu0 0.0
    %1636 = vmatpush.xpose.msra.mxu0 0.0
    %1637 = vmatpush.xpose.msra.mxu0 0.0
    %1638 = vmatpush.xpose.msra.mxu0 0.0
    %1639 = vmatpush.xpose.msra.mxu0 %v325
    %1640 = vmatpush.xpose.msra.mxu0 %v261
    %1641 = vmatmul.f32.gmra.mxu0 %v133
    %v1642 = vpop.f32.mrf.mxu0
    %v1643 = vadd.f32 %v1620, %v1642
    %1644 = vmatmul.f32.gmra.mxu0 %v197
    %v1645 = vpop.f32.mrf.mxu0
    %v1646 = vadd.f32 %v1623, %v1645
    %1647 = vdwg.mxu0
    %1648 = vmatpush.xpose.msra.mxu0 0.0
    %1649 = vmatpush.xpose.msra.mxu0 0.0
    %1650 = vmatpush.xpose.msra.mxu0 0.0
    %1651 = vmatpush.xpose.msra.mxu0 0.0
    %1652 = vmatpush.xpose.msra.mxu0 0.0
    %1653 = vmatpush.xpose.msra.mxu0 0.0
    %1654 = vmatpush.xpose.msra.mxu0 0.0
    %1655 = vmatpush.xpose.msra.mxu0 0.0
    %1656 = vmatpush.xpose.msra.mxu0 0.0
    %1657 = vmatpush.xpose.msra.mxu0 0.0
    %1658 = vmatpush.xpose.msra.mxu0 0.0
    %1659 = vmatpush.xpose.msra.mxu0 0.0
    %1660 = vmatpush.xpose.msra.mxu0 0.0
    %1661 = vmatpush.xpose.msra.mxu0 0.0
    %1662 = vmatpush.xpose.msra.mxu0 %v326
    %1663 = vmatpush.xpose.msra.mxu0 %v262
    %1664 = vmatmul.f32.gmra.mxu0 %v134
    %v1665 = vpop.f32.mrf.mxu0
    %v1666 = vadd.f32 %v1643, %v1665
    %1667 = vmatmul.f32.gmra.mxu0 %v198
    %v1668 = vpop.f32.mrf.mxu0
    %v1669 = vadd.f32 %v1646, %v1668
    %1670 = vdwg.mxu0
    %1671 = vmatpush.xpose.msra.mxu0 0.0
    %1672 = vmatpush.xpose.msra.mxu0 0.0
    %1673 = vmatpush.xpose.msra.mxu0 0.0
    %1674 = vmatpush.xpose.msra.mxu0 0.0
    %1675 = vmatpush.xpose.msra.mxu0 0.0
    %1676 = vmatpush.xpose.msra.mxu0 0.0
    %1677 = vmatpush.xpose.msra.mxu0 0.0
    %1678 = vmatpush.xpose.msra.mxu0 0.0
    %1679 = vmatpush.xpose.msra.mxu0 0.0
    %1680 = vmatpush.xpose.msra.mxu0 0.0
    %1681 = vmatpush.xpose.msra.mxu0 0.0
    %1682 = vmatpush.xpose.msra.mxu0 0.0
    %1683 = vmatpush.xpose.msra.mxu0 0.0
    %1684 = vmatpush.xpose.msra.mxu0 0.0
    %1685 = vmatpush.xpose.msra.mxu0 %v327
    %1686 = vmatpush.xpose.msra.mxu0 %v263
    %1687 = vmatmul.f32.gmra.mxu0 %v135
    %v1688 = vpop.f32.mrf.mxu0
    %v1689 = vadd.f32 %v1666, %v1688
    %1690 = vmatmul.f32.gmra.mxu0 %v199
    %v1691 = vpop.f32.mrf.mxu0
    %v1692 = vadd.f32 %v1669, %v1691
    %1693 = vdwg.mxu0
    %1694 = vmatpush.xpose.msra.mxu0 0.0
    %1695 = vmatpush.xpose.msra.mxu0 0.0
    %1696 = vmatpush.xpose.msra.mxu0 0.0
    %1697 = vmatpush.xpose.msra.mxu0 0.0
    %1698 = vmatpush.xpose.msra.mxu0 0.0
    %1699 = vmatpush.xpose.msra.mxu0 0.0
    %1700 = vmatpush.xpose.msra.mxu0 0.0
    %1701 = vmatpush.xpose.msra.mxu0 0.0
    %1702 = vmatpush.xpose.msra.mxu0 0.0
    %1703 = vmatpush.xpose.msra.mxu0 0.0
    %1704 = vmatpush.xpose.msra.mxu0 0.0
    %1705 = vmatpush.xpose.msra.mxu0 0.0
    %1706 = vmatpush.xpose.msra.mxu0 0.0
    %1707 = vmatpush.xpose.msra.mxu0 0.0
    %1708 = vmatpush.xpose.msra.mxu0 %v328
    %1709 = vmatpush.xpose.msra.mxu0 %v264
    %1710 = vmatmul.f32.gmra.mxu0 %v136
    %v1711 = vpop.f32.mrf.mxu0
    %v1712 = vadd.f32 %v1689, %v1711
    %1713 = vmatmul.f32.gmra.mxu0 %v200
    %v1714 = vpop.f32.mrf.mxu0
    %v1715 = vadd.f32 %v1692, %v1714
    %1716 = vdwg.mxu0
    %1717 = vmatpush.xpose.msra.mxu0 0.0
    %1718 = vmatpush.xpose.msra.mxu0 0.0
    %1719 = vmatpush.xpose.msra.mxu0 0.0
    %1720 = vmatpush.xpose.msra.mxu0 0.0
    %1721 = vmatpush.xpose.msra.mxu0 0.0
    %1722 = vmatpush.xpose.msra.mxu0 0.0
    %1723 = vmatpush.xpose.msra.mxu0 0.0
    %1724 = vmatpush.xpose.msra.mxu0 0.0
    %1725 = vmatpush.xpose.msra.mxu0 0.0
    %1726 = vmatpush.xpose.msra.mxu0 0.0
    %1727 = vmatpush.xpose.msra.mxu0 0.0
    %1728 = vmatpush.xpose.msra.mxu0 0.0
    %1729 = vmatpush.xpose.msra.mxu0 0.0
    %1730 = vmatpush.xpose.msra.mxu0 0.0
    %1731 = vmatpush.xpose.msra.mxu0 %v329
    %1732 = vmatpush.xpose.msra.mxu0 %v265
    %1733 = vmatmul.f32.gmra.mxu0 %v137
    %v1734 = vpop.f32.mrf.mxu0
    %v1735 = vadd.f32 %v1712, %v1734
    %1736 = vmatmul.f32.gmra.mxu0 %v201
    %v1737 = vpop.f32.mrf.mxu0
    %v1738 = vadd.f32 %v1715, %v1737
    %1739 = vdwg.mxu0
    %1740 = vmatpush.xpose.msra.mxu0 0.0
    %1741 = vmatpush.xpose.msra.mxu0 0.0
    %1742 = vmatpush.xpose.msra.mxu0 0.0
    %1743 = vmatpush.xpose.msra.mxu0 0.0
    %1744 = vmatpush.xpose.msra.mxu0 0.0
    %1745 = vmatpush.xpose.msra.mxu0 0.0
    %1746 = vmatpush.xpose.msra.mxu0 0.0
    %1747 = vmatpush.xpose.msra.mxu0 0.0
    %1748 = vmatpush.xpose.msra.mxu0 0.0
    %1749 = vmatpush.xpose.msra.mxu0 0.0
    %1750 = vmatpush.xpose.msra.mxu0 0.0
    %1751 = vmatpush.xpose.msra.mxu0 0.0
    %1752 = vmatpush.xpose.msra.mxu0 0.0
    %1753 = vmatpush.xpose.msra.mxu0 0.0
    %1754 = vmatpush.xpose.msra.mxu0 %v330
    %1755 = vmatpush.xpose.msra.mxu0 %v266
    %1756 = vmatmul.f32.gmra.mxu0 %v138
    %v1757 = vpop.f32.mrf.mxu0
    %v1758 = vadd.f32 %v1735, %v1757
    %1759 = vmatmul.f32.gmra.mxu0 %v202
    %v1760 = vpop.f32.mrf.mxu0
    %v1761 = vadd.f32 %v1738, %v1760
    %1762 = vdwg.mxu0
    %1763 = vmatpush.xpose.msra.mxu0 0.0
    %1764 = vmatpush.xpose.msra.mxu0 0.0
    %1765 = vmatpush.xpose.msra.mxu0 0.0
    %1766 = vmatpush.xpose.msra.mxu0 0.0
    %1767 = vmatpush.xpose.msra.mxu0 0.0
    %1768 = vmatpush.xpose.msra.mxu0 0.0
    %1769 = vmatpush.xpose.msra.mxu0 0.0
    %1770 = vmatpush.xpose.msra.mxu0 0.0
    %1771 = vmatpush.xpose.msra.mxu0 0.0
    %1772 = vmatpush.xpose.msra.mxu0 0.0
    %1773 = vmatpush.xpose.msra.mxu0 0.0
    %1774 = vmatpush.xpose.msra.mxu0 0.0
    %1775 = vmatpush.xpose.msra.mxu0 0.0
    %1776 = vmatpush.xpose.msra.mxu0 0.0
    %1777 = vmatpush.xpose.msra.mxu0 %v331
    %1778 = vmatpush.xpose.msra.mxu0 %v267
    %1779 = vmatmul.f32.gmra.mxu0 %v139
    %v1780 = vpop.f32.mrf.mxu0
    %v1781 = vadd.f32 %v1758, %v1780
    %1782 = vmatmul.f32.gmra.mxu0 %v203
    %v1783 = vpop.f32.mrf.mxu0
    %v1784 = vadd.f32 %v1761, %v1783
    %1785 = vdwg.mxu0
    %1786 = vmatpush.xpose.msra.mxu0 0.0
    %1787 = vmatpush.xpose.msra.mxu0 0.0
    %1788 = vmatpush.xpose.msra.mxu0 0.0
    %1789 = vmatpush.xpose.msra.mxu0 0.0
    %1790 = vmatpush.xpose.msra.mxu0 0.0
    %1791 = vmatpush.xpose.msra.mxu0 0.0
    %1792 = vmatpush.xpose.msra.mxu0 0.0
    %1793 = vmatpush.xpose.msra.mxu0 0.0
    %1794 = vmatpush.xpose.msra.mxu0 0.0
    %1795 = vmatpush.xpose.msra.mxu0 0.0
    %1796 = vmatpush.xpose.msra.mxu0 0.0
    %1797 = vmatpush.xpose.msra.mxu0 0.0
    %1798 = vmatpush.xpose.msra.mxu0 0.0
    %1799 = vmatpush.xpose.msra.mxu0 0.0
    %1800 = vmatpush.xpose.msra.mxu0 %v332
    %1801 = vmatpush.xpose.msra.mxu0 %v268
    %1802 = vmatmul.f32.gmra.mxu0 %v140
    %v1803 = vpop.f32.mrf.mxu0
    %v1804 = vadd.f32 %v1781, %v1803
    %1805 = vmatmul.f32.gmra.mxu0 %v204
    %v1806 = vpop.f32.mrf.mxu0
    %v1807 = vadd.f32 %v1784, %v1806
    %1808 = vdwg.mxu0
    %v1809 = vld [vmem:[%s6] sm:$0x3]
    %v1811 = vperm.slane %v1809, 0
    %v1812 = vperm.slane %v1809, 1
    %v1815 = vld [vmem:[%s7] sm:$0x3]
    %v1817 = vperm.slane %v1815, 0
    %v1818 = vperm.slane %v1815, 1
    %v1821 = vxor.u32 %v1804, 2147483648
    %v1822 = vxor.u32 %v1807, 2147483648
    %v1823 = vmul.f32 %v1821, 1.442695
    %v1824 = vpow.pop %v1823
    %v1825 = vmul.f32 %v1822, 1.442695
    %v1826 = vpow.pop %v1825
    %v1827 = vadd.f32 %v1824, 1.0
    %v1828 = vadd.f32 %v1826, 1.0
    %v1829 = vrcp.pop %v1827
    %v1830 = vmul.f32 %v1827, %v1829
    %v1831 = vsub.f32 1.0, %v1830
    %v1832 = vmul.f32 %v1829, %v1831
    %v1833 = vadd.f32 %v1829, %v1832
    %vm1834 = vweird.f32 %v1827
    %vm1835 = vweird.f32 %v1829
    %vm1836 = vmor %vm1834, %vm1835
    %v1837 = vsel %vm1836, %v1829, %v1833
    %v1838 = vand.u32 2147483647, %v1827
    %vm1839 = vcmp.eq.f32.partialorder %v1838, 8.507059e+37
    %v1840 = vand.u32 %v1827, 2147483648
    %v1841 = vor.u32 1.1754944e-38, %v1840
    %v1842 = vsel %vm1839, %v1841, %v1837
    %v1843 = vmul.f32 1.0, %v1842
    %v1844 = vrcp.pop %v1828
    %v1845 = vmul.f32 %v1828, %v1844
    %v1846 = vsub.f32 1.0, %v1845
    %v1847 = vmul.f32 %v1844, %v1846
    %v1848 = vadd.f32 %v1844, %v1847
    %vm1849 = vweird.f32 %v1828
    %vm1850 = vweird.f32 %v1844
    %vm1851 = vmor %vm1849, %vm1850
    %v1852 = vsel %vm1851, %v1844, %v1848
    %v1853 = vand.u32 2147483647, %v1828
    %vm1854 = vcmp.eq.f32.partialorder %v1853, 8.507059e+37
    %v1855 = vand.u32 %v1828, 2147483648
    %v1856 = vor.u32 1.1754944e-38, %v1855
    %v1857 = vsel %vm1854, %v1856, %v1852
    %v1858 = vmul.f32 1.0, %v1857
    %v1859 = vtanh.pop %v1804
    %v1860 = vtanh.pop %v1807
    %v1861 = vadd.f32 %v1843, 1e-05
    %v1862 = vadd.f32 %v1858, 1e-05
    %v1863 = vmul.f32 %v1859, 0.5
    %v1864 = vmul.f32 %v1860, 0.5
    %v1865 = vmul.f32 %v1863, %v1863
    %v1866 = vmul.f32 %v1864, %v1864
    %v1867 = vsub.f32 1.0, %v1865
    %v1868 = vsub.f32 1.0, %v1866
    %v1869 = vmul.f32 %v1867, 0.1
    %v1870 = vmul.f32 %v1868, 0.1
    %v1871 = vrcp.pop %v1869
    %v1872 = vmul.f32 %v1869, %v1871
    %v1873 = vsub.f32 1.0, %v1872
    %v1874 = vmul.f32 %v1871, %v1873
    %v1875 = vadd.f32 %v1871, %v1874
    %vm1876 = vweird.f32 %v1869
    %vm1877 = vweird.f32 %v1871
    %vm1878 = vmor %vm1876, %vm1877
    %v1879 = vsel %vm1878, %v1871, %v1875
    %v1880 = vand.u32 2147483647, %v1869
    %vm1881 = vcmp.eq.f32.partialorder %v1880, 8.507059e+37
    %v1882 = vand.u32 %v1869, 2147483648
    %v1883 = vor.u32 1.1754944e-38, %v1882
    %v1884 = vsel %vm1881, %v1883, %v1879
    %v1885 = vmul.f32 1.0, %v1884
    %v1886 = vrcp.pop %v1870
    %v1887 = vmul.f32 %v1870, %v1886
    %v1888 = vsub.f32 1.0, %v1887
    %v1889 = vmul.f32 %v1886, %v1888
    %v1890 = vadd.f32 %v1886, %v1889
    %vm1891 = vweird.f32 %v1870
    %vm1892 = vweird.f32 %v1886
    %vm1893 = vmor %vm1891, %vm1892
    %v1894 = vsel %vm1893, %v1886, %v1890
    %v1895 = vand.u32 2147483647, %v1870
    %vm1896 = vcmp.eq.f32.partialorder %v1895, 8.507059e+37
    %v1897 = vand.u32 %v1870, 2147483648
    %v1898 = vor.u32 1.1754944e-38, %v1897
    %v1899 = vsel %vm1896, %v1898, %v1894
    %v1900 = vmul.f32 1.0, %v1899
    %1902 = vset.pattern.permute.xlu0 0
    %1903 = vperm.xlu0 %1902, %v1843
    %v1904 = vpop.permute.xlu0 %1903
    %1907 = vset.pattern.permute.xlu0 0
    %1908 = vperm.xlu0 %1907, %v1858
    %v1909 = vpop.permute.xlu0 %1908
    %v1911 = vsub.f32 %v1811, %v1904
    %v1912 = vsub.f32 %v1812, %v1904
    %v1913 = vsub.f32 %v1811, %v1909
    %v1914 = vsub.f32 %v1812, %v1909
    %1916 = vset.pattern.permute.xlu0 2
    %1917 = vperm.xlu0 %1916, %v1861
    %v1918 = vpop.permute.xlu0 %1917
    %1921 = vset.pattern.permute.xlu0 2
    %1922 = vperm.xlu0 %1921, %v1862
    %v1923 = vpop.permute.xlu0 %1922
    %v1925 = vrcp.pop %v1918
    %v1926 = vmul.f32 %v1918, %v1925
    %v1927 = vsub.f32 1.0, %v1926
    %v1928 = vmul.f32 %v1925, %v1927
    %v1929 = vadd.f32 %v1925, %v1928
    %vm1930 = vweird.f32 %v1918
    %vm1931 = vweird.f32 %v1925
    %vm1932 = vmor %vm1930, %vm1931
    %v1933 = vsel %vm1932, %v1925, %v1929
    %v1934 = vand.u32 2147483647, %v1918
    %vm1935 = vcmp.eq.f32.partialorder %v1934, 8.507059e+37
    %v1936 = vand.u32 %v1918, 2147483648
    %v1937 = vor.u32 1.1754944e-38, %v1936
    %v1938 = vsel %vm1935, %v1937, %v1933
    %v1939 = vmul.f32 %v1911, %v1938
    %v1940 = vmul.f32 %v1912, %v1938
    %v1941 = vrcp.pop %v1923
    %v1942 = vmul.f32 %v1923, %v1941
    %v1943 = vsub.f32 1.0, %v1942
    %v1944 = vmul.f32 %v1941, %v1943
    %v1945 = vadd.f32 %v1941, %v1944
    %vm1946 = vweird.f32 %v1923
    %vm1947 = vweird.f32 %v1941
    %vm1948 = vmor %vm1946, %vm1947
    %v1949 = vsel %vm1948, %v1941, %v1945
    %v1950 = vand.u32 2147483647, %v1923
    %vm1951 = vcmp.eq.f32.partialorder %v1950, 8.507059e+37
    %v1952 = vand.u32 %v1923, 2147483648
    %v1953 = vor.u32 1.1754944e-38, %v1952
    %v1954 = vsel %vm1951, %v1953, %v1949
    %v1955 = vmul.f32 %v1913, %v1954
    %v1956 = vmul.f32 %v1914, %v1954
    %1957 = vset.pattern.permute.xlu0 2
    %1958 = vperm.xlu0 %1957, %v1843
    %v1959 = vpop.permute.xlu0 %1958
    %1961 = vset.pattern.permute.xlu0 2
    %1962 = vperm.xlu0 %1961, %v1858
    %v1963 = vpop.permute.xlu0 %1962
    %v1965 = vsub.f32 %v1817, %v1959
    %v1966 = vsub.f32 %v1818, %v1959
    %v1967 = vsub.f32 %v1817, %v1963
    %v1968 = vsub.f32 %v1818, %v1963
    %1969 = vset.pattern.permute.xlu0 3
    %1970 = vperm.xlu0 %1969, %v1861
    %v1971 = vpop.permute.xlu0 %1970
    %1973 = vset.pattern.permute.xlu0 3
    %1974 = vperm.xlu0 %1973, %v1862
    %v1975 = vpop.permute.xlu0 %1974
    %v1977 = vrcp.pop %v1971
    %v1978 = vmul.f32 %v1971, %v1977
    %v1979 = vsub.f32 1.0, %v1978
    %v1980 = vmul.f32 %v1977, %v1979
    %v1981 = vadd.f32 %v1977, %v1980
    %vm1982 = vweird.f32 %v1971
    %vm1983 = vweird.f32 %v1977
    %vm1984 = vmor %vm1982, %vm1983
    %v1985 = vsel %vm1984, %v1977, %v1981
    %v1986 = vand.u32 2147483647, %v1971
    %vm1987 = vcmp.eq.f32.partialorder %v1986, 8.507059e+37
    %v1988 = vand.u32 %v1971, 2147483648
    %v1989 = vor.u32 1.1754944e-38, %v1988
    %v1990 = vsel %vm1987, %v1989, %v1985
    %v1991 = vmul.f32 %v1965, %v1990
    %v1992 = vmul.f32 %v1966, %v1990
    %v1993 = vrcp.pop %v1975
    %v1994 = vmul.f32 %v1975, %v1993
    %v1995 = vsub.f32 1.0, %v1994
    %v1996 = vmul.f32 %v1993, %v1995
    %v1997 = vadd.f32 %v1993, %v1996
    %vm1998 = vweird.f32 %v1975
    %vm1999 = vweird.f32 %v1993
    %vm2000 = vmor %vm1998, %vm1999
    %v2001 = vsel %vm2000, %v1993, %v1997
    %v2002 = vand.u32 2147483647, %v1975
    %vm2003 = vcmp.eq.f32.partialorder %v2002, 8.507059e+37
    %v2004 = vand.u32 %v1975, 2147483648
    %v2005 = vor.u32 1.1754944e-38, %v2004
    %v2006 = vsel %vm2003, %v2005, %v2001
    %v2007 = vmul.f32 %v1967, %v2006
    %v2008 = vmul.f32 %v1968, %v2006
    %v2009 = vsub.f32 0.0, %v1885
    %v2010 = vsub.f32 0.0, %v1900
    %v2011 = vmul.f32 %v1939, %v1939
    %v2012 = vmul.f32 %v1940, %v1940
    %v2013 = vmul.f32 %v1955, %v1955
    %v2014 = vmul.f32 %v1956, %v1956
    %v2015 = vmul.f32 %v1863, 2.0
    %v2016 = vmul.f32 %v1864, 2.0
    %2018 = vset.pattern.permute.xlu0 4
    %2019 = vperm.xlu0 %2018, %v2015
    %v2020 = vpop.permute.xlu0 %2019
    %2023 = vset.pattern.permute.xlu0 4
    %2024 = vperm.xlu0 %2023, %v2016
    %v2025 = vpop.permute.xlu0 %2024
    %v2027 = vmul.f32 %v2020, %v1939
    %v2028 = vmul.f32 %v2020, %v1940
    %v2029 = vmul.f32 %v2025, %v1955
    %v2030 = vmul.f32 %v2025, %v1956
    %v2031 = vmul.f32 %v2027, %v1991
    %v2032 = vmul.f32 %v2028, %v1992
    %v2033 = vmul.f32 %v2029, %v2007
    %v2034 = vmul.f32 %v2030, %v2008
    %v2035 = vsub.f32 %v2011, %v2031
    %v2036 = vsub.f32 %v2012, %v2032
    %v2037 = vsub.f32 %v2013, %v2033
    %v2038 = vsub.f32 %v2014, %v2034
    %v2039 = vmul.f32 %v1991, %v1991
    %v2040 = vmul.f32 %v1992, %v1992
    %v2041 = vmul.f32 %v2007, %v2007
    %v2042 = vmul.f32 %v2008, %v2008
    %v2043 = vadd.f32 %v2035, %v2039
    %v2044 = vadd.f32 %v2036, %v2040
    %v2045 = vadd.f32 %v2037, %v2041
    %v2046 = vadd.f32 %v2038, %v2042
    %2048 = vset.pattern.permute.xlu0 4
    %2049 = vperm.xlu0 %2048, %v2009
    %v2050 = vpop.permute.xlu0 %2049
    %2053 = vset.pattern.permute.xlu0 4
    %2054 = vperm.xlu0 %2053, %v2010
    %v2055 = vpop.permute.xlu0 %2054
    %v2057 = vmul.f32 %v2050, %v2043
    %v2058 = vmul.f32 %v2050, %v2044
    %v2059 = vmul.f32 %v2055, %v2045
    %v2060 = vmul.f32 %v2055, %v2046
    %v2061 = vmul.f32 %v2057, 1.442695
    %v2062 = vpow.pop %v2061
    %v2063 = vmul.f32 %v2058, 1.442695
    %v2064 = vpow.pop %v2063
    %v2065 = vmul.f32 %v2059, 1.442695
    %v2066 = vpow.pop %v2065
    %v2067 = vmul.f32 %v2060, 1.442695
    %v2068 = vpow.pop %v2067
    %v2069 = vadd.f32 %v2062, 0.0
    %v2070 = vadd.f32 %v2064, 0.0
    %v2071 = vadd.f32 %v2066, 0.0
    %v2072 = vadd.f32 %v2068, 0.0
    %2073 = vset.pattern.permute.xlu0 5
    %2074 = vperm.xlu0 %2073, %v1843
    %v2075 = vpop.permute.xlu0 %2074
    %2077 = vset.pattern.permute.xlu0 5
    %2078 = vperm.xlu0 %2077, %v1858
    %v2079 = vpop.permute.xlu0 %2078
    %v2081 = vsub.f32 %v1811, %v2075
    %v2082 = vsub.f32 %v1812, %v2075
    %v2083 = vsub.f32 %v1811, %v2079
    %v2084 = vsub.f32 %v1812, %v2079
    %2085 = vset.pattern.permute.xlu0 7
    %2086 = vperm.xlu0 %2085, %v1861
    %v2087 = vpop.permute.xlu0 %2086
    %2089 = vset.pattern.permute.xlu0 7
    %2090 = vperm.xlu0 %2089, %v1862
    %v2091 = vpop.permute.xlu0 %2090
    %v2093 = vrcp.pop %v2087
    %v2094 = vmul.f32 %v2087, %v2093
    %v2095 = vsub.f32 1.0, %v2094
    %v2096 = vmul.f32 %v2093, %v2095
    %v2097 = vadd.f32 %v2093, %v2096
    %vm2098 = vweird.f32 %v2087
    %vm2099 = vweird.f32 %v2093
    %vm2100 = vmor %vm2098, %vm2099
    %v2101 = vsel %vm2100, %v2093, %v2097
    %v2102 = vand.u32 2147483647, %v2087
    %vm2103 = vcmp.eq.f32.partialorder %v2102, 8.507059e+37
    %v2104 = vand.u32 %v2087, 2147483648
    %v2105 = vor.u32 1.1754944e-38, %v2104
    %v2106 = vsel %vm2103, %v2105, %v2101
    %v2107 = vmul.f32 %v2081, %v2106
    %v2108 = vmul.f32 %v2082, %v2106
    %v2109 = vrcp.pop %v2091
    %v2110 = vmul.f32 %v2091, %v2109
    %v2111 = vsub.f32 1.0, %v2110
    %v2112 = vmul.f32 %v2109, %v2111
    %v2113 = vadd.f32 %v2109, %v2112
    %vm2114 = vweird.f32 %v2091
    %vm2115 = vweird.f32 %v2109
    %vm2116 = vmor %vm2114, %vm2115
    %v2117 = vsel %vm2116, %v2109, %v2113
    %v2118 = vand.u32 2147483647, %v2091
    %vm2119 = vcmp.eq.f32.partialorder %v2118, 8.507059e+37
    %v2120 = vand.u32 %v2091, 2147483648
    %v2121 = vor.u32 1.1754944e-38, %v2120
    %v2122 = vsel %vm2119, %v2121, %v2117
    %v2123 = vmul.f32 %v2083, %v2122
    %v2124 = vmul.f32 %v2084, %v2122
    %2125 = vset.pattern.permute.xlu0 7
    %2126 = vperm.xlu0 %2125, %v1843
    %v2127 = vpop.permute.xlu0 %2126
    %2129 = vset.pattern.permute.xlu0 7
    %2130 = vperm.xlu0 %2129, %v1858
    %v2131 = vpop.permute.xlu0 %2130
    %v2133 = vsub.f32 %v1817, %v2127
    %v2134 = vsub.f32 %v1818, %v2127
    %v2135 = vsub.f32 %v1817, %v2131
    %v2136 = vsub.f32 %v1818, %v2131
    %2137 = vset.pattern.permute.xlu0 8
    %2138 = vperm.xlu0 %2137, %v1861
    %v2139 = vpop.permute.xlu0 %2138
    %2141 = vset.pattern.permute.xlu0 8
    %2142 = vperm.xlu0 %2141, %v1862
    %v2143 = vpop.permute.xlu0 %2142
    %v2145 = vrcp.pop %v2139
    %v2146 = vmul.f32 %v2139, %v2145
    %v2147 = vsub.f32 1.0, %v2146
    %v2148 = vmul.f32 %v2145, %v2147
    %v2149 = vadd.f32 %v2145, %v2148
    %vm2150 = vweird.f32 %v2139
    %vm2151 = vweird.f32 %v2145
    %vm2152 = vmor %vm2150, %vm2151
    %v2153 = vsel %vm2152, %v2145, %v2149
    %v2154 = vand.u32 2147483647, %v2139
    %vm2155 = vcmp.eq.f32.partialorder %v2154, 8.507059e+37
    %v2156 = vand.u32 %v2139, 2147483648
    %v2157 = vor.u32 1.1754944e-38, %v2156
    %v2158 = vsel %vm2155, %v2157, %v2153
    %v2159 = vmul.f32 %v2133, %v2158
    %v2160 = vmul.f32 %v2134, %v2158
    %v2161 = vrcp.pop %v2143
    %v2162 = vmul.f32 %v2143, %v2161
    %v2163 = vsub.f32 1.0, %v2162
    %v2164 = vmul.f32 %v2161, %v2163
    %v2165 = vadd.f32 %v2161, %v2164
    %vm2166 = vweird.f32 %v2143
    %vm2167 = vweird.f32 %v2161
    %vm2168 = vmor %vm2166, %vm2167
    %v2169 = vsel %vm2168, %v2161, %v2165
    %v2170 = vand.u32 2147483647, %v2143
    %vm2171 = vcmp.eq.f32.partialorder %v2170, 8.507059e+37
    %v2172 = vand.u32 %v2143, 2147483648
    %v2173 = vor.u32 1.1754944e-38, %v2172
    %v2174 = vsel %vm2171, %v2173, %v2169
    %v2175 = vmul.f32 %v2135, %v2174
    %v2176 = vmul.f32 %v2136, %v2174
    %v2177 = vmul.f32 %v2107, %v2107
    %v2178 = vmul.f32 %v2108, %v2108
    %v2179 = vmul.f32 %v2123, %v2123
    %v2180 = vmul.f32 %v2124, %v2124
    %2181 = vset.pattern.permute.xlu0 9
    %2182 = vperm.xlu0 %2181, %v2015
    %v2183 = vpop.permute.xlu0 %2182
    %2185 = vset.pattern.permute.xlu0 9
    %2186 = vperm.xlu0 %2185, %v2016
    %v2187 = vpop.permute.xlu0 %2186
    %v2189 = vmul.f32 %v2183, %v2107
    %v2190 = vmul.f32 %v2183, %v2108
    %v2191 = vmul.f32 %v2187, %v2123
    %v2192 = vmul.f32 %v2187, %v2124
    %v2193 = vmul.f32 %v2189, %v2159
    %v2194 = vmul.f32 %v2190, %v2160
    %v2195 = vmul.f32 %v2191, %v2175
    %v2196 = vmul.f32 %v2192, %v2176
    %v2197 = vsub.f32 %v2177, %v2193
    %v2198 = vsub.f32 %v2178, %v2194
    %v2199 = vsub.f32 %v2179, %v2195
    %v2200 = vsub.f32 %v2180, %v2196
    %v2201 = vmul.f32 %v2159, %v2159
    %v2202 = vmul.f32 %v2160, %v2160
    %v2203 = vmul.f32 %v2175, %v2175
    %v2204 = vmul.f32 %v2176, %v2176
    %v2205 = vadd.f32 %v2197, %v2201
    %v2206 = vadd.f32 %v2198, %v2202
    %v2207 = vadd.f32 %v2199, %v2203
    %v2208 = vadd.f32 %v2200, %v2204
    %2209 = vset.pattern.permute.xlu0 9
    %2210 = vperm.xlu0 %2209, %v2009
    %v2211 = vpop.permute.xlu0 %2210
    %2213 = vset.pattern.permute.xlu0 9
    %2214 = vperm.xlu0 %2213, %v2010
    %v2215 = vpop.permute.xlu0 %2214
    %v2217 = vmul.f32 %v2211, %v2205
    %v2218 = vmul.f32 %v2211, %v2206
    %v2219 = vmul.f32 %v2215, %v2207
    %v2220 = vmul.f32 %v2215, %v2208
    %v2221 = vmul.f32 %v2217, 1.442695
    %v2222 = vpow.pop %v2221
    %v2223 = vmul.f32 %v2218, 1.442695
    %v2224 = vpow.pop %v2223
    %v2225 = vmul.f32 %v2219, 1.442695
    %v2226 = vpow.pop %v2225
    %v2227 = vmul.f32 %v2220, 1.442695
    %v2228 = vpow.pop %v2227
    %v2229 = vadd.f32 %v2069, %v2222
    %v2230 = vadd.f32 %v2070, %v2224
    %v2231 = vadd.f32 %v2071, %v2226
    %v2232 = vadd.f32 %v2072, %v2228
    %v2233 = vmul.f32 %v77, %v2229
    %v2234 = vmul.f32 %v78, %v2230
    %v2235 = vmul.f32 %v79, %v2229
    %v2236 = vmul.f32 %v80, %v2230
    %v2237 = vmul.f32 %v81, %v2229
    %v2238 = vmul.f32 %v82, %v2230
    %v2239 = vmul.f32 %v83, %v2229
    %v2240 = vmul.f32 %v84, %v2230
    %v2241 = vmul.f32 %v85, %v2229
    %v2242 = vmul.f32 %v86, %v2230
    %v2243 = vmul.f32 %v87, %v2229
    %v2244 = vmul.f32 %v88, %v2230
    %v2245 = vmul.f32 %v89, %v2229
    %v2246 = vmul.f32 %v90, %v2230
    %v2247 = vmul.f32 %v91, %v2229
    %v2248 = vmul.f32 %v92, %v2230
    %v2249 = vmul.f32 %v93, %v2229
    %v2250 = vmul.f32 %v94, %v2230
    %v2251 = vmul.f32 %v95, %v2229
    %v2252 = vmul.f32 %v96, %v2230
    %v2253 = vmul.f32 %v97, %v2229
    %v2254 = vmul.f32 %v98, %v2230
    %v2255 = vmul.f32 %v99, %v2229
    %v2256 = vmul.f32 %v100, %v2230
    %v2257 = vmul.f32 %v101, %v2229
    %v2258 = vmul.f32 %v102, %v2230
    %v2259 = vmul.f32 %v103, %v2229
    %v2260 = vmul.f32 %v104, %v2230
    %v2261 = vmul.f32 %v105, %v2229
    %v2262 = vmul.f32 %v106, %v2230
    %v2263 = vmul.f32 %v107, %v2229
    %v2264 = vmul.f32 %v108, %v2230
    %v2265 = vmul.f32 %v109, %v2229
    %v2266 = vmul.f32 %v110, %v2230
    %v2267 = vmul.f32 %v111, %v2229
    %v2268 = vmul.f32 %v112, %v2230
    %v2269 = vmul.f32 %v113, %v2229
    %v2270 = vmul.f32 %v114, %v2230
    %v2271 = vmul.f32 %v115, %v2229
    %v2272 = vmul.f32 %v116, %v2230
    %v2273 = vmul.f32 %v117, %v2229
    %v2274 = vmul.f32 %v118, %v2230
    %v2275 = vmul.f32 %v119, %v2229
    %v2276 = vmul.f32 %v120, %v2230
    %v2277 = vmul.f32 %v121, %v2229
    %v2278 = vmul.f32 %v122, %v2230
    %v2279 = vmul.f32 %v123, %v2229
    %v2280 = vmul.f32 %v124, %v2230
    %v2281 = vmul.f32 %v125, %v2229
    %v2282 = vmul.f32 %v126, %v2230
    %v2283 = vmul.f32 %v127, %v2229
    %v2284 = vmul.f32 %v128, %v2230
    %v2285 = vmul.f32 %v129, %v2229
    %v2286 = vmul.f32 %v130, %v2230
    %v2287 = vmul.f32 %v131, %v2229
    %v2288 = vmul.f32 %v132, %v2230
    %v2289 = vmul.f32 %v133, %v2229
    %v2290 = vmul.f32 %v134, %v2230
    %v2291 = vmul.f32 %v135, %v2229
    %v2292 = vmul.f32 %v136, %v2230
    %v2293 = vmul.f32 %v137, %v2229
    %v2294 = vmul.f32 %v138, %v2230
    %v2295 = vmul.f32 %v139, %v2229
    %v2296 = vmul.f32 %v140, %v2230
    %v2297 = vmul.f32 %v141, %v2231
    %v2298 = vmul.f32 %v142, %v2232
    %v2299 = vmul.f32 %v143, %v2231
    %v2300 = vmul.f32 %v144, %v2232
    %v2301 = vmul.f32 %v145, %v2231
    %v2302 = vmul.f32 %v146, %v2232
    %v2303 = vmul.f32 %v147, %v2231
    %v2304 = vmul.f32 %v148, %v2232
    %v2305 = vmul.f32 %v149, %v2231
    %v2306 = vmul.f32 %v150, %v2232
    %v2307 = vmul.f32 %v151, %v2231
    %v2308 = vmul.f32 %v152, %v2232
    %v2309 = vmul.f32 %v153, %v2231
    %v2310 = vmul.f32 %v154, %v2232
    %v2311 = vmul.f32 %v155, %v2231
    %v2312 = vmul.f32 %v156, %v2232
    %v2313 = vmul.f32 %v157, %v2231
    %v2314 = vmul.f32 %v158, %v2232
    %v2315 = vmul.f32 %v159, %v2231
    %v2316 = vmul.f32 %v160, %v2232
    %v2317 = vmul.f32 %v161, %v2231
    %v2318 = vmul.f32 %v162, %v2232
    %v2319 = vmul.f32 %v163, %v2231
    %v2320 = vmul.f32 %v164, %v2232
    %v2321 = vmul.f32 %v165, %v2231
    %v2322 = vmul.f32 %v166, %v2232
    %v2323 = vmul.f32 %v167, %v2231
    %v2324 = vmul.f32 %v168, %v2232
    %v2325 = vmul.f32 %v169, %v2231
    %v2326 = vmul.f32 %v170, %v2232
    %v2327 = vmul.f32 %v171, %v2231
    %v2328 = vmul.f32 %v172, %v2232
    %v2329 = vmul.f32 %v173, %v2231
    %v2330 = vmul.f32 %v174, %v2232
    %v2331 = vmul.f32 %v175, %v2231
    %v2332 = vmul.f32 %v176, %v2232
    %v2333 = vmul.f32 %v177, %v2231
    %v2334 = vmul.f32 %v178, %v2232
    %v2335 = vmul.f32 %v179, %v2231
    %v2336 = vmul.f32 %v180, %v2232
    %v2337 = vmul.f32 %v181, %v2231
    %v2338 = vmul.f32 %v182, %v2232
    %v2339 = vmul.f32 %v183, %v2231
    %v2340 = vmul.f32 %v184, %v2232
    %v2341 = vmul.f32 %v185, %v2231
    %v2342 = vmul.f32 %v186, %v2232
    %v2343 = vmul.f32 %v187, %v2231
    %v2344 = vmul.f32 %v188, %v2232
    %v2345 = vmul.f32 %v189, %v2231
    %v2346 = vmul.f32 %v190, %v2232
    %v2347 = vmul.f32 %v191, %v2231
    %v2348 = vmul.f32 %v192, %v2232
    %v2349 = vmul.f32 %v193, %v2231
    %v2350 = vmul.f32 %v194, %v2232
    %v2351 = vmul.f32 %v195, %v2231
    %v2352 = vmul.f32 %v196, %v2232
    %v2353 = vmul.f32 %v197, %v2231
    %v2354 = vmul.f32 %v198, %v2232
    %v2355 = vmul.f32 %v199, %v2231
    %v2356 = vmul.f32 %v200, %v2232
    %v2357 = vmul.f32 %v201, %v2231
    %v2358 = vmul.f32 %v202, %v2232
    %v2359 = vmul.f32 %v203, %v2231
    %v2360 = vmul.f32 %v204, %v2232
    %v2361 = vld [vmem:[#allocation5] sm:$0xff]
    %v2362 = vld [vmem:[#allocation5 + $0x8] sm:$0xff]
    %v2363 = vld [vmem:[#allocation5 + $0x10] sm:$0xff]
    %v2364 = vld [vmem:[#allocation5 + $0x18] sm:$0xff]
    %v2365 = vld [vmem:[#allocation5 + $0x20] sm:$0xff]
    %v2366 = vld [vmem:[#allocation5 + $0x28] sm:$0xff]
    %v2367 = vld [vmem:[#allocation5 + $0x30] sm:$0xff]
    %v2368 = vld [vmem:[#allocation5 + $0x38] sm:$0xff]
    %v2369 = vld [vmem:[#allocation5 + $0x40] sm:$0xff]
    %v2370 = vld [vmem:[#allocation5 + $0x48] sm:$0xff]
    %v2371 = vld [vmem:[#allocation5 + $0x50] sm:$0xff]
    %v2372 = vld [vmem:[#allocation5 + $0x58] sm:$0xff]
    %v2373 = vld [vmem:[#allocation5 + $0x60] sm:$0xff]
    %v2374 = vld [vmem:[#allocation5 + $0x68] sm:$0xff]
    %v2375 = vld [vmem:[#allocation5 + $0x70] sm:$0xff]
    %v2376 = vld [vmem:[#allocation5 + $0x78] sm:$0xff]
    %v2377 = vld [vmem:[#allocation5 + $0x80] sm:$0xff]
    %v2378 = vld [vmem:[#allocation5 + $0x88] sm:$0xff]
    %v2379 = vld [vmem:[#allocation5 + $0x90] sm:$0xff]
    %v2380 = vld [vmem:[#allocation5 + $0x98] sm:$0xff]
    %v2381 = vld [vmem:[#allocation5 + $0xa0] sm:$0xff]
    %v2382 = vld [vmem:[#allocation5 + $0xa8] sm:$0xff]
    %v2383 = vld [vmem:[#allocation5 + $0xb0] sm:$0xff]
    %v2384 = vld [vmem:[#allocation5 + $0xb8] sm:$0xff]
    %v2385 = vld [vmem:[#allocation5 + $0xc0] sm:$0xff]
    %v2386 = vld [vmem:[#allocation5 + $0xc8] sm:$0xff]
    %v2387 = vld [vmem:[#allocation5 + $0xd0] sm:$0xff]
    %v2388 = vld [vmem:[#allocation5 + $0xd8] sm:$0xff]
    %v2389 = vld [vmem:[#allocation5 + $0xe0] sm:$0xff]
    %v2390 = vld [vmem:[#allocation5 + $0xe8] sm:$0xff]
    %v2391 = vld [vmem:[#allocation5 + $0xf0] sm:$0xff]
    %v2392 = vld [vmem:[#allocation5 + $0xf8] sm:$0xff]
    %v2393 = vld [vmem:[#allocation5 + $0x100] sm:$0xff]
    %v2394 = vld [vmem:[#allocation5 + $0x108] sm:$0xff]
    %v2395 = vld [vmem:[#allocation5 + $0x110] sm:$0xff]
    %v2396 = vld [vmem:[#allocation5 + $0x118] sm:$0xff]
    %v2397 = vld [vmem:[#allocation5 + $0x120] sm:$0xff]
    %v2398 = vld [vmem:[#allocation5 + $0x128] sm:$0xff]
    %v2399 = vld [vmem:[#allocation5 + $0x130] sm:$0xff]
    %v2400 = vld [vmem:[#allocation5 + $0x138] sm:$0xff]
    %v2401 = vld [vmem:[#allocation5 + $0x140] sm:$0xff]
    %v2402 = vld [vmem:[#allocation5 + $0x148] sm:$0xff]
    %v2403 = vld [vmem:[#allocation5 + $0x150] sm:$0xff]
    %v2404 = vld [vmem:[#allocation5 + $0x158] sm:$0xff]
    %v2405 = vld [vmem:[#allocation5 + $0x160] sm:$0xff]
    %v2406 = vld [vmem:[#allocation5 + $0x168] sm:$0xff]
    %v2407 = vld [vmem:[#allocation5 + $0x170] sm:$0xff]
    %v2408 = vld [vmem:[#allocation5 + $0x178] sm:$0xff]
    %v2409 = vld [vmem:[#allocation5 + $0x180] sm:$0xff]
    %v2410 = vld [vmem:[#allocation5 + $0x188] sm:$0xff]
    %v2411 = vld [vmem:[#allocation5 + $0x190] sm:$0xff]
    %v2412 = vld [vmem:[#allocation5 + $0x198] sm:$0xff]
    %v2413 = vld [vmem:[#allocation5 + $0x1a0] sm:$0xff]
    %v2414 = vld [vmem:[#allocation5 + $0x1a8] sm:$0xff]
    %v2415 = vld [vmem:[#allocation5 + $0x1b0] sm:$0xff]
    %v2416 = vld [vmem:[#allocation5 + $0x1b8] sm:$0xff]
    %v2417 = vld [vmem:[#allocation5 + $0x1c0] sm:$0xff]
    %v2418 = vld [vmem:[#allocation5 + $0x1c8] sm:$0xff]
    %v2419 = vld [vmem:[#allocation5 + $0x1d0] sm:$0xff]
    %v2420 = vld [vmem:[#allocation5 + $0x1d8] sm:$0xff]
    %v2421 = vld [vmem:[#allocation5 + $0x1e0] sm:$0xff]
    %v2422 = vld [vmem:[#allocation5 + $0x1e8] sm:$0xff]
    %v2423 = vld [vmem:[#allocation5 + $0x1f0] sm:$0xff]
    %v2424 = vld [vmem:[#allocation5 + $0x1f8] sm:$0xff]
    %v2425 = vld [vmem:[#allocation5 + $0x200] sm:$0xff]
    %v2426 = vld [vmem:[#allocation5 + $0x208] sm:$0xff]
    %v2427 = vld [vmem:[#allocation5 + $0x210] sm:$0xff]
    %v2428 = vld [vmem:[#allocation5 + $0x218] sm:$0xff]
    %v2429 = vld [vmem:[#allocation5 + $0x220] sm:$0xff]
    %v2430 = vld [vmem:[#allocation5 + $0x228] sm:$0xff]
    %v2431 = vld [vmem:[#allocation5 + $0x230] sm:$0xff]
    %v2432 = vld [vmem:[#allocation5 + $0x238] sm:$0xff]
    %v2433 = vld [vmem:[#allocation5 + $0x240] sm:$0xff]
    %v2434 = vld [vmem:[#allocation5 + $0x248] sm:$0xff]
    %v2435 = vld [vmem:[#allocation5 + $0x250] sm:$0xff]
    %v2436 = vld [vmem:[#allocation5 + $0x258] sm:$0xff]
    %v2437 = vld [vmem:[#allocation5 + $0x260] sm:$0xff]
    %v2438 = vld [vmem:[#allocation5 + $0x268] sm:$0xff]
    %v2439 = vld [vmem:[#allocation5 + $0x270] sm:$0xff]
    %v2440 = vld [vmem:[#allocation5 + $0x278] sm:$0xff]
    %v2441 = vld [vmem:[#allocation5 + $0x280] sm:$0xff]
    %v2442 = vld [vmem:[#allocation5 + $0x288] sm:$0xff]
    %v2443 = vld [vmem:[#allocation5 + $0x290] sm:$0xff]
    %v2444 = vld [vmem:[#allocation5 + $0x298] sm:$0xff]
    %v2445 = vld [vmem:[#allocation5 + $0x2a0] sm:$0xff]
    %v2446 = vld [vmem:[#allocation5 + $0x2a8] sm:$0xff]
    %v2447 = vld [vmem:[#allocation5 + $0x2b0] sm:$0xff]
    %v2448 = vld [vmem:[#allocation5 + $0x2b8] sm:$0xff]
    %v2449 = vld [vmem:[#allocation5 + $0x2c0] sm:$0xff]
    %v2450 = vld [vmem:[#allocation5 + $0x2c8] sm:$0xff]
    %v2451 = vld [vmem:[#allocation5 + $0x2d0] sm:$0xff]
    %v2452 = vld [vmem:[#allocation5 + $0x2d8] sm:$0xff]
    %v2453 = vld [vmem:[#allocation5 + $0x2e0] sm:$0xff]
    %v2454 = vld [vmem:[#allocation5 + $0x2e8] sm:$0xff]
    %v2455 = vld [vmem:[#allocation5 + $0x2f0] sm:$0xff]
    %v2456 = vld [vmem:[#allocation5 + $0x2f8] sm:$0xff]
    %v2457 = vld [vmem:[#allocation5 + $0x300] sm:$0xff]
    %v2458 = vld [vmem:[#allocation5 + $0x308] sm:$0xff]
    %v2459 = vld [vmem:[#allocation5 + $0x310] sm:$0xff]
    %v2460 = vld [vmem:[#allocation5 + $0x318] sm:$0xff]
    %v2461 = vld [vmem:[#allocation5 + $0x320] sm:$0xff]
    %v2462 = vld [vmem:[#allocation5 + $0x328] sm:$0xff]
    %v2463 = vld [vmem:[#allocation5 + $0x330] sm:$0xff]
    %v2464 = vld [vmem:[#allocation5 + $0x338] sm:$0xff]
    %v2465 = vld [vmem:[#allocation5 + $0x340] sm:$0xff]
    %v2466 = vld [vmem:[#allocation5 + $0x348] sm:$0xff]
    %v2467 = vld [vmem:[#allocation5 + $0x350] sm:$0xff]
    %v2468 = vld [vmem:[#allocation5 + $0x358] sm:$0xff]
    %v2469 = vld [vmem:[#allocation5 + $0x360] sm:$0xff]
    %v2470 = vld [vmem:[#allocation5 + $0x368] sm:$0xff]
    %v2471 = vld [vmem:[#allocation5 + $0x370] sm:$0xff]
    %v2472 = vld [vmem:[#allocation5 + $0x378] sm:$0xff]
    %v2473 = vld [vmem:[#allocation5 + $0x380] sm:$0xff]
    %v2474 = vld [vmem:[#allocation5 + $0x388] sm:$0xff]
    %v2475 = vld [vmem:[#allocation5 + $0x390] sm:$0xff]
    %v2476 = vld [vmem:[#allocation5 + $0x398] sm:$0xff]
    %v2477 = vld [vmem:[#allocation5 + $0x3a0] sm:$0xff]
    %v2478 = vld [vmem:[#allocation5 + $0x3a8] sm:$0xff]
    %v2479 = vld [vmem:[#allocation5 + $0x3b0] sm:$0xff]
    %v2480 = vld [vmem:[#allocation5 + $0x3b8] sm:$0xff]
    %v2481 = vld [vmem:[#allocation5 + $0x3c0] sm:$0xff]
    %v2482 = vld [vmem:[#allocation5 + $0x3c8] sm:$0xff]
    %v2483 = vld [vmem:[#allocation5 + $0x3d0] sm:$0xff]
    %v2484 = vld [vmem:[#allocation5 + $0x3d8] sm:$0xff]
    %v2485 = vld [vmem:[#allocation5 + $0x3e0] sm:$0xff]
    %v2486 = vld [vmem:[#allocation5 + $0x3e8] sm:$0xff]
    %v2487 = vld [vmem:[#allocation5 + $0x3f0] sm:$0xff]
    %v2488 = vld [vmem:[#allocation5 + $0x3f8] sm:$0xff]
    %v2489 = vld [vmem:[#allocation5 + $0x400] sm:$0xff]
    %v2490 = vld [vmem:[#allocation5 + $0x408] sm:$0xff]
    %v2491 = vld [vmem:[#allocation5 + $0x410] sm:$0xff]
    %v2492 = vld [vmem:[#allocation5 + $0x418] sm:$0xff]
    %v2493 = vld [vmem:[#allocation5 + $0x420] sm:$0xff]
    %v2494 = vld [vmem:[#allocation5 + $0x428] sm:$0xff]
    %v2495 = vld [vmem:[#allocation5 + $0x430] sm:$0xff]
    %v2496 = vld [vmem:[#allocation5 + $0x438] sm:$0xff]
    %v2497 = vld [vmem:[#allocation5 + $0x440] sm:$0xff]
    %v2498 = vld [vmem:[#allocation5 + $0x448] sm:$0xff]
    %v2499 = vld [vmem:[#allocation5 + $0x450] sm:$0xff]
    %v2500 = vld [vmem:[#allocation5 + $0x458] sm:$0xff]
    %v2501 = vld [vmem:[#allocation5 + $0x460] sm:$0xff]
    %v2502 = vld [vmem:[#allocation5 + $0x468] sm:$0xff]
    %v2503 = vld [vmem:[#allocation5 + $0x470] sm:$0xff]
    %v2504 = vld [vmem:[#allocation5 + $0x478] sm:$0xff]
    %v2505 = vld [vmem:[#allocation5 + $0x480] sm:$0xff]
    %v2506 = vld [vmem:[#allocation5 + $0x488] sm:$0xff]
    %v2507 = vld [vmem:[#allocation5 + $0x490] sm:$0xff]
    %v2508 = vld [vmem:[#allocation5 + $0x498] sm:$0xff]
    %v2509 = vld [vmem:[#allocation5 + $0x4a0] sm:$0xff]
    %v2510 = vld [vmem:[#allocation5 + $0x4a8] sm:$0xff]
    %v2511 = vld [vmem:[#allocation5 + $0x4b0] sm:$0xff]
    %v2512 = vld [vmem:[#allocation5 + $0x4b8] sm:$0xff]
    %v2513 = vld [vmem:[#allocation5 + $0x4c0] sm:$0xff]
    %v2514 = vld [vmem:[#allocation5 + $0x4c8] sm:$0xff]
    %v2515 = vld [vmem:[#allocation5 + $0x4d0] sm:$0xff]
    %v2516 = vld [vmem:[#allocation5 + $0x4d8] sm:$0xff]
    %v2517 = vld [vmem:[#allocation5 + $0x4e0] sm:$0xff]
    %v2518 = vld [vmem:[#allocation5 + $0x4e8] sm:$0xff]
    %v2519 = vld [vmem:[#allocation5 + $0x4f0] sm:$0xff]
    %v2520 = vld [vmem:[#allocation5 + $0x4f8] sm:$0xff]
    %v2521 = vld [vmem:[#allocation5 + $0x500] sm:$0xff]
    %v2522 = vld [vmem:[#allocation5 + $0x508] sm:$0xff]
    %v2523 = vld [vmem:[#allocation5 + $0x510] sm:$0xff]
    %v2524 = vld [vmem:[#allocation5 + $0x518] sm:$0xff]
    %v2525 = vld [vmem:[#allocation5 + $0x520] sm:$0xff]
    %v2526 = vld [vmem:[#allocation5 + $0x528] sm:$0xff]
    %v2527 = vld [vmem:[#allocation5 + $0x530] sm:$0xff]
    %v2528 = vld [vmem:[#allocation5 + $0x538] sm:$0xff]
    %v2529 = vld [vmem:[#allocation5 + $0x540] sm:$0xff]
    %v2530 = vld [vmem:[#allocation5 + $0x548] sm:$0xff]
    %v2531 = vld [vmem:[#allocation5 + $0x550] sm:$0xff]
    %v2532 = vld [vmem:[#allocation5 + $0x558] sm:$0xff]
    %v2533 = vld [vmem:[#allocation5 + $0x560] sm:$0xff]
    %v2534 = vld [vmem:[#allocation5 + $0x568] sm:$0xff]
    %v2535 = vld [vmem:[#allocation5 + $0x570] sm:$0xff]
    %v2536 = vld [vmem:[#allocation5 + $0x578] sm:$0xff]
    %v2537 = vld [vmem:[#allocation5 + $0x580] sm:$0xff]
    %v2538 = vld [vmem:[#allocation5 + $0x588] sm:$0xff]
    %v2539 = vld [vmem:[#allocation5 + $0x590] sm:$0xff]
    %v2540 = vld [vmem:[#allocation5 + $0x598] sm:$0xff]
    %v2541 = vld [vmem:[#allocation5 + $0x5a0] sm:$0xff]
    %v2542 = vld [vmem:[#allocation5 + $0x5a8] sm:$0xff]
    %v2543 = vld [vmem:[#allocation5 + $0x5b0] sm:$0xff]
    %v2544 = vld [vmem:[#allocation5 + $0x5b8] sm:$0xff]
    %v2545 = vld [vmem:[#allocation5 + $0x5c0] sm:$0xff]
    %v2546 = vld [vmem:[#allocation5 + $0x5c8] sm:$0xff]
    %v2547 = vld [vmem:[#allocation5 + $0x5d0] sm:$0xff]
    %v2548 = vld [vmem:[#allocation5 + $0x5d8] sm:$0xff]
    %v2549 = vld [vmem:[#allocation5 + $0x5e0] sm:$0xff]
    %v2550 = vld [vmem:[#allocation5 + $0x5e8] sm:$0xff]
    %v2551 = vld [vmem:[#allocation5 + $0x5f0] sm:$0xff]
    %v2552 = vld [vmem:[#allocation5 + $0x5f8] sm:$0xff]
    %v2553 = vld [vmem:[#allocation5 + $0x600] sm:$0xff]
    %v2554 = vld [vmem:[#allocation5 + $0x608] sm:$0xff]
    %v2555 = vld [vmem:[#allocation5 + $0x610] sm:$0xff]
    %v2556 = vld [vmem:[#allocation5 + $0x618] sm:$0xff]
    %v2557 = vld [vmem:[#allocation5 + $0x620] sm:$0xff]
    %v2558 = vld [vmem:[#allocation5 + $0x628] sm:$0xff]
    %v2559 = vld [vmem:[#allocation5 + $0x630] sm:$0xff]
    %v2560 = vld [vmem:[#allocation5 + $0x638] sm:$0xff]
    %v2561 = vld [vmem:[#allocation5 + $0x640] sm:$0xff]
    %v2562 = vld [vmem:[#allocation5 + $0x648] sm:$0xff]
    %v2563 = vld [vmem:[#allocation5 + $0x650] sm:$0xff]
    %v2564 = vld [vmem:[#allocation5 + $0x658] sm:$0xff]
    %v2565 = vld [vmem:[#allocation5 + $0x660] sm:$0xff]
    %v2566 = vld [vmem:[#allocation5 + $0x668] sm:$0xff]
    %v2567 = vld [vmem:[#allocation5 + $0x670] sm:$0xff]
    %v2568 = vld [vmem:[#allocation5 + $0x678] sm:$0xff]
    %v2569 = vld [vmem:[#allocation5 + $0x680] sm:$0xff]
    %v2570 = vld [vmem:[#allocation5 + $0x688] sm:$0xff]
    %v2571 = vld [vmem:[#allocation5 + $0x690] sm:$0xff]
    %v2572 = vld [vmem:[#allocation5 + $0x698] sm:$0xff]
    %v2573 = vld [vmem:[#allocation5 + $0x6a0] sm:$0xff]
    %v2574 = vld [vmem:[#allocation5 + $0x6a8] sm:$0xff]
    %v2575 = vld [vmem:[#allocation5 + $0x6b0] sm:$0xff]
    %v2576 = vld [vmem:[#allocation5 + $0x6b8] sm:$0xff]
    %v2577 = vld [vmem:[#allocation5 + $0x6c0] sm:$0xff]
    %v2578 = vld [vmem:[#allocation5 + $0x6c8] sm:$0xff]
    %v2579 = vld [vmem:[#allocation5 + $0x6d0] sm:$0xff]
    %v2580 = vld [vmem:[#allocation5 + $0x6d8] sm:$0xff]
    %v2581 = vld [vmem:[#allocation5 + $0x6e0] sm:$0xff]
    %v2582 = vld [vmem:[#allocation5 + $0x6e8] sm:$0xff]
    %v2583 = vld [vmem:[#allocation5 + $0x6f0] sm:$0xff]
    %v2584 = vld [vmem:[#allocation5 + $0x6f8] sm:$0xff]
    %v2585 = vld [vmem:[#allocation5 + $0x700] sm:$0xff]
    %v2586 = vld [vmem:[#allocation5 + $0x708] sm:$0xff]
    %v2587 = vld [vmem:[#allocation5 + $0x710] sm:$0xff]
    %v2588 = vld [vmem:[#allocation5 + $0x718] sm:$0xff]
    %v2589 = vld [vmem:[#allocation5 + $0x720] sm:$0xff]
    %v2590 = vld [vmem:[#allocation5 + $0x728] sm:$0xff]
    %v2591 = vld [vmem:[#allocation5 + $0x730] sm:$0xff]
    %v2592 = vld [vmem:[#allocation5 + $0x738] sm:$0xff]
    %v2593 = vld [vmem:[#allocation5 + $0x740] sm:$0xff]
    %v2594 = vld [vmem:[#allocation5 + $0x748] sm:$0xff]
    %v2595 = vld [vmem:[#allocation5 + $0x750] sm:$0xff]
    %v2596 = vld [vmem:[#allocation5 + $0x758] sm:$0xff]
    %v2597 = vld [vmem:[#allocation5 + $0x760] sm:$0xff]
    %v2598 = vld [vmem:[#allocation5 + $0x768] sm:$0xff]
    %v2599 = vld [vmem:[#allocation5 + $0x770] sm:$0xff]
    %v2600 = vld [vmem:[#allocation5 + $0x778] sm:$0xff]
    %v2601 = vld [vmem:[#allocation5 + $0x780] sm:$0xff]
    %v2602 = vld [vmem:[#allocation5 + $0x788] sm:$0xff]
    %v2603 = vld [vmem:[#allocation5 + $0x790] sm:$0xff]
    %v2604 = vld [vmem:[#allocation5 + $0x798] sm:$0xff]
    %v2605 = vld [vmem:[#allocation5 + $0x7a0] sm:$0xff]
    %v2606 = vld [vmem:[#allocation5 + $0x7a8] sm:$0xff]
    %v2607 = vld [vmem:[#allocation5 + $0x7b0] sm:$0xff]
    %v2608 = vld [vmem:[#allocation5 + $0x7b8] sm:$0xff]
    %v2609 = vld [vmem:[#allocation5 + $0x7c0] sm:$0xff]
    %v2610 = vld [vmem:[#allocation5 + $0x7c8] sm:$0xff]
    %v2611 = vld [vmem:[#allocation5 + $0x7d0] sm:$0xff]
    %v2612 = vld [vmem:[#allocation5 + $0x7d8] sm:$0xff]
    %v2613 = vld [vmem:[#allocation5 + $0x7e0] sm:$0xff]
    %v2614 = vld [vmem:[#allocation5 + $0x7e8] sm:$0xff]
    %v2615 = vld [vmem:[#allocation5 + $0x7f0] sm:$0xff]
    %v2616 = vld [vmem:[#allocation5 + $0x7f8] sm:$0xff]
    %2617 = vmatpush.xpose.msra.mxu0 0.0
    %2618 = vmatpush.xpose.msra.mxu0 0.0
    %2619 = vmatpush.xpose.msra.mxu0 0.0
    %2620 = vmatpush.xpose.msra.mxu0 0.0
    %2621 = vmatpush.xpose.msra.mxu0 0.0
    %2622 = vmatpush.xpose.msra.mxu0 0.0
    %2623 = vmatpush.xpose.msra.mxu0 0.0
    %2624 = vmatpush.xpose.msra.mxu0 0.0
    %2625 = vmatpush.xpose.msra.mxu0 0.0
    %2626 = vmatpush.xpose.msra.mxu0 0.0
    %2627 = vmatpush.xpose.msra.mxu0 0.0
    %2628 = vmatpush.xpose.msra.mxu0 0.0
    %2629 = vmatpush.xpose.msra.mxu0 %v2553
    %2630 = vmatpush.xpose.msra.mxu0 %v2489
    %2631 = vmatpush.xpose.msra.mxu0 %v2425
    %2632 = vmatpush.xpose.msra.mxu0 %v2361
    %2633 = vmatmul.f32.gmra.mxu0 %v77
    %v2634 = vpop.f32.mrf.mxu0
    %v2635 = vadd.f32 0.0, %v2634
    %2636 = vmatmul.f32.gmra.mxu0 %v141
    %v2637 = vpop.f32.mrf.mxu0
    %v2638 = vadd.f32 0.0, %v2637
    %2639 = vmatmul.f32.gmra.mxu0 %v2233
    %v2640 = vpop.f32.mrf.mxu0
    %v2641 = vadd.f32 0.0, %v2640
    %2642 = vmatmul.f32.gmra.mxu0 %v2297
    %v2643 = vpop.f32.mrf.mxu0
    %v2644 = vadd.f32 0.0, %v2643
    %2645 = vdwg.mxu0
    %2646 = vmatpush.xpose.msra.mxu0 0.0
    %2647 = vmatpush.xpose.msra.mxu0 0.0
    %2648 = vmatpush.xpose.msra.mxu0 0.0
    %2649 = vmatpush.xpose.msra.mxu0 0.0
    %2650 = vmatpush.xpose.msra.mxu0 0.0
    %2651 = vmatpush.xpose.msra.mxu0 0.0
    %2652 = vmatpush.xpose.msra.mxu0 0.0
    %2653 = vmatpush.xpose.msra.mxu0 0.0
    %2654 = vmatpush.xpose.msra.mxu0 0.0
    %2655 = vmatpush.xpose.msra.mxu0 0.0
    %2656 = vmatpush.xpose.msra.mxu0 0.0
    %2657 = vmatpush.xpose.msra.mxu0 0.0
    %2658 = vmatpush.xpose.msra.mxu0 %v2554
    %2659 = vmatpush.xpose.msra.mxu0 %v2490
    %2660 = vmatpush.xpose.msra.mxu0 %v2426
    %2661 = vmatpush.xpose.msra.mxu0 %v2362
    %2662 = vmatmul.f32.gmra.mxu0 %v78
    %v2663 = vpop.f32.mrf.mxu0
    %v2664 = vadd.f32 %v2635, %v2663
    %2665 = vmatmul.f32.gmra.mxu0 %v142
    %v2666 = vpop.f32.mrf.mxu0
    %v2667 = vadd.f32 %v2638, %v2666
    %2668 = vmatmul.f32.gmra.mxu0 %v2234
    %v2669 = vpop.f32.mrf.mxu0
    %v2670 = vadd.f32 %v2641, %v2669
    %2671 = vmatmul.f32.gmra.mxu0 %v2298
    %v2672 = vpop.f32.mrf.mxu0
    %v2673 = vadd.f32 %v2644, %v2672
    %2674 = vdwg.mxu0
    %2675 = vmatpush.xpose.msra.mxu0 0.0
    %2676 = vmatpush.xpose.msra.mxu0 0.0
    %2677 = vmatpush.xpose.msra.mxu0 0.0
    %2678 = vmatpush.xpose.msra.mxu0 0.0
    %2679 = vmatpush.xpose.msra.mxu0 0.0
    %2680 = vmatpush.xpose.msra.mxu0 0.0
    %2681 = vmatpush.xpose.msra.mxu0 0.0
    %2682 = vmatpush.xpose.msra.mxu0 0.0
    %2683 = vmatpush.xpose.msra.mxu0 0.0
    %2684 = vmatpush.xpose.msra.mxu0 0.0
    %2685 = vmatpush.xpose.msra.mxu0 0.0
    %2686 = vmatpush.xpose.msra.mxu0 0.0
    %2687 = vmatpush.xpose.msra.mxu0 %v2555
    %2688 = vmatpush.xpose.msra.mxu0 %v2491
    %2689 = vmatpush.xpose.msra.mxu0 %v2427
    %2690 = vmatpush.xpose.msra.mxu0 %v2363
    %2691 = vmatmul.f32.gmra.mxu0 %v79
    %v2692 = vpop.f32.mrf.mxu0
    %v2693 = vadd.f32 %v2664, %v2692
    %2694 = vmatmul.f32.gmra.mxu0 %v143
    %v2695 = vpop.f32.mrf.mxu0
    %v2696 = vadd.f32 %v2667, %v2695
    %2697 = vmatmul.f32.gmra.mxu0 %v2235
    %v2698 = vpop.f32.mrf.mxu0
    %v2699 = vadd.f32 %v2670, %v2698
    %2700 = vmatmul.f32.gmra.mxu0 %v2299
    %v2701 = vpop.f32.mrf.mxu0
    %v2702 = vadd.f32 %v2673, %v2701
    %2703 = vdwg.mxu0
    %2704 = vmatpush.xpose.msra.mxu0 0.0
    %2705 = vmatpush.xpose.msra.mxu0 0.0
    %2706 = vmatpush.xpose.msra.mxu0 0.0
    %2707 = vmatpush.xpose.msra.mxu0 0.0
    %2708 = vmatpush.xpose.msra.mxu0 0.0
    %2709 = vmatpush.xpose.msra.mxu0 0.0
    %2710 = vmatpush.xpose.msra.mxu0 0.0
    %2711 = vmatpush.xpose.msra.mxu0 0.0
    %2712 = vmatpush.xpose.msra.mxu0 0.0
    %2713 = vmatpush.xpose.msra.mxu0 0.0
    %2714 = vmatpush.xpose.msra.mxu0 0.0
    %2715 = vmatpush.xpose.msra.mxu0 0.0
    %2716 = vmatpush.xpose.msra.mxu0 %v2556
    %2717 = vmatpush.xpose.msra.mxu0 %v2492
    %2718 = vmatpush.xpose.msra.mxu0 %v2428
    %2719 = vmatpush.xpose.msra.mxu0 %v2364
    %2720 = vmatmul.f32.gmra.mxu0 %v80
    %v2721 = vpop.f32.mrf.mxu0
    %v2722 = vadd.f32 %v2693, %v2721
    %2723 = vmatmul.f32.gmra.mxu0 %v144
    %v2724 = vpop.f32.mrf.mxu0
    %v2725 = vadd.f32 %v2696, %v2724
    %2726 = vmatmul.f32.gmra.mxu0 %v2236
    %v2727 = vpop.f32.mrf.mxu0
    %v2728 = vadd.f32 %v2699, %v2727
    %2729 = vmatmul.f32.gmra.mxu0 %v2300
    %v2730 = vpop.f32.mrf.mxu0
    %v2731 = vadd.f32 %v2702, %v2730
    %2732 = vdwg.mxu0
    %2733 = vmatpush.xpose.msra.mxu0 0.0
    %2734 = vmatpush.xpose.msra.mxu0 0.0
    %2735 = vmatpush.xpose.msra.mxu0 0.0
    %2736 = vmatpush.xpose.msra.mxu0 0.0
    %2737 = vmatpush.xpose.msra.mxu0 0.0
    %2738 = vmatpush.xpose.msra.mxu0 0.0
    %2739 = vmatpush.xpose.msra.mxu0 0.0
    %2740 = vmatpush.xpose.msra.mxu0 0.0
    %2741 = vmatpush.xpose.msra.mxu0 0.0
    %2742 = vmatpush.xpose.msra.mxu0 0.0
    %2743 = vmatpush.xpose.msra.mxu0 0.0
    %2744 = vmatpush.xpose.msra.mxu0 0.0
    %2745 = vmatpush.xpose.msra.mxu0 %v2557
    %2746 = vmatpush.xpose.msra.mxu0 %v2493
    %2747 = vmatpush.xpose.msra.mxu0 %v2429
    %2748 = vmatpush.xpose.msra.mxu0 %v2365
    %2749 = vmatmul.f32.gmra.mxu0 %v81
    %v2750 = vpop.f32.mrf.mxu0
    %v2751 = vadd.f32 %v2722, %v2750
    %2752 = vmatmul.f32.gmra.mxu0 %v145
    %v2753 = vpop.f32.mrf.mxu0
    %v2754 = vadd.f32 %v2725, %v2753
    %2755 = vmatmul.f32.gmra.mxu0 %v2237
    %v2756 = vpop.f32.mrf.mxu0
    %v2757 = vadd.f32 %v2728, %v2756
    %2758 = vmatmul.f32.gmra.mxu0 %v2301
    %v2759 = vpop.f32.mrf.mxu0
    %v2760 = vadd.f32 %v2731, %v2759
    %2761 = vdwg.mxu0
    %2762 = vmatpush.xpose.msra.mxu0 0.0
    %2763 = vmatpush.xpose.msra.mxu0 0.0
    %2764 = vmatpush.xpose.msra.mxu0 0.0
    %2765 = vmatpush.xpose.msra.mxu0 0.0
    %2766 = vmatpush.xpose.msra.mxu0 0.0
    %2767 = vmatpush.xpose.msra.mxu0 0.0
    %2768 = vmatpush.xpose.msra.mxu0 0.0
    %2769 = vmatpush.xpose.msra.mxu0 0.0
    %2770 = vmatpush.xpose.msra.mxu0 0.0
    %2771 = vmatpush.xpose.msra.mxu0 0.0
    %2772 = vmatpush.xpose.msra.mxu0 0.0
    %2773 = vmatpush.xpose.msra.mxu0 0.0
    %2774 = vmatpush.xpose.msra.mxu0 %v2558
    %2775 = vmatpush.xpose.msra.mxu0 %v2494
    %2776 = vmatpush.xpose.msra.mxu0 %v2430
    %2777 = vmatpush.xpose.msra.mxu0 %v2366
    %2778 = vmatmul.f32.gmra.mxu0 %v82
    %v2779 = vpop.f32.mrf.mxu0
    %v2780 = vadd.f32 %v2751, %v2779
    %2781 = vmatmul.f32.gmra.mxu0 %v146
    %v2782 = vpop.f32.mrf.mxu0
    %v2783 = vadd.f32 %v2754, %v2782
    %2784 = vmatmul.f32.gmra.mxu0 %v2238
    %v2785 = vpop.f32.mrf.mxu0
    %v2786 = vadd.f32 %v2757, %v2785
    %2787 = vmatmul.f32.gmra.mxu0 %v2302
    %v2788 = vpop.f32.mrf.mxu0
    %v2789 = vadd.f32 %v2760, %v2788
    %2790 = vdwg.mxu0
    %2791 = vmatpush.xpose.msra.mxu0 0.0
    %2792 = vmatpush.xpose.msra.mxu0 0.0
    %2793 = vmatpush.xpose.msra.mxu0 0.0
    %2794 = vmatpush.xpose.msra.mxu0 0.0
    %2795 = vmatpush.xpose.msra.mxu0 0.0
    %2796 = vmatpush.xpose.msra.mxu0 0.0
    %2797 = vmatpush.xpose.msra.mxu0 0.0
    %2798 = vmatpush.xpose.msra.mxu0 0.0
    %2799 = vmatpush.xpose.msra.mxu0 0.0
    %2800 = vmatpush.xpose.msra.mxu0 0.0
    %2801 = vmatpush.xpose.msra.mxu0 0.0
    %2802 = vmatpush.xpose.msra.mxu0 0.0
    %2803 = vmatpush.xpose.msra.mxu0 %v2559
    %2804 = vmatpush.xpose.msra.mxu0 %v2495
    %2805 = vmatpush.xpose.msra.mxu0 %v2431
    %2806 = vmatpush.xpose.msra.mxu0 %v2367
    %2807 = vmatmul.f32.gmra.mxu0 %v83
    %v2808 = vpop.f32.mrf.mxu0
    %v2809 = vadd.f32 %v2780, %v2808
    %2810 = vmatmul.f32.gmra.mxu0 %v147
    %v2811 = vpop.f32.mrf.mxu0
    %v2812 = vadd.f32 %v2783, %v2811
    %2813 = vmatmul.f32.gmra.mxu0 %v2239
    %v2814 = vpop.f32.mrf.mxu0
    %v2815 = vadd.f32 %v2786, %v2814
    %2816 = vmatmul.f32.gmra.mxu0 %v2303
    %v2817 = vpop.f32.mrf.mxu0
    %v2818 = vadd.f32 %v2789, %v2817
    %2819 = vdwg.mxu0
    %2820 = vmatpush.xpose.msra.mxu0 0.0
    %2821 = vmatpush.xpose.msra.mxu0 0.0
    %2822 = vmatpush.xpose.msra.mxu0 0.0
    %2823 = vmatpush.xpose.msra.mxu0 0.0
    %2824 = vmatpush.xpose.msra.mxu0 0.0
    %2825 = vmatpush.xpose.msra.mxu0 0.0
    %2826 = vmatpush.xpose.msra.mxu0 0.0
    %2827 = vmatpush.xpose.msra.mxu0 0.0
    %2828 = vmatpush.xpose.msra.mxu0 0.0
    %2829 = vmatpush.xpose.msra.mxu0 0.0
    %2830 = vmatpush.xpose.msra.mxu0 0.0
    %2831 = vmatpush.xpose.msra.mxu0 0.0
    %2832 = vmatpush.xpose.msra.mxu0 %v2560
    %2833 = vmatpush.xpose.msra.mxu0 %v2496
    %2834 = vmatpush.xpose.msra.mxu0 %v2432
    %2835 = vmatpush.xpose.msra.mxu0 %v2368
    %2836 = vmatmul.f32.gmra.mxu0 %v84
    %v2837 = vpop.f32.mrf.mxu0
    %v2838 = vadd.f32 %v2809, %v2837
    %2839 = vmatmul.f32.gmra.mxu0 %v148
    %v2840 = vpop.f32.mrf.mxu0
    %v2841 = vadd.f32 %v2812, %v2840
    %2842 = vmatmul.f32.gmra.mxu0 %v2240
    %v2843 = vpop.f32.mrf.mxu0
    %v2844 = vadd.f32 %v2815, %v2843
    %2845 = vmatmul.f32.gmra.mxu0 %v2304
    %v2846 = vpop.f32.mrf.mxu0
    %v2847 = vadd.f32 %v2818, %v2846
    %2848 = vdwg.mxu0
    %2849 = vmatpush.xpose.msra.mxu0 0.0
    %2850 = vmatpush.xpose.msra.mxu0 0.0
    %2851 = vmatpush.xpose.msra.mxu0 0.0
    %2852 = vmatpush.xpose.msra.mxu0 0.0
    %2853 = vmatpush.xpose.msra.mxu0 0.0
    %2854 = vmatpush.xpose.msra.mxu0 0.0
    %2855 = vmatpush.xpose.msra.mxu0 0.0
    %2856 = vmatpush.xpose.msra.mxu0 0.0
    %2857 = vmatpush.xpose.msra.mxu0 0.0
    %2858 = vmatpush.xpose.msra.mxu0 0.0
    %2859 = vmatpush.xpose.msra.mxu0 0.0
    %2860 = vmatpush.xpose.msra.mxu0 0.0
    %2861 = vmatpush.xpose.msra.mxu0 %v2561
    %2862 = vmatpush.xpose.msra.mxu0 %v2497
    %2863 = vmatpush.xpose.msra.mxu0 %v2433
    %2864 = vmatpush.xpose.msra.mxu0 %v2369
    %2865 = vmatmul.f32.gmra.mxu0 %v85
    %v2866 = vpop.f32.mrf.mxu0
    %v2867 = vadd.f32 %v2838, %v2866
    %2868 = vmatmul.f32.gmra.mxu0 %v149
    %v2869 = vpop.f32.mrf.mxu0
    %v2870 = vadd.f32 %v2841, %v2869
    %2871 = vmatmul.f32.gmra.mxu0 %v2241
    %v2872 = vpop.f32.mrf.mxu0
    %v2873 = vadd.f32 %v2844, %v2872
    %2874 = vmatmul.f32.gmra.mxu0 %v2305
    %v2875 = vpop.f32.mrf.mxu0
    %v2876 = vadd.f32 %v2847, %v2875
    %2877 = vdwg.mxu0
    %2878 = vmatpush.xpose.msra.mxu0 0.0
    %2879 = vmatpush.xpose.msra.mxu0 0.0
    %2880 = vmatpush.xpose.msra.mxu0 0.0
    %2881 = vmatpush.xpose.msra.mxu0 0.0
    %2882 = vmatpush.xpose.msra.mxu0 0.0
    %2883 = vmatpush.xpose.msra.mxu0 0.0
    %2884 = vmatpush.xpose.msra.mxu0 0.0
    %2885 = vmatpush.xpose.msra.mxu0 0.0
    %2886 = vmatpush.xpose.msra.mxu0 0.0
    %2887 = vmatpush.xpose.msra.mxu0 0.0
    %2888 = vmatpush.xpose.msra.mxu0 0.0
    %2889 = vmatpush.xpose.msra.mxu0 0.0
    %2890 = vmatpush.xpose.msra.mxu0 %v2562
    %2891 = vmatpush.xpose.msra.mxu0 %v2498
    %2892 = vmatpush.xpose.msra.mxu0 %v2434
    %2893 = vmatpush.xpose.msra.mxu0 %v2370
    %2894 = vmatmul.f32.gmra.mxu0 %v86
    %v2895 = vpop.f32.mrf.mxu0
    %v2896 = vadd.f32 %v2867, %v2895
    %2897 = vmatmul.f32.gmra.mxu0 %v150
    %v2898 = vpop.f32.mrf.mxu0
    %v2899 = vadd.f32 %v2870, %v2898
    %2900 = vmatmul.f32.gmra.mxu0 %v2242
    %v2901 = vpop.f32.mrf.mxu0
    %v2902 = vadd.f32 %v2873, %v2901
    %2903 = vmatmul.f32.gmra.mxu0 %v2306
    %v2904 = vpop.f32.mrf.mxu0
    %v2905 = vadd.f32 %v2876, %v2904
    %2906 = vdwg.mxu0
    %2907 = vmatpush.xpose.msra.mxu0 0.0
    %2908 = vmatpush.xpose.msra.mxu0 0.0
    %2909 = vmatpush.xpose.msra.mxu0 0.0
    %2910 = vmatpush.xpose.msra.mxu0 0.0
    %2911 = vmatpush.xpose.msra.mxu0 0.0
    %2912 = vmatpush.xpose.msra.mxu0 0.0
    %2913 = vmatpush.xpose.msra.mxu0 0.0
    %2914 = vmatpush.xpose.msra.mxu0 0.0
    %2915 = vmatpush.xpose.msra.mxu0 0.0
    %2916 = vmatpush.xpose.msra.mxu0 0.0
    %2917 = vmatpush.xpose.msra.mxu0 0.0
    %2918 = vmatpush.xpose.msra.mxu0 0.0
    %2919 = vmatpush.xpose.msra.mxu0 %v2563
    %2920 = vmatpush.xpose.msra.mxu0 %v2499
    %2921 = vmatpush.xpose.msra.mxu0 %v2435
    %2922 = vmatpush.xpose.msra.mxu0 %v2371
    %2923 = vmatmul.f32.gmra.mxu0 %v87
    %v2924 = vpop.f32.mrf.mxu0
    %v2925 = vadd.f32 %v2896, %v2924
    %2926 = vmatmul.f32.gmra.mxu0 %v151
    %v2927 = vpop.f32.mrf.mxu0
    %v2928 = vadd.f32 %v2899, %v2927
    %2929 = vmatmul.f32.gmra.mxu0 %v2243
    %v2930 = vpop.f32.mrf.mxu0
    %v2931 = vadd.f32 %v2902, %v2930
    %2932 = vmatmul.f32.gmra.mxu0 %v2307
    %v2933 = vpop.f32.mrf.mxu0
    %v2934 = vadd.f32 %v2905, %v2933
    %2935 = vdwg.mxu0
    %2936 = vmatpush.xpose.msra.mxu0 0.0
    %2937 = vmatpush.xpose.msra.mxu0 0.0
    %2938 = vmatpush.xpose.msra.mxu0 0.0
    %2939 = vmatpush.xpose.msra.mxu0 0.0
    %2940 = vmatpush.xpose.msra.mxu0 0.0
    %2941 = vmatpush.xpose.msra.mxu0 0.0
    %2942 = vmatpush.xpose.msra.mxu0 0.0
    %2943 = vmatpush.xpose.msra.mxu0 0.0
    %2944 = vmatpush.xpose.msra.mxu0 0.0
    %2945 = vmatpush.xpose.msra.mxu0 0.0
    %2946 = vmatpush.xpose.msra.mxu0 0.0
    %2947 = vmatpush.xpose.msra.mxu0 0.0
    %2948 = vmatpush.xpose.msra.mxu0 %v2564
    %2949 = vmatpush.xpose.msra.mxu0 %v2500
    %2950 = vmatpush.xpose.msra.mxu0 %v2436
    %2951 = vmatpush.xpose.msra.mxu0 %v2372
    %2952 = vmatmul.f32.gmra.mxu0 %v88
    %v2953 = vpop.f32.mrf.mxu0
    %v2954 = vadd.f32 %v2925, %v2953
    %2955 = vmatmul.f32.gmra.mxu0 %v152
    %v2956 = vpop.f32.mrf.mxu0
    %v2957 = vadd.f32 %v2928, %v2956
    %2958 = vmatmul.f32.gmra.mxu0 %v2244
    %v2959 = vpop.f32.mrf.mxu0
    %v2960 = vadd.f32 %v2931, %v2959
    %2961 = vmatmul.f32.gmra.mxu0 %v2308
    %v2962 = vpop.f32.mrf.mxu0
    %v2963 = vadd.f32 %v2934, %v2962
    %2964 = vdwg.mxu0
    %2965 = vmatpush.xpose.msra.mxu0 0.0
    %2966 = vmatpush.xpose.msra.mxu0 0.0
    %2967 = vmatpush.xpose.msra.mxu0 0.0
    %2968 = vmatpush.xpose.msra.mxu0 0.0
    %2969 = vmatpush.xpose.msra.mxu0 0.0
    %2970 = vmatpush.xpose.msra.mxu0 0.0
    %2971 = vmatpush.xpose.msra.mxu0 0.0
    %2972 = vmatpush.xpose.msra.mxu0 0.0
    %2973 = vmatpush.xpose.msra.mxu0 0.0
    %2974 = vmatpush.xpose.msra.mxu0 0.0
    %2975 = vmatpush.xpose.msra.mxu0 0.0
    %2976 = vmatpush.xpose.msra.mxu0 0.0
    %2977 = vmatpush.xpose.msra.mxu0 %v2565
    %2978 = vmatpush.xpose.msra.mxu0 %v2501
    %2979 = vmatpush.xpose.msra.mxu0 %v2437
    %2980 = vmatpush.xpose.msra.mxu0 %v2373
    %2981 = vmatmul.f32.gmra.mxu0 %v89
    %v2982 = vpop.f32.mrf.mxu0
    %v2983 = vadd.f32 %v2954, %v2982
    %2984 = vmatmul.f32.gmra.mxu0 %v153
    %v2985 = vpop.f32.mrf.mxu0
    %v2986 = vadd.f32 %v2957, %v2985
    %2987 = vmatmul.f32.gmra.mxu0 %v2245
    %v2988 = vpop.f32.mrf.mxu0
    %v2989 = vadd.f32 %v2960, %v2988
    %2990 = vmatmul.f32.gmra.mxu0 %v2309
    %v2991 = vpop.f32.mrf.mxu0
    %v2992 = vadd.f32 %v2963, %v2991
    %2993 = vdwg.mxu0
    %2994 = vmatpush.xpose.msra.mxu0 0.0
    %2995 = vmatpush.xpose.msra.mxu0 0.0
    %2996 = vmatpush.xpose.msra.mxu0 0.0
    %2997 = vmatpush.xpose.msra.mxu0 0.0
    %2998 = vmatpush.xpose.msra.mxu0 0.0
    %2999 = vmatpush.xpose.msra.mxu0 0.0
    %3000 = vmatpush.xpose.msra.mxu0 0.0
    %3001 = vmatpush.xpose.msra.mxu0 0.0
    %3002 = vmatpush.xpose.msra.mxu0 0.0
    %3003 = vmatpush.xpose.msra.mxu0 0.0
    %3004 = vmatpush.xpose.msra.mxu0 0.0
    %3005 = vmatpush.xpose.msra.mxu0 0.0
    %3006 = vmatpush.xpose.msra.mxu0 %v2566
    %3007 = vmatpush.xpose.msra.mxu0 %v2502
    %3008 = vmatpush.xpose.msra.mxu0 %v2438
    %3009 = vmatpush.xpose.msra.mxu0 %v2374
    %3010 = vmatmul.f32.gmra.mxu0 %v90
    %v3011 = vpop.f32.mrf.mxu0
    %v3012 = vadd.f32 %v2983, %v3011
    %3013 = vmatmul.f32.gmra.mxu0 %v154
    %v3014 = vpop.f32.mrf.mxu0
    %v3015 = vadd.f32 %v2986, %v3014
    %3016 = vmatmul.f32.gmra.mxu0 %v2246
    %v3017 = vpop.f32.mrf.mxu0
    %v3018 = vadd.f32 %v2989, %v3017
    %3019 = vmatmul.f32.gmra.mxu0 %v2310
    %v3020 = vpop.f32.mrf.mxu0
    %v3021 = vadd.f32 %v2992, %v3020
    %3022 = vdwg.mxu0
    %3023 = vmatpush.xpose.msra.mxu0 0.0
    %3024 = vmatpush.xpose.msra.mxu0 0.0
    %3025 = vmatpush.xpose.msra.mxu0 0.0
    %3026 = vmatpush.xpose.msra.mxu0 0.0
    %3027 = vmatpush.xpose.msra.mxu0 0.0
    %3028 = vmatpush.xpose.msra.mxu0 0.0
    %3029 = vmatpush.xpose.msra.mxu0 0.0
    %3030 = vmatpush.xpose.msra.mxu0 0.0
    %3031 = vmatpush.xpose.msra.mxu0 0.0
    %3032 = vmatpush.xpose.msra.mxu0 0.0
    %3033 = vmatpush.xpose.msra.mxu0 0.0
    %3034 = vmatpush.xpose.msra.mxu0 0.0
    %3035 = vmatpush.xpose.msra.mxu0 %v2567
    %3036 = vmatpush.xpose.msra.mxu0 %v2503
    %3037 = vmatpush.xpose.msra.mxu0 %v2439
    %3038 = vmatpush.xpose.msra.mxu0 %v2375
    %3039 = vmatmul.f32.gmra.mxu0 %v91
    %v3040 = vpop.f32.mrf.mxu0
    %v3041 = vadd.f32 %v3012, %v3040
    %3042 = vmatmul.f32.gmra.mxu0 %v155
    %v3043 = vpop.f32.mrf.mxu0
    %v3044 = vadd.f32 %v3015, %v3043
    %3045 = vmatmul.f32.gmra.mxu0 %v2247
    %v3046 = vpop.f32.mrf.mxu0
    %v3047 = vadd.f32 %v3018, %v3046
    %3048 = vmatmul.f32.gmra.mxu0 %v2311
    %v3049 = vpop.f32.mrf.mxu0
    %v3050 = vadd.f32 %v3021, %v3049
    %3051 = vdwg.mxu0
    %3052 = vmatpush.xpose.msra.mxu0 0.0
    %3053 = vmatpush.xpose.msra.mxu0 0.0
    %3054 = vmatpush.xpose.msra.mxu0 0.0
    %3055 = vmatpush.xpose.msra.mxu0 0.0
    %3056 = vmatpush.xpose.msra.mxu0 0.0
    %3057 = vmatpush.xpose.msra.mxu0 0.0
    %3058 = vmatpush.xpose.msra.mxu0 0.0
    %3059 = vmatpush.xpose.msra.mxu0 0.0
    %3060 = vmatpush.xpose.msra.mxu0 0.0
    %3061 = vmatpush.xpose.msra.mxu0 0.0
    %3062 = vmatpush.xpose.msra.mxu0 0.0
    %3063 = vmatpush.xpose.msra.mxu0 0.0
    %3064 = vmatpush.xpose.msra.mxu0 %v2568
    %3065 = vmatpush.xpose.msra.mxu0 %v2504
    %3066 = vmatpush.xpose.msra.mxu0 %v2440
    %3067 = vmatpush.xpose.msra.mxu0 %v2376
    %3068 = vmatmul.f32.gmra.mxu0 %v92
    %v3069 = vpop.f32.mrf.mxu0
    %v3070 = vadd.f32 %v3041, %v3069
    %3071 = vmatmul.f32.gmra.mxu0 %v156
    %v3072 = vpop.f32.mrf.mxu0
    %v3073 = vadd.f32 %v3044, %v3072
    %3074 = vmatmul.f32.gmra.mxu0 %v2248
    %v3075 = vpop.f32.mrf.mxu0
    %v3076 = vadd.f32 %v3047, %v3075
    %3077 = vmatmul.f32.gmra.mxu0 %v2312
    %v3078 = vpop.f32.mrf.mxu0
    %v3079 = vadd.f32 %v3050, %v3078
    %3080 = vdwg.mxu0
    %3081 = vmatpush.xpose.msra.mxu0 0.0
    %3082 = vmatpush.xpose.msra.mxu0 0.0
    %3083 = vmatpush.xpose.msra.mxu0 0.0
    %3084 = vmatpush.xpose.msra.mxu0 0.0
    %3085 = vmatpush.xpose.msra.mxu0 0.0
    %3086 = vmatpush.xpose.msra.mxu0 0.0
    %3087 = vmatpush.xpose.msra.mxu0 0.0
    %3088 = vmatpush.xpose.msra.mxu0 0.0
    %3089 = vmatpush.xpose.msra.mxu0 0.0
    %3090 = vmatpush.xpose.msra.mxu0 0.0
    %3091 = vmatpush.xpose.msra.mxu0 0.0
    %3092 = vmatpush.xpose.msra.mxu0 0.0
    %3093 = vmatpush.xpose.msra.mxu0 %v2569
    %3094 = vmatpush.xpose.msra.mxu0 %v2505
    %3095 = vmatpush.xpose.msra.mxu0 %v2441
    %3096 = vmatpush.xpose.msra.mxu0 %v2377
    %3097 = vmatmul.f32.gmra.mxu0 %v93
    %v3098 = vpop.f32.mrf.mxu0
    %v3099 = vadd.f32 %v3070, %v3098
    %3100 = vmatmul.f32.gmra.mxu0 %v157
    %v3101 = vpop.f32.mrf.mxu0
    %v3102 = vadd.f32 %v3073, %v3101
    %3103 = vmatmul.f32.gmra.mxu0 %v2249
    %v3104 = vpop.f32.mrf.mxu0
    %v3105 = vadd.f32 %v3076, %v3104
    %3106 = vmatmul.f32.gmra.mxu0 %v2313
    %v3107 = vpop.f32.mrf.mxu0
    %v3108 = vadd.f32 %v3079, %v3107
    %3109 = vdwg.mxu0
    %3110 = vmatpush.xpose.msra.mxu0 0.0
    %3111 = vmatpush.xpose.msra.mxu0 0.0
    %3112 = vmatpush.xpose.msra.mxu0 0.0
    %3113 = vmatpush.xpose.msra.mxu0 0.0
    %3114 = vmatpush.xpose.msra.mxu0 0.0
    %3115 = vmatpush.xpose.msra.mxu0 0.0
    %3116 = vmatpush.xpose.msra.mxu0 0.0
    %3117 = vmatpush.xpose.msra.mxu0 0.0
    %3118 = vmatpush.xpose.msra.mxu0 0.0
    %3119 = vmatpush.xpose.msra.mxu0 0.0
    %3120 = vmatpush.xpose.msra.mxu0 0.0
    %3121 = vmatpush.xpose.msra.mxu0 0.0
    %3122 = vmatpush.xpose.msra.mxu0 %v2570
    %3123 = vmatpush.xpose.msra.mxu0 %v2506
    %3124 = vmatpush.xpose.msra.mxu0 %v2442
    %3125 = vmatpush.xpose.msra.mxu0 %v2378
    %3126 = vmatmul.f32.gmra.mxu0 %v94
    %v3127 = vpop.f32.mrf.mxu0
    %v3128 = vadd.f32 %v3099, %v3127
    %3129 = vmatmul.f32.gmra.mxu0 %v158
    %v3130 = vpop.f32.mrf.mxu0
    %v3131 = vadd.f32 %v3102, %v3130
    %3132 = vmatmul.f32.gmra.mxu0 %v2250
    %v3133 = vpop.f32.mrf.mxu0
    %v3134 = vadd.f32 %v3105, %v3133
    %3135 = vmatmul.f32.gmra.mxu0 %v2314
    %v3136 = vpop.f32.mrf.mxu0
    %v3137 = vadd.f32 %v3108, %v3136
    %3138 = vdwg.mxu0
    %3139 = vmatpush.xpose.msra.mxu0 0.0
    %3140 = vmatpush.xpose.msra.mxu0 0.0
    %3141 = vmatpush.xpose.msra.mxu0 0.0
    %3142 = vmatpush.xpose.msra.mxu0 0.0
    %3143 = vmatpush.xpose.msra.mxu0 0.0
    %3144 = vmatpush.xpose.msra.mxu0 0.0
    %3145 = vmatpush.xpose.msra.mxu0 0.0
    %3146 = vmatpush.xpose.msra.mxu0 0.0
    %3147 = vmatpush.xpose.msra.mxu0 0.0
    %3148 = vmatpush.xpose.msra.mxu0 0.0
    %3149 = vmatpush.xpose.msra.mxu0 0.0
    %3150 = vmatpush.xpose.msra.mxu0 0.0
    %3151 = vmatpush.xpose.msra.mxu0 %v2571
    %3152 = vmatpush.xpose.msra.mxu0 %v2507
    %3153 = vmatpush.xpose.msra.mxu0 %v2443
    %3154 = vmatpush.xpose.msra.mxu0 %v2379
    %3155 = vmatmul.f32.gmra.mxu0 %v95
    %v3156 = vpop.f32.mrf.mxu0
    %v3157 = vadd.f32 %v3128, %v3156
    %3158 = vmatmul.f32.gmra.mxu0 %v159
    %v3159 = vpop.f32.mrf.mxu0
    %v3160 = vadd.f32 %v3131, %v3159
    %3161 = vmatmul.f32.gmra.mxu0 %v2251
    %v3162 = vpop.f32.mrf.mxu0
    %v3163 = vadd.f32 %v3134, %v3162
    %3164 = vmatmul.f32.gmra.mxu0 %v2315
    %v3165 = vpop.f32.mrf.mxu0
    %v3166 = vadd.f32 %v3137, %v3165
    %3167 = vdwg.mxu0
    %3168 = vmatpush.xpose.msra.mxu0 0.0
    %3169 = vmatpush.xpose.msra.mxu0 0.0
    %3170 = vmatpush.xpose.msra.mxu0 0.0
    %3171 = vmatpush.xpose.msra.mxu0 0.0
    %3172 = vmatpush.xpose.msra.mxu0 0.0
    %3173 = vmatpush.xpose.msra.mxu0 0.0
    %3174 = vmatpush.xpose.msra.mxu0 0.0
    %3175 = vmatpush.xpose.msra.mxu0 0.0
    %3176 = vmatpush.xpose.msra.mxu0 0.0
    %3177 = vmatpush.xpose.msra.mxu0 0.0
    %3178 = vmatpush.xpose.msra.mxu0 0.0
    %3179 = vmatpush.xpose.msra.mxu0 0.0
    %3180 = vmatpush.xpose.msra.mxu0 %v2572
    %3181 = vmatpush.xpose.msra.mxu0 %v2508
    %3182 = vmatpush.xpose.msra.mxu0 %v2444
    %3183 = vmatpush.xpose.msra.mxu0 %v2380
    %3184 = vmatmul.f32.gmra.mxu0 %v96
    %v3185 = vpop.f32.mrf.mxu0
    %v3186 = vadd.f32 %v3157, %v3185
    %3187 = vmatmul.f32.gmra.mxu0 %v160
    %v3188 = vpop.f32.mrf.mxu0
    %v3189 = vadd.f32 %v3160, %v3188
    %3190 = vmatmul.f32.gmra.mxu0 %v2252
    %v3191 = vpop.f32.mrf.mxu0
    %v3192 = vadd.f32 %v3163, %v3191
    %3193 = vmatmul.f32.gmra.mxu0 %v2316
    %v3194 = vpop.f32.mrf.mxu0
    %v3195 = vadd.f32 %v3166, %v3194
    %3196 = vdwg.mxu0
    %3197 = vmatpush.xpose.msra.mxu0 0.0
    %3198 = vmatpush.xpose.msra.mxu0 0.0
    %3199 = vmatpush.xpose.msra.mxu0 0.0
    %3200 = vmatpush.xpose.msra.mxu0 0.0
    %3201 = vmatpush.xpose.msra.mxu0 0.0
    %3202 = vmatpush.xpose.msra.mxu0 0.0
    %3203 = vmatpush.xpose.msra.mxu0 0.0
    %3204 = vmatpush.xpose.msra.mxu0 0.0
    %3205 = vmatpush.xpose.msra.mxu0 0.0
    %3206 = vmatpush.xpose.msra.mxu0 0.0
    %3207 = vmatpush.xpose.msra.mxu0 0.0
    %3208 = vmatpush.xpose.msra.mxu0 0.0
    %3209 = vmatpush.xpose.msra.mxu0 %v2573
    %3210 = vmatpush.xpose.msra.mxu0 %v2509
    %3211 = vmatpush.xpose.msra.mxu0 %v2445
    %3212 = vmatpush.xpose.msra.mxu0 %v2381
    %3213 = vmatmul.f32.gmra.mxu0 %v97
    %v3214 = vpop.f32.mrf.mxu0
    %v3215 = vadd.f32 %v3186, %v3214
    %3216 = vmatmul.f32.gmra.mxu0 %v161
    %v3217 = vpop.f32.mrf.mxu0
    %v3218 = vadd.f32 %v3189, %v3217
    %3219 = vmatmul.f32.gmra.mxu0 %v2253
    %v3220 = vpop.f32.mrf.mxu0
    %v3221 = vadd.f32 %v3192, %v3220
    %3222 = vmatmul.f32.gmra.mxu0 %v2317
    %v3223 = vpop.f32.mrf.mxu0
    %v3224 = vadd.f32 %v3195, %v3223
    %3225 = vdwg.mxu0
    %3226 = vmatpush.xpose.msra.mxu0 0.0
    %3227 = vmatpush.xpose.msra.mxu0 0.0
    %3228 = vmatpush.xpose.msra.mxu0 0.0
    %3229 = vmatpush.xpose.msra.mxu0 0.0
    %3230 = vmatpush.xpose.msra.mxu0 0.0
    %3231 = vmatpush.xpose.msra.mxu0 0.0
    %3232 = vmatpush.xpose.msra.mxu0 0.0
    %3233 = vmatpush.xpose.msra.mxu0 0.0
    %3234 = vmatpush.xpose.msra.mxu0 0.0
    %3235 = vmatpush.xpose.msra.mxu0 0.0
    %3236 = vmatpush.xpose.msra.mxu0 0.0
    %3237 = vmatpush.xpose.msra.mxu0 0.0
    %3238 = vmatpush.xpose.msra.mxu0 %v2574
    %3239 = vmatpush.xpose.msra.mxu0 %v2510
    %3240 = vmatpush.xpose.msra.mxu0 %v2446
    %3241 = vmatpush.xpose.msra.mxu0 %v2382
    %3242 = vmatmul.f32.gmra.mxu0 %v98
    %v3243 = vpop.f32.mrf.mxu0
    %v3244 = vadd.f32 %v3215, %v3243
    %3245 = vmatmul.f32.gmra.mxu0 %v162
    %v3246 = vpop.f32.mrf.mxu0
    %v3247 = vadd.f32 %v3218, %v3246
    %3248 = vmatmul.f32.gmra.mxu0 %v2254
    %v3249 = vpop.f32.mrf.mxu0
    %v3250 = vadd.f32 %v3221, %v3249
    %3251 = vmatmul.f32.gmra.mxu0 %v2318
    %v3252 = vpop.f32.mrf.mxu0
    %v3253 = vadd.f32 %v3224, %v3252
    %3254 = vdwg.mxu0
    %3255 = vmatpush.xpose.msra.mxu0 0.0
    %3256 = vmatpush.xpose.msra.mxu0 0.0
    %3257 = vmatpush.xpose.msra.mxu0 0.0
    %3258 = vmatpush.xpose.msra.mxu0 0.0
    %3259 = vmatpush.xpose.msra.mxu0 0.0
    %3260 = vmatpush.xpose.msra.mxu0 0.0
    %3261 = vmatpush.xpose.msra.mxu0 0.0
    %3262 = vmatpush.xpose.msra.mxu0 0.0
    %3263 = vmatpush.xpose.msra.mxu0 0.0
    %3264 = vmatpush.xpose.msra.mxu0 0.0
    %3265 = vmatpush.xpose.msra.mxu0 0.0
    %3266 = vmatpush.xpose.msra.mxu0 0.0
    %3267 = vmatpush.xpose.msra.mxu0 %v2575
    %3268 = vmatpush.xpose.msra.mxu0 %v2511
    %3269 = vmatpush.xpose.msra.mxu0 %v2447
    %3270 = vmatpush.xpose.msra.mxu0 %v2383
    %3271 = vmatmul.f32.gmra.mxu0 %v99
    %v3272 = vpop.f32.mrf.mxu0
    %v3273 = vadd.f32 %v3244, %v3272
    %3274 = vmatmul.f32.gmra.mxu0 %v163
    %v3275 = vpop.f32.mrf.mxu0
    %v3276 = vadd.f32 %v3247, %v3275
    %3277 = vmatmul.f32.gmra.mxu0 %v2255
    %v3278 = vpop.f32.mrf.mxu0
    %v3279 = vadd.f32 %v3250, %v3278
    %3280 = vmatmul.f32.gmra.mxu0 %v2319
    %v3281 = vpop.f32.mrf.mxu0
    %v3282 = vadd.f32 %v3253, %v3281
    %3283 = vdwg.mxu0
    %3284 = vmatpush.xpose.msra.mxu0 0.0
    %3285 = vmatpush.xpose.msra.mxu0 0.0
    %3286 = vmatpush.xpose.msra.mxu0 0.0
    %3287 = vmatpush.xpose.msra.mxu0 0.0
    %3288 = vmatpush.xpose.msra.mxu0 0.0
    %3289 = vmatpush.xpose.msra.mxu0 0.0
    %3290 = vmatpush.xpose.msra.mxu0 0.0
    %3291 = vmatpush.xpose.msra.mxu0 0.0
    %3292 = vmatpush.xpose.msra.mxu0 0.0
    %3293 = vmatpush.xpose.msra.mxu0 0.0
    %3294 = vmatpush.xpose.msra.mxu0 0.0
    %3295 = vmatpush.xpose.msra.mxu0 0.0
    %3296 = vmatpush.xpose.msra.mxu0 %v2576
    %3297 = vmatpush.xpose.msra.mxu0 %v2512
    %3298 = vmatpush.xpose.msra.mxu0 %v2448
    %3299 = vmatpush.xpose.msra.mxu0 %v2384
    %3300 = vmatmul.f32.gmra.mxu0 %v100
    %v3301 = vpop.f32.mrf.mxu0
    %v3302 = vadd.f32 %v3273, %v3301
    %3303 = vmatmul.f32.gmra.mxu0 %v164
    %v3304 = vpop.f32.mrf.mxu0
    %v3305 = vadd.f32 %v3276, %v3304
    %3306 = vmatmul.f32.gmra.mxu0 %v2256
    %v3307 = vpop.f32.mrf.mxu0
    %v3308 = vadd.f32 %v3279, %v3307
    %3309 = vmatmul.f32.gmra.mxu0 %v2320
    %v3310 = vpop.f32.mrf.mxu0
    %v3311 = vadd.f32 %v3282, %v3310
    %3312 = vdwg.mxu0
    %3313 = vmatpush.xpose.msra.mxu0 0.0
    %3314 = vmatpush.xpose.msra.mxu0 0.0
    %3315 = vmatpush.xpose.msra.mxu0 0.0
    %3316 = vmatpush.xpose.msra.mxu0 0.0
    %3317 = vmatpush.xpose.msra.mxu0 0.0
    %3318 = vmatpush.xpose.msra.mxu0 0.0
    %3319 = vmatpush.xpose.msra.mxu0 0.0
    %3320 = vmatpush.xpose.msra.mxu0 0.0
    %3321 = vmatpush.xpose.msra.mxu0 0.0
    %3322 = vmatpush.xpose.msra.mxu0 0.0
    %3323 = vmatpush.xpose.msra.mxu0 0.0
    %3324 = vmatpush.xpose.msra.mxu0 0.0
    %3325 = vmatpush.xpose.msra.mxu0 %v2577
    %3326 = vmatpush.xpose.msra.mxu0 %v2513
    %3327 = vmatpush.xpose.msra.mxu0 %v2449
    %3328 = vmatpush.xpose.msra.mxu0 %v2385
    %3329 = vmatmul.f32.gmra.mxu0 %v101
    %v3330 = vpop.f32.mrf.mxu0
    %v3331 = vadd.f32 %v3302, %v3330
    %3332 = vmatmul.f32.gmra.mxu0 %v165
    %v3333 = vpop.f32.mrf.mxu0
    %v3334 = vadd.f32 %v3305, %v3333
    %3335 = vmatmul.f32.gmra.mxu0 %v2257
    %v3336 = vpop.f32.mrf.mxu0
    %v3337 = vadd.f32 %v3308, %v3336
    %3338 = vmatmul.f32.gmra.mxu0 %v2321
    %v3339 = vpop.f32.mrf.mxu0
    %v3340 = vadd.f32 %v3311, %v3339
    %3341 = vdwg.mxu0
    %3342 = vmatpush.xpose.msra.mxu0 0.0
    %3343 = vmatpush.xpose.msra.mxu0 0.0
    %3344 = vmatpush.xpose.msra.mxu0 0.0
    %3345 = vmatpush.xpose.msra.mxu0 0.0
    %3346 = vmatpush.xpose.msra.mxu0 0.0
    %3347 = vmatpush.xpose.msra.mxu0 0.0
    %3348 = vmatpush.xpose.msra.mxu0 0.0
    %3349 = vmatpush.xpose.msra.mxu0 0.0
    %3350 = vmatpush.xpose.msra.mxu0 0.0
    %3351 = vmatpush.xpose.msra.mxu0 0.0
    %3352 = vmatpush.xpose.msra.mxu0 0.0
    %3353 = vmatpush.xpose.msra.mxu0 0.0
    %3354 = vmatpush.xpose.msra.mxu0 %v2578
    %3355 = vmatpush.xpose.msra.mxu0 %v2514
    %3356 = vmatpush.xpose.msra.mxu0 %v2450
    %3357 = vmatpush.xpose.msra.mxu0 %v2386
    %3358 = vmatmul.f32.gmra.mxu0 %v102
    %v3359 = vpop.f32.mrf.mxu0
    %v3360 = vadd.f32 %v3331, %v3359
    %3361 = vmatmul.f32.gmra.mxu0 %v166
    %v3362 = vpop.f32.mrf.mxu0
    %v3363 = vadd.f32 %v3334, %v3362
    %3364 = vmatmul.f32.gmra.mxu0 %v2258
    %v3365 = vpop.f32.mrf.mxu0
    %v3366 = vadd.f32 %v3337, %v3365
    %3367 = vmatmul.f32.gmra.mxu0 %v2322
    %v3368 = vpop.f32.mrf.mxu0
    %v3369 = vadd.f32 %v3340, %v3368
    %3370 = vdwg.mxu0
    %3371 = vmatpush.xpose.msra.mxu0 0.0
    %3372 = vmatpush.xpose.msra.mxu0 0.0
    %3373 = vmatpush.xpose.msra.mxu0 0.0
    %3374 = vmatpush.xpose.msra.mxu0 0.0
    %3375 = vmatpush.xpose.msra.mxu0 0.0
    %3376 = vmatpush.xpose.msra.mxu0 0.0
    %3377 = vmatpush.xpose.msra.mxu0 0.0
    %3378 = vmatpush.xpose.msra.mxu0 0.0
    %3379 = vmatpush.xpose.msra.mxu0 0.0
    %3380 = vmatpush.xpose.msra.mxu0 0.0
    %3381 = vmatpush.xpose.msra.mxu0 0.0
    %3382 = vmatpush.xpose.msra.mxu0 0.0
    %3383 = vmatpush.xpose.msra.mxu0 %v2579
    %3384 = vmatpush.xpose.msra.mxu0 %v2515
    %3385 = vmatpush.xpose.msra.mxu0 %v2451
    %3386 = vmatpush.xpose.msra.mxu0 %v2387
    %3387 = vmatmul.f32.gmra.mxu0 %v103
    %v3388 = vpop.f32.mrf.mxu0
    %v3389 = vadd.f32 %v3360, %v3388
    %3390 = vmatmul.f32.gmra.mxu0 %v167
    %v3391 = vpop.f32.mrf.mxu0
    %v3392 = vadd.f32 %v3363, %v3391
    %3393 = vmatmul.f32.gmra.mxu0 %v2259
    %v3394 = vpop.f32.mrf.mxu0
    %v3395 = vadd.f32 %v3366, %v3394
    %3396 = vmatmul.f32.gmra.mxu0 %v2323
    %v3397 = vpop.f32.mrf.mxu0
    %v3398 = vadd.f32 %v3369, %v3397
    %3399 = vdwg.mxu0
    %3400 = vmatpush.xpose.msra.mxu0 0.0
    %3401 = vmatpush.xpose.msra.mxu0 0.0
    %3402 = vmatpush.xpose.msra.mxu0 0.0
    %3403 = vmatpush.xpose.msra.mxu0 0.0
    %3404 = vmatpush.xpose.msra.mxu0 0.0
    %3405 = vmatpush.xpose.msra.mxu0 0.0
    %3406 = vmatpush.xpose.msra.mxu0 0.0
    %3407 = vmatpush.xpose.msra.mxu0 0.0
    %3408 = vmatpush.xpose.msra.mxu0 0.0
    %3409 = vmatpush.xpose.msra.mxu0 0.0
    %3410 = vmatpush.xpose.msra.mxu0 0.0
    %3411 = vmatpush.xpose.msra.mxu0 0.0
    %3412 = vmatpush.xpose.msra.mxu0 %v2580
    %3413 = vmatpush.xpose.msra.mxu0 %v2516
    %3414 = vmatpush.xpose.msra.mxu0 %v2452
    %3415 = vmatpush.xpose.msra.mxu0 %v2388
    %3416 = vmatmul.f32.gmra.mxu0 %v104
    %v3417 = vpop.f32.mrf.mxu0
    %v3418 = vadd.f32 %v3389, %v3417
    %3419 = vmatmul.f32.gmra.mxu0 %v168
    %v3420 = vpop.f32.mrf.mxu0
    %v3421 = vadd.f32 %v3392, %v3420
    %3422 = vmatmul.f32.gmra.mxu0 %v2260
    %v3423 = vpop.f32.mrf.mxu0
    %v3424 = vadd.f32 %v3395, %v3423
    %3425 = vmatmul.f32.gmra.mxu0 %v2324
    %v3426 = vpop.f32.mrf.mxu0
    %v3427 = vadd.f32 %v3398, %v3426
    %3428 = vdwg.mxu0
    %3429 = vmatpush.xpose.msra.mxu0 0.0
    %3430 = vmatpush.xpose.msra.mxu0 0.0
    %3431 = vmatpush.xpose.msra.mxu0 0.0
    %3432 = vmatpush.xpose.msra.mxu0 0.0
    %3433 = vmatpush.xpose.msra.mxu0 0.0
    %3434 = vmatpush.xpose.msra.mxu0 0.0
    %3435 = vmatpush.xpose.msra.mxu0 0.0
    %3436 = vmatpush.xpose.msra.mxu0 0.0
    %3437 = vmatpush.xpose.msra.mxu0 0.0
    %3438 = vmatpush.xpose.msra.mxu0 0.0
    %3439 = vmatpush.xpose.msra.mxu0 0.0
    %3440 = vmatpush.xpose.msra.mxu0 0.0
    %3441 = vmatpush.xpose.msra.mxu0 %v2581
    %3442 = vmatpush.xpose.msra.mxu0 %v2517
    %3443 = vmatpush.xpose.msra.mxu0 %v2453
    %3444 = vmatpush.xpose.msra.mxu0 %v2389
    %3445 = vmatmul.f32.gmra.mxu0 %v105
    %v3446 = vpop.f32.mrf.mxu0
    %v3447 = vadd.f32 %v3418, %v3446
    %3448 = vmatmul.f32.gmra.mxu0 %v169
    %v3449 = vpop.f32.mrf.mxu0
    %v3450 = vadd.f32 %v3421, %v3449
    %3451 = vmatmul.f32.gmra.mxu0 %v2261
    %v3452 = vpop.f32.mrf.mxu0
    %v3453 = vadd.f32 %v3424, %v3452
    %3454 = vmatmul.f32.gmra.mxu0 %v2325
    %v3455 = vpop.f32.mrf.mxu0
    %v3456 = vadd.f32 %v3427, %v3455
    %3457 = vdwg.mxu0
    %3458 = vmatpush.xpose.msra.mxu0 0.0
    %3459 = vmatpush.xpose.msra.mxu0 0.0
    %3460 = vmatpush.xpose.msra.mxu0 0.0
    %3461 = vmatpush.xpose.msra.mxu0 0.0
    %3462 = vmatpush.xpose.msra.mxu0 0.0
    %3463 = vmatpush.xpose.msra.mxu0 0.0
    %3464 = vmatpush.xpose.msra.mxu0 0.0
    %3465 = vmatpush.xpose.msra.mxu0 0.0
    %3466 = vmatpush.xpose.msra.mxu0 0.0
    %3467 = vmatpush.xpose.msra.mxu0 0.0
    %3468 = vmatpush.xpose.msra.mxu0 0.0
    %3469 = vmatpush.xpose.msra.mxu0 0.0
    %3470 = vmatpush.xpose.msra.mxu0 %v2582
    %3471 = vmatpush.xpose.msra.mxu0 %v2518
    %3472 = vmatpush.xpose.msra.mxu0 %v2454
    %3473 = vmatpush.xpose.msra.mxu0 %v2390
    %3474 = vmatmul.f32.gmra.mxu0 %v106
    %v3475 = vpop.f32.mrf.mxu0
    %v3476 = vadd.f32 %v3447, %v3475
    %3477 = vmatmul.f32.gmra.mxu0 %v170
    %v3478 = vpop.f32.mrf.mxu0
    %v3479 = vadd.f32 %v3450, %v3478
    %3480 = vmatmul.f32.gmra.mxu0 %v2262
    %v3481 = vpop.f32.mrf.mxu0
    %v3482 = vadd.f32 %v3453, %v3481
    %3483 = vmatmul.f32.gmra.mxu0 %v2326
    %v3484 = vpop.f32.mrf.mxu0
    %v3485 = vadd.f32 %v3456, %v3484
    %3486 = vdwg.mxu0
    %3487 = vmatpush.xpose.msra.mxu0 0.0
    %3488 = vmatpush.xpose.msra.mxu0 0.0
    %3489 = vmatpush.xpose.msra.mxu0 0.0
    %3490 = vmatpush.xpose.msra.mxu0 0.0
    %3491 = vmatpush.xpose.msra.mxu0 0.0
    %3492 = vmatpush.xpose.msra.mxu0 0.0
    %3493 = vmatpush.xpose.msra.mxu0 0.0
    %3494 = vmatpush.xpose.msra.mxu0 0.0
    %3495 = vmatpush.xpose.msra.mxu0 0.0
    %3496 = vmatpush.xpose.msra.mxu0 0.0
    %3497 = vmatpush.xpose.msra.mxu0 0.0
    %3498 = vmatpush.xpose.msra.mxu0 0.0
    %3499 = vmatpush.xpose.msra.mxu0 %v2583
    %3500 = vmatpush.xpose.msra.mxu0 %v2519
    %3501 = vmatpush.xpose.msra.mxu0 %v2455
    %3502 = vmatpush.xpose.msra.mxu0 %v2391
    %3503 = vmatmul.f32.gmra.mxu0 %v107
    %v3504 = vpop.f32.mrf.mxu0
    %v3505 = vadd.f32 %v3476, %v3504
    %3506 = vmatmul.f32.gmra.mxu0 %v171
    %v3507 = vpop.f32.mrf.mxu0
    %v3508 = vadd.f32 %v3479, %v3507
    %3509 = vmatmul.f32.gmra.mxu0 %v2263
    %v3510 = vpop.f32.mrf.mxu0
    %v3511 = vadd.f32 %v3482, %v3510
    %3512 = vmatmul.f32.gmra.mxu0 %v2327
    %v3513 = vpop.f32.mrf.mxu0
    %v3514 = vadd.f32 %v3485, %v3513
    %3515 = vdwg.mxu0
    %3516 = vmatpush.xpose.msra.mxu0 0.0
    %3517 = vmatpush.xpose.msra.mxu0 0.0
    %3518 = vmatpush.xpose.msra.mxu0 0.0
    %3519 = vmatpush.xpose.msra.mxu0 0.0
    %3520 = vmatpush.xpose.msra.mxu0 0.0
    %3521 = vmatpush.xpose.msra.mxu0 0.0
    %3522 = vmatpush.xpose.msra.mxu0 0.0
    %3523 = vmatpush.xpose.msra.mxu0 0.0
    %3524 = vmatpush.xpose.msra.mxu0 0.0
    %3525 = vmatpush.xpose.msra.mxu0 0.0
    %3526 = vmatpush.xpose.msra.mxu0 0.0
    %3527 = vmatpush.xpose.msra.mxu0 0.0
    %3528 = vmatpush.xpose.msra.mxu0 %v2584
    %3529 = vmatpush.xpose.msra.mxu0 %v2520
    %3530 = vmatpush.xpose.msra.mxu0 %v2456
    %3531 = vmatpush.xpose.msra.mxu0 %v2392
    %3532 = vmatmul.f32.gmra.mxu0 %v108
    %v3533 = vpop.f32.mrf.mxu0
    %v3534 = vadd.f32 %v3505, %v3533
    %3535 = vmatmul.f32.gmra.mxu0 %v172
    %v3536 = vpop.f32.mrf.mxu0
    %v3537 = vadd.f32 %v3508, %v3536
    %3538 = vmatmul.f32.gmra.mxu0 %v2264
    %v3539 = vpop.f32.mrf.mxu0
    %v3540 = vadd.f32 %v3511, %v3539
    %3541 = vmatmul.f32.gmra.mxu0 %v2328
    %v3542 = vpop.f32.mrf.mxu0
    %v3543 = vadd.f32 %v3514, %v3542
    %3544 = vdwg.mxu0
    %3545 = vmatpush.xpose.msra.mxu0 0.0
    %3546 = vmatpush.xpose.msra.mxu0 0.0
    %3547 = vmatpush.xpose.msra.mxu0 0.0
    %3548 = vmatpush.xpose.msra.mxu0 0.0
    %3549 = vmatpush.xpose.msra.mxu0 0.0
    %3550 = vmatpush.xpose.msra.mxu0 0.0
    %3551 = vmatpush.xpose.msra.mxu0 0.0
    %3552 = vmatpush.xpose.msra.mxu0 0.0
    %3553 = vmatpush.xpose.msra.mxu0 0.0
    %3554 = vmatpush.xpose.msra.mxu0 0.0
    %3555 = vmatpush.xpose.msra.mxu0 0.0
    %3556 = vmatpush.xpose.msra.mxu0 0.0
    %3557 = vmatpush.xpose.msra.mxu0 %v2585
    %3558 = vmatpush.xpose.msra.mxu0 %v2521
    %3559 = vmatpush.xpose.msra.mxu0 %v2457
    %3560 = vmatpush.xpose.msra.mxu0 %v2393
    %3561 = vmatmul.f32.gmra.mxu0 %v109
    %v3562 = vpop.f32.mrf.mxu0
    %v3563 = vadd.f32 %v3534, %v3562
    %3564 = vmatmul.f32.gmra.mxu0 %v173
    %v3565 = vpop.f32.mrf.mxu0
    %v3566 = vadd.f32 %v3537, %v3565
    %3567 = vmatmul.f32.gmra.mxu0 %v2265
    %v3568 = vpop.f32.mrf.mxu0
    %v3569 = vadd.f32 %v3540, %v3568
    %3570 = vmatmul.f32.gmra.mxu0 %v2329
    %v3571 = vpop.f32.mrf.mxu0
    %v3572 = vadd.f32 %v3543, %v3571
    %3573 = vdwg.mxu0
    %3574 = vmatpush.xpose.msra.mxu0 0.0
    %3575 = vmatpush.xpose.msra.mxu0 0.0
    %3576 = vmatpush.xpose.msra.mxu0 0.0
    %3577 = vmatpush.xpose.msra.mxu0 0.0
    %3578 = vmatpush.xpose.msra.mxu0 0.0
    %3579 = vmatpush.xpose.msra.mxu0 0.0
    %3580 = vmatpush.xpose.msra.mxu0 0.0
    %3581 = vmatpush.xpose.msra.mxu0 0.0
    %3582 = vmatpush.xpose.msra.mxu0 0.0
    %3583 = vmatpush.xpose.msra.mxu0 0.0
    %3584 = vmatpush.xpose.msra.mxu0 0.0
    %3585 = vmatpush.xpose.msra.mxu0 0.0
    %3586 = vmatpush.xpose.msra.mxu0 %v2586
    %3587 = vmatpush.xpose.msra.mxu0 %v2522
    %3588 = vmatpush.xpose.msra.mxu0 %v2458
    %3589 = vmatpush.xpose.msra.mxu0 %v2394
    %3590 = vmatmul.f32.gmra.mxu0 %v110
    %v3591 = vpop.f32.mrf.mxu0
    %v3592 = vadd.f32 %v3563, %v3591
    %3593 = vmatmul.f32.gmra.mxu0 %v174
    %v3594 = vpop.f32.mrf.mxu0
    %v3595 = vadd.f32 %v3566, %v3594
    %3596 = vmatmul.f32.gmra.mxu0 %v2266
    %v3597 = vpop.f32.mrf.mxu0
    %v3598 = vadd.f32 %v3569, %v3597
    %3599 = vmatmul.f32.gmra.mxu0 %v2330
    %v3600 = vpop.f32.mrf.mxu0
    %v3601 = vadd.f32 %v3572, %v3600
    %3602 = vdwg.mxu0
    %3603 = vmatpush.xpose.msra.mxu0 0.0
    %3604 = vmatpush.xpose.msra.mxu0 0.0
    %3605 = vmatpush.xpose.msra.mxu0 0.0
    %3606 = vmatpush.xpose.msra.mxu0 0.0
    %3607 = vmatpush.xpose.msra.mxu0 0.0
    %3608 = vmatpush.xpose.msra.mxu0 0.0
    %3609 = vmatpush.xpose.msra.mxu0 0.0
    %3610 = vmatpush.xpose.msra.mxu0 0.0
    %3611 = vmatpush.xpose.msra.mxu0 0.0
    %3612 = vmatpush.xpose.msra.mxu0 0.0
    %3613 = vmatpush.xpose.msra.mxu0 0.0
    %3614 = vmatpush.xpose.msra.mxu0 0.0
    %3615 = vmatpush.xpose.msra.mxu0 %v2587
    %3616 = vmatpush.xpose.msra.mxu0 %v2523
    %3617 = vmatpush.xpose.msra.mxu0 %v2459
    %3618 = vmatpush.xpose.msra.mxu0 %v2395
    %3619 = vmatmul.f32.gmra.mxu0 %v111
    %v3620 = vpop.f32.mrf.mxu0
    %v3621 = vadd.f32 %v3592, %v3620
    %3622 = vmatmul.f32.gmra.mxu0 %v175
    %v3623 = vpop.f32.mrf.mxu0
    %v3624 = vadd.f32 %v3595, %v3623
    %3625 = vmatmul.f32.gmra.mxu0 %v2267
    %v3626 = vpop.f32.mrf.mxu0
    %v3627 = vadd.f32 %v3598, %v3626
    %3628 = vmatmul.f32.gmra.mxu0 %v2331
    %v3629 = vpop.f32.mrf.mxu0
    %v3630 = vadd.f32 %v3601, %v3629
    %3631 = vdwg.mxu0
    %3632 = vmatpush.xpose.msra.mxu0 0.0
    %3633 = vmatpush.xpose.msra.mxu0 0.0
    %3634 = vmatpush.xpose.msra.mxu0 0.0
    %3635 = vmatpush.xpose.msra.mxu0 0.0
    %3636 = vmatpush.xpose.msra.mxu0 0.0
    %3637 = vmatpush.xpose.msra.mxu0 0.0
    %3638 = vmatpush.xpose.msra.mxu0 0.0
    %3639 = vmatpush.xpose.msra.mxu0 0.0
    %3640 = vmatpush.xpose.msra.mxu0 0.0
    %3641 = vmatpush.xpose.msra.mxu0 0.0
    %3642 = vmatpush.xpose.msra.mxu0 0.0
    %3643 = vmatpush.xpose.msra.mxu0 0.0
    %3644 = vmatpush.xpose.msra.mxu0 %v2588
    %3645 = vmatpush.xpose.msra.mxu0 %v2524
    %3646 = vmatpush.xpose.msra.mxu0 %v2460
    %3647 = vmatpush.xpose.msra.mxu0 %v2396
    %3648 = vmatmul.f32.gmra.mxu0 %v112
    %v3649 = vpop.f32.mrf.mxu0
    %v3650 = vadd.f32 %v3621, %v3649
    %3651 = vmatmul.f32.gmra.mxu0 %v176
    %v3652 = vpop.f32.mrf.mxu0
    %v3653 = vadd.f32 %v3624, %v3652
    %3654 = vmatmul.f32.gmra.mxu0 %v2268
    %v3655 = vpop.f32.mrf.mxu0
    %v3656 = vadd.f32 %v3627, %v3655
    %3657 = vmatmul.f32.gmra.mxu0 %v2332
    %v3658 = vpop.f32.mrf.mxu0
    %v3659 = vadd.f32 %v3630, %v3658
    %3660 = vdwg.mxu0
    %3661 = vmatpush.xpose.msra.mxu0 0.0
    %3662 = vmatpush.xpose.msra.mxu0 0.0
    %3663 = vmatpush.xpose.msra.mxu0 0.0
    %3664 = vmatpush.xpose.msra.mxu0 0.0
    %3665 = vmatpush.xpose.msra.mxu0 0.0
    %3666 = vmatpush.xpose.msra.mxu0 0.0
    %3667 = vmatpush.xpose.msra.mxu0 0.0
    %3668 = vmatpush.xpose.msra.mxu0 0.0
    %3669 = vmatpush.xpose.msra.mxu0 0.0
    %3670 = vmatpush.xpose.msra.mxu0 0.0
    %3671 = vmatpush.xpose.msra.mxu0 0.0
    %3672 = vmatpush.xpose.msra.mxu0 0.0
    %3673 = vmatpush.xpose.msra.mxu0 %v2589
    %3674 = vmatpush.xpose.msra.mxu0 %v2525
    %3675 = vmatpush.xpose.msra.mxu0 %v2461
    %3676 = vmatpush.xpose.msra.mxu0 %v2397
    %3677 = vmatmul.f32.gmra.mxu0 %v113
    %v3678 = vpop.f32.mrf.mxu0
    %v3679 = vadd.f32 %v3650, %v3678
    %3680 = vmatmul.f32.gmra.mxu0 %v177
    %v3681 = vpop.f32.mrf.mxu0
    %v3682 = vadd.f32 %v3653, %v3681
    %3683 = vmatmul.f32.gmra.mxu0 %v2269
    %v3684 = vpop.f32.mrf.mxu0
    %v3685 = vadd.f32 %v3656, %v3684
    %3686 = vmatmul.f32.gmra.mxu0 %v2333
    %v3687 = vpop.f32.mrf.mxu0
    %v3688 = vadd.f32 %v3659, %v3687
    %3689 = vdwg.mxu0
    %3690 = vmatpush.xpose.msra.mxu0 0.0
    %3691 = vmatpush.xpose.msra.mxu0 0.0
    %3692 = vmatpush.xpose.msra.mxu0 0.0
    %3693 = vmatpush.xpose.msra.mxu0 0.0
    %3694 = vmatpush.xpose.msra.mxu0 0.0
    %3695 = vmatpush.xpose.msra.mxu0 0.0
    %3696 = vmatpush.xpose.msra.mxu0 0.0
    %3697 = vmatpush.xpose.msra.mxu0 0.0
    %3698 = vmatpush.xpose.msra.mxu0 0.0
    %3699 = vmatpush.xpose.msra.mxu0 0.0
    %3700 = vmatpush.xpose.msra.mxu0 0.0
    %3701 = vmatpush.xpose.msra.mxu0 0.0
    %3702 = vmatpush.xpose.msra.mxu0 %v2590
    %3703 = vmatpush.xpose.msra.mxu0 %v2526
    %3704 = vmatpush.xpose.msra.mxu0 %v2462
    %3705 = vmatpush.xpose.msra.mxu0 %v2398
    %3706 = vmatmul.f32.gmra.mxu0 %v114
    %v3707 = vpop.f32.mrf.mxu0
    %v3708 = vadd.f32 %v3679, %v3707
    %3709 = vmatmul.f32.gmra.mxu0 %v178
    %v3710 = vpop.f32.mrf.mxu0
    %v3711 = vadd.f32 %v3682, %v3710
    %3712 = vmatmul.f32.gmra.mxu0 %v2270
    %v3713 = vpop.f32.mrf.mxu0
    %v3714 = vadd.f32 %v3685, %v3713
    %3715 = vmatmul.f32.gmra.mxu0 %v2334
    %v3716 = vpop.f32.mrf.mxu0
    %v3717 = vadd.f32 %v3688, %v3716
    %3718 = vdwg.mxu0
    %3719 = vmatpush.xpose.msra.mxu0 0.0
    %3720 = vmatpush.xpose.msra.mxu0 0.0
    %3721 = vmatpush.xpose.msra.mxu0 0.0
    %3722 = vmatpush.xpose.msra.mxu0 0.0
    %3723 = vmatpush.xpose.msra.mxu0 0.0
    %3724 = vmatpush.xpose.msra.mxu0 0.0
    %3725 = vmatpush.xpose.msra.mxu0 0.0
    %3726 = vmatpush.xpose.msra.mxu0 0.0
    %3727 = vmatpush.xpose.msra.mxu0 0.0
    %3728 = vmatpush.xpose.msra.mxu0 0.0
    %3729 = vmatpush.xpose.msra.mxu0 0.0
    %3730 = vmatpush.xpose.msra.mxu0 0.0
    %3731 = vmatpush.xpose.msra.mxu0 %v2591
    %3732 = vmatpush.xpose.msra.mxu0 %v2527
    %3733 = vmatpush.xpose.msra.mxu0 %v2463
    %3734 = vmatpush.xpose.msra.mxu0 %v2399
    %3735 = vmatmul.f32.gmra.mxu0 %v115
    %v3736 = vpop.f32.mrf.mxu0
    %v3737 = vadd.f32 %v3708, %v3736
    %3738 = vmatmul.f32.gmra.mxu0 %v179
    %v3739 = vpop.f32.mrf.mxu0
    %v3740 = vadd.f32 %v3711, %v3739
    %3741 = vmatmul.f32.gmra.mxu0 %v2271
    %v3742 = vpop.f32.mrf.mxu0
    %v3743 = vadd.f32 %v3714, %v3742
    %3744 = vmatmul.f32.gmra.mxu0 %v2335
    %v3745 = vpop.f32.mrf.mxu0
    %v3746 = vadd.f32 %v3717, %v3745
    %3747 = vdwg.mxu0
    %3748 = vmatpush.xpose.msra.mxu0 0.0
    %3749 = vmatpush.xpose.msra.mxu0 0.0
    %3750 = vmatpush.xpose.msra.mxu0 0.0
    %3751 = vmatpush.xpose.msra.mxu0 0.0
    %3752 = vmatpush.xpose.msra.mxu0 0.0
    %3753 = vmatpush.xpose.msra.mxu0 0.0
    %3754 = vmatpush.xpose.msra.mxu0 0.0
    %3755 = vmatpush.xpose.msra.mxu0 0.0
    %3756 = vmatpush.xpose.msra.mxu0 0.0
    %3757 = vmatpush.xpose.msra.mxu0 0.0
    %3758 = vmatpush.xpose.msra.mxu0 0.0
    %3759 = vmatpush.xpose.msra.mxu0 0.0
    %3760 = vmatpush.xpose.msra.mxu0 %v2592
    %3761 = vmatpush.xpose.msra.mxu0 %v2528
    %3762 = vmatpush.xpose.msra.mxu0 %v2464
    %3763 = vmatpush.xpose.msra.mxu0 %v2400
    %3764 = vmatmul.f32.gmra.mxu0 %v116
    %v3765 = vpop.f32.mrf.mxu0
    %v3766 = vadd.f32 %v3737, %v3765
    %3767 = vmatmul.f32.gmra.mxu0 %v180
    %v3768 = vpop.f32.mrf.mxu0
    %v3769 = vadd.f32 %v3740, %v3768
    %3770 = vmatmul.f32.gmra.mxu0 %v2272
    %v3771 = vpop.f32.mrf.mxu0
    %v3772 = vadd.f32 %v3743, %v3771
    %3773 = vmatmul.f32.gmra.mxu0 %v2336
    %v3774 = vpop.f32.mrf.mxu0
    %v3775 = vadd.f32 %v3746, %v3774
    %3776 = vdwg.mxu0
    %3777 = vmatpush.xpose.msra.mxu0 0.0
    %3778 = vmatpush.xpose.msra.mxu0 0.0
    %3779 = vmatpush.xpose.msra.mxu0 0.0
    %3780 = vmatpush.xpose.msra.mxu0 0.0
    %3781 = vmatpush.xpose.msra.mxu0 0.0
    %3782 = vmatpush.xpose.msra.mxu0 0.0
    %3783 = vmatpush.xpose.msra.mxu0 0.0
    %3784 = vmatpush.xpose.msra.mxu0 0.0
    %3785 = vmatpush.xpose.msra.mxu0 0.0
    %3786 = vmatpush.xpose.msra.mxu0 0.0
    %3787 = vmatpush.xpose.msra.mxu0 0.0
    %3788 = vmatpush.xpose.msra.mxu0 0.0
    %3789 = vmatpush.xpose.msra.mxu0 %v2593
    %3790 = vmatpush.xpose.msra.mxu0 %v2529
    %3791 = vmatpush.xpose.msra.mxu0 %v2465
    %3792 = vmatpush.xpose.msra.mxu0 %v2401
    %3793 = vmatmul.f32.gmra.mxu0 %v117
    %v3794 = vpop.f32.mrf.mxu0
    %v3795 = vadd.f32 %v3766, %v3794
    %3796 = vmatmul.f32.gmra.mxu0 %v181
    %v3797 = vpop.f32.mrf.mxu0
    %v3798 = vadd.f32 %v3769, %v3797
    %3799 = vmatmul.f32.gmra.mxu0 %v2273
    %v3800 = vpop.f32.mrf.mxu0
    %v3801 = vadd.f32 %v3772, %v3800
    %3802 = vmatmul.f32.gmra.mxu0 %v2337
    %v3803 = vpop.f32.mrf.mxu0
    %v3804 = vadd.f32 %v3775, %v3803
    %3805 = vdwg.mxu0
    %3806 = vmatpush.xpose.msra.mxu0 0.0
    %3807 = vmatpush.xpose.msra.mxu0 0.0
    %3808 = vmatpush.xpose.msra.mxu0 0.0
    %3809 = vmatpush.xpose.msra.mxu0 0.0
    %3810 = vmatpush.xpose.msra.mxu0 0.0
    %3811 = vmatpush.xpose.msra.mxu0 0.0
    %3812 = vmatpush.xpose.msra.mxu0 0.0
    %3813 = vmatpush.xpose.msra.mxu0 0.0
    %3814 = vmatpush.xpose.msra.mxu0 0.0
    %3815 = vmatpush.xpose.msra.mxu0 0.0
    %3816 = vmatpush.xpose.msra.mxu0 0.0
    %3817 = vmatpush.xpose.msra.mxu0 0.0
    %3818 = vmatpush.xpose.msra.mxu0 %v2594
    %3819 = vmatpush.xpose.msra.mxu0 %v2530
    %3820 = vmatpush.xpose.msra.mxu0 %v2466
    %3821 = vmatpush.xpose.msra.mxu0 %v2402
    %3822 = vmatmul.f32.gmra.mxu0 %v118
    %v3823 = vpop.f32.mrf.mxu0
    %v3824 = vadd.f32 %v3795, %v3823
    %3825 = vmatmul.f32.gmra.mxu0 %v182
    %v3826 = vpop.f32.mrf.mxu0
    %v3827 = vadd.f32 %v3798, %v3826
    %3828 = vmatmul.f32.gmra.mxu0 %v2274
    %v3829 = vpop.f32.mrf.mxu0
    %v3830 = vadd.f32 %v3801, %v3829
    %3831 = vmatmul.f32.gmra.mxu0 %v2338
    %v3832 = vpop.f32.mrf.mxu0
    %v3833 = vadd.f32 %v3804, %v3832
    %3834 = vdwg.mxu0
    %3835 = vmatpush.xpose.msra.mxu0 0.0
    %3836 = vmatpush.xpose.msra.mxu0 0.0
    %3837 = vmatpush.xpose.msra.mxu0 0.0
    %3838 = vmatpush.xpose.msra.mxu0 0.0
    %3839 = vmatpush.xpose.msra.mxu0 0.0
    %3840 = vmatpush.xpose.msra.mxu0 0.0
    %3841 = vmatpush.xpose.msra.mxu0 0.0
    %3842 = vmatpush.xpose.msra.mxu0 0.0
    %3843 = vmatpush.xpose.msra.mxu0 0.0
    %3844 = vmatpush.xpose.msra.mxu0 0.0
    %3845 = vmatpush.xpose.msra.mxu0 0.0
    %3846 = vmatpush.xpose.msra.mxu0 0.0
    %3847 = vmatpush.xpose.msra.mxu0 %v2595
    %3848 = vmatpush.xpose.msra.mxu0 %v2531
    %3849 = vmatpush.xpose.msra.mxu0 %v2467
    %3850 = vmatpush.xpose.msra.mxu0 %v2403
    %3851 = vmatmul.f32.gmra.mxu0 %v119
    %v3852 = vpop.f32.mrf.mxu0
    %v3853 = vadd.f32 %v3824, %v3852
    %3854 = vmatmul.f32.gmra.mxu0 %v183
    %v3855 = vpop.f32.mrf.mxu0
    %v3856 = vadd.f32 %v3827, %v3855
    %3857 = vmatmul.f32.gmra.mxu0 %v2275
    %v3858 = vpop.f32.mrf.mxu0
    %v3859 = vadd.f32 %v3830, %v3858
    %3860 = vmatmul.f32.gmra.mxu0 %v2339
    %v3861 = vpop.f32.mrf.mxu0
    %v3862 = vadd.f32 %v3833, %v3861
    %3863 = vdwg.mxu0
    %3864 = vmatpush.xpose.msra.mxu0 0.0
    %3865 = vmatpush.xpose.msra.mxu0 0.0
    %3866 = vmatpush.xpose.msra.mxu0 0.0
    %3867 = vmatpush.xpose.msra.mxu0 0.0
    %3868 = vmatpush.xpose.msra.mxu0 0.0
    %3869 = vmatpush.xpose.msra.mxu0 0.0
    %3870 = vmatpush.xpose.msra.mxu0 0.0
    %3871 = vmatpush.xpose.msra.mxu0 0.0
    %3872 = vmatpush.xpose.msra.mxu0 0.0
    %3873 = vmatpush.xpose.msra.mxu0 0.0
    %3874 = vmatpush.xpose.msra.mxu0 0.0
    %3875 = vmatpush.xpose.msra.mxu0 0.0
    %3876 = vmatpush.xpose.msra.mxu0 %v2596
    %3877 = vmatpush.xpose.msra.mxu0 %v2532
    %3878 = vmatpush.xpose.msra.mxu0 %v2468
    %3879 = vmatpush.xpose.msra.mxu0 %v2404
    %3880 = vmatmul.f32.gmra.mxu0 %v120
    %v3881 = vpop.f32.mrf.mxu0
    %v3882 = vadd.f32 %v3853, %v3881
    %3883 = vmatmul.f32.gmra.mxu0 %v184
    %v3884 = vpop.f32.mrf.mxu0
    %v3885 = vadd.f32 %v3856, %v3884
    %3886 = vmatmul.f32.gmra.mxu0 %v2276
    %v3887 = vpop.f32.mrf.mxu0
    %v3888 = vadd.f32 %v3859, %v3887
    %3889 = vmatmul.f32.gmra.mxu0 %v2340
    %v3890 = vpop.f32.mrf.mxu0
    %v3891 = vadd.f32 %v3862, %v3890
    %3892 = vdwg.mxu0
    %3893 = vmatpush.xpose.msra.mxu0 0.0
    %3894 = vmatpush.xpose.msra.mxu0 0.0
    %3895 = vmatpush.xpose.msra.mxu0 0.0
    %3896 = vmatpush.xpose.msra.mxu0 0.0
    %3897 = vmatpush.xpose.msra.mxu0 0.0
    %3898 = vmatpush.xpose.msra.mxu0 0.0
    %3899 = vmatpush.xpose.msra.mxu0 0.0
    %3900 = vmatpush.xpose.msra.mxu0 0.0
    %3901 = vmatpush.xpose.msra.mxu0 0.0
    %3902 = vmatpush.xpose.msra.mxu0 0.0
    %3903 = vmatpush.xpose.msra.mxu0 0.0
    %3904 = vmatpush.xpose.msra.mxu0 0.0
    %3905 = vmatpush.xpose.msra.mxu0 %v2597
    %3906 = vmatpush.xpose.msra.mxu0 %v2533
    %3907 = vmatpush.xpose.msra.mxu0 %v2469
    %3908 = vmatpush.xpose.msra.mxu0 %v2405
    %3909 = vmatmul.f32.gmra.mxu0 %v121
    %v3910 = vpop.f32.mrf.mxu0
    %v3911 = vadd.f32 %v3882, %v3910
    %3912 = vmatmul.f32.gmra.mxu0 %v185
    %v3913 = vpop.f32.mrf.mxu0
    %v3914 = vadd.f32 %v3885, %v3913
    %3915 = vmatmul.f32.gmra.mxu0 %v2277
    %v3916 = vpop.f32.mrf.mxu0
    %v3917 = vadd.f32 %v3888, %v3916
    %3918 = vmatmul.f32.gmra.mxu0 %v2341
    %v3919 = vpop.f32.mrf.mxu0
    %v3920 = vadd.f32 %v3891, %v3919
    %3921 = vdwg.mxu0
    %3922 = vmatpush.xpose.msra.mxu0 0.0
    %3923 = vmatpush.xpose.msra.mxu0 0.0
    %3924 = vmatpush.xpose.msra.mxu0 0.0
    %3925 = vmatpush.xpose.msra.mxu0 0.0
    %3926 = vmatpush.xpose.msra.mxu0 0.0
    %3927 = vmatpush.xpose.msra.mxu0 0.0
    %3928 = vmatpush.xpose.msra.mxu0 0.0
    %3929 = vmatpush.xpose.msra.mxu0 0.0
    %3930 = vmatpush.xpose.msra.mxu0 0.0
    %3931 = vmatpush.xpose.msra.mxu0 0.0
    %3932 = vmatpush.xpose.msra.mxu0 0.0
    %3933 = vmatpush.xpose.msra.mxu0 0.0
    %3934 = vmatpush.xpose.msra.mxu0 %v2598
    %3935 = vmatpush.xpose.msra.mxu0 %v2534
    %3936 = vmatpush.xpose.msra.mxu0 %v2470
    %3937 = vmatpush.xpose.msra.mxu0 %v2406
    %3938 = vmatmul.f32.gmra.mxu0 %v122
    %v3939 = vpop.f32.mrf.mxu0
    %v3940 = vadd.f32 %v3911, %v3939
    %3941 = vmatmul.f32.gmra.mxu0 %v186
    %v3942 = vpop.f32.mrf.mxu0
    %v3943 = vadd.f32 %v3914, %v3942
    %3944 = vmatmul.f32.gmra.mxu0 %v2278
    %v3945 = vpop.f32.mrf.mxu0
    %v3946 = vadd.f32 %v3917, %v3945
    %3947 = vmatmul.f32.gmra.mxu0 %v2342
    %v3948 = vpop.f32.mrf.mxu0
    %v3949 = vadd.f32 %v3920, %v3948
    %3950 = vdwg.mxu0
    %3951 = vmatpush.xpose.msra.mxu0 0.0
    %3952 = vmatpush.xpose.msra.mxu0 0.0
    %3953 = vmatpush.xpose.msra.mxu0 0.0
    %3954 = vmatpush.xpose.msra.mxu0 0.0
    %3955 = vmatpush.xpose.msra.mxu0 0.0
    %3956 = vmatpush.xpose.msra.mxu0 0.0
    %3957 = vmatpush.xpose.msra.mxu0 0.0
    %3958 = vmatpush.xpose.msra.mxu0 0.0
    %3959 = vmatpush.xpose.msra.mxu0 0.0
    %3960 = vmatpush.xpose.msra.mxu0 0.0
    %3961 = vmatpush.xpose.msra.mxu0 0.0
    %3962 = vmatpush.xpose.msra.mxu0 0.0
    %3963 = vmatpush.xpose.msra.mxu0 %v2599
    %3964 = vmatpush.xpose.msra.mxu0 %v2535
    %3965 = vmatpush.xpose.msra.mxu0 %v2471
    %3966 = vmatpush.xpose.msra.mxu0 %v2407
    %3967 = vmatmul.f32.gmra.mxu0 %v123
    %v3968 = vpop.f32.mrf.mxu0
    %v3969 = vadd.f32 %v3940, %v3968
    %3970 = vmatmul.f32.gmra.mxu0 %v187
    %v3971 = vpop.f32.mrf.mxu0
    %v3972 = vadd.f32 %v3943, %v3971
    %3973 = vmatmul.f32.gmra.mxu0 %v2279
    %v3974 = vpop.f32.mrf.mxu0
    %v3975 = vadd.f32 %v3946, %v3974
    %3976 = vmatmul.f32.gmra.mxu0 %v2343
    %v3977 = vpop.f32.mrf.mxu0
    %v3978 = vadd.f32 %v3949, %v3977
    %3979 = vdwg.mxu0
    %3980 = vmatpush.xpose.msra.mxu0 0.0
    %3981 = vmatpush.xpose.msra.mxu0 0.0
    %3982 = vmatpush.xpose.msra.mxu0 0.0
    %3983 = vmatpush.xpose.msra.mxu0 0.0
    %3984 = vmatpush.xpose.msra.mxu0 0.0
    %3985 = vmatpush.xpose.msra.mxu0 0.0
    %3986 = vmatpush.xpose.msra.mxu0 0.0
    %3987 = vmatpush.xpose.msra.mxu0 0.0
    %3988 = vmatpush.xpose.msra.mxu0 0.0
    %3989 = vmatpush.xpose.msra.mxu0 0.0
    %3990 = vmatpush.xpose.msra.mxu0 0.0
    %3991 = vmatpush.xpose.msra.mxu0 0.0
    %3992 = vmatpush.xpose.msra.mxu0 %v2600
    %3993 = vmatpush.xpose.msra.mxu0 %v2536
    %3994 = vmatpush.xpose.msra.mxu0 %v2472
    %3995 = vmatpush.xpose.msra.mxu0 %v2408
    %3996 = vmatmul.f32.gmra.mxu0 %v124
    %v3997 = vpop.f32.mrf.mxu0
    %v3998 = vadd.f32 %v3969, %v3997
    %3999 = vmatmul.f32.gmra.mxu0 %v188
    %v4000 = vpop.f32.mrf.mxu0
    %v4001 = vadd.f32 %v3972, %v4000
    %4002 = vmatmul.f32.gmra.mxu0 %v2280
    %v4003 = vpop.f32.mrf.mxu0
    %v4004 = vadd.f32 %v3975, %v4003
    %4005 = vmatmul.f32.gmra.mxu0 %v2344
    %v4006 = vpop.f32.mrf.mxu0
    %v4007 = vadd.f32 %v3978, %v4006
    %4008 = vdwg.mxu0
    %4009 = vmatpush.xpose.msra.mxu0 0.0
    %4010 = vmatpush.xpose.msra.mxu0 0.0
    %4011 = vmatpush.xpose.msra.mxu0 0.0
    %4012 = vmatpush.xpose.msra.mxu0 0.0
    %4013 = vmatpush.xpose.msra.mxu0 0.0
    %4014 = vmatpush.xpose.msra.mxu0 0.0
    %4015 = vmatpush.xpose.msra.mxu0 0.0
    %4016 = vmatpush.xpose.msra.mxu0 0.0
    %4017 = vmatpush.xpose.msra.mxu0 0.0
    %4018 = vmatpush.xpose.msra.mxu0 0.0
    %4019 = vmatpush.xpose.msra.mxu0 0.0
    %4020 = vmatpush.xpose.msra.mxu0 0.0
    %4021 = vmatpush.xpose.msra.mxu0 %v2601
    %4022 = vmatpush.xpose.msra.mxu0 %v2537
    %4023 = vmatpush.xpose.msra.mxu0 %v2473
    %4024 = vmatpush.xpose.msra.mxu0 %v2409
    %4025 = vmatmul.f32.gmra.mxu0 %v125
    %v4026 = vpop.f32.mrf.mxu0
    %v4027 = vadd.f32 %v3998, %v4026
    %4028 = vmatmul.f32.gmra.mxu0 %v189
    %v4029 = vpop.f32.mrf.mxu0
    %v4030 = vadd.f32 %v4001, %v4029
    %4031 = vmatmul.f32.gmra.mxu0 %v2281
    %v4032 = vpop.f32.mrf.mxu0
    %v4033 = vadd.f32 %v4004, %v4032
    %4034 = vmatmul.f32.gmra.mxu0 %v2345
    %v4035 = vpop.f32.mrf.mxu0
    %v4036 = vadd.f32 %v4007, %v4035
    %4037 = vdwg.mxu0
    %4038 = vmatpush.xpose.msra.mxu0 0.0
    %4039 = vmatpush.xpose.msra.mxu0 0.0
    %4040 = vmatpush.xpose.msra.mxu0 0.0
    %4041 = vmatpush.xpose.msra.mxu0 0.0
    %4042 = vmatpush.xpose.msra.mxu0 0.0
    %4043 = vmatpush.xpose.msra.mxu0 0.0
    %4044 = vmatpush.xpose.msra.mxu0 0.0
    %4045 = vmatpush.xpose.msra.mxu0 0.0
    %4046 = vmatpush.xpose.msra.mxu0 0.0
    %4047 = vmatpush.xpose.msra.mxu0 0.0
    %4048 = vmatpush.xpose.msra.mxu0 0.0
    %4049 = vmatpush.xpose.msra.mxu0 0.0
    %4050 = vmatpush.xpose.msra.mxu0 %v2602
    %4051 = vmatpush.xpose.msra.mxu0 %v2538
    %4052 = vmatpush.xpose.msra.mxu0 %v2474
    %4053 = vmatpush.xpose.msra.mxu0 %v2410
    %4054 = vmatmul.f32.gmra.mxu0 %v126
    %v4055 = vpop.f32.mrf.mxu0
    %v4056 = vadd.f32 %v4027, %v4055
    %4057 = vmatmul.f32.gmra.mxu0 %v190
    %v4058 = vpop.f32.mrf.mxu0
    %v4059 = vadd.f32 %v4030, %v4058
    %4060 = vmatmul.f32.gmra.mxu0 %v2282
    %v4061 = vpop.f32.mrf.mxu0
    %v4062 = vadd.f32 %v4033, %v4061
    %4063 = vmatmul.f32.gmra.mxu0 %v2346
    %v4064 = vpop.f32.mrf.mxu0
    %v4065 = vadd.f32 %v4036, %v4064
    %4066 = vdwg.mxu0
    %4067 = vmatpush.xpose.msra.mxu0 0.0
    %4068 = vmatpush.xpose.msra.mxu0 0.0
    %4069 = vmatpush.xpose.msra.mxu0 0.0
    %4070 = vmatpush.xpose.msra.mxu0 0.0
    %4071 = vmatpush.xpose.msra.mxu0 0.0
    %4072 = vmatpush.xpose.msra.mxu0 0.0
    %4073 = vmatpush.xpose.msra.mxu0 0.0
    %4074 = vmatpush.xpose.msra.mxu0 0.0
    %4075 = vmatpush.xpose.msra.mxu0 0.0
    %4076 = vmatpush.xpose.msra.mxu0 0.0
    %4077 = vmatpush.xpose.msra.mxu0 0.0
    %4078 = vmatpush.xpose.msra.mxu0 0.0
    %4079 = vmatpush.xpose.msra.mxu0 %v2603
    %4080 = vmatpush.xpose.msra.mxu0 %v2539
    %4081 = vmatpush.xpose.msra.mxu0 %v2475
    %4082 = vmatpush.xpose.msra.mxu0 %v2411
    %4083 = vmatmul.f32.gmra.mxu0 %v127
    %v4084 = vpop.f32.mrf.mxu0
    %v4085 = vadd.f32 %v4056, %v4084
    %4086 = vmatmul.f32.gmra.mxu0 %v191
    %v4087 = vpop.f32.mrf.mxu0
    %v4088 = vadd.f32 %v4059, %v4087
    %4089 = vmatmul.f32.gmra.mxu0 %v2283
    %v4090 = vpop.f32.mrf.mxu0
    %v4091 = vadd.f32 %v4062, %v4090
    %4092 = vmatmul.f32.gmra.mxu0 %v2347
    %v4093 = vpop.f32.mrf.mxu0
    %v4094 = vadd.f32 %v4065, %v4093
    %4095 = vdwg.mxu0
    %4096 = vmatpush.xpose.msra.mxu0 0.0
    %4097 = vmatpush.xpose.msra.mxu0 0.0
    %4098 = vmatpush.xpose.msra.mxu0 0.0
    %4099 = vmatpush.xpose.msra.mxu0 0.0
    %4100 = vmatpush.xpose.msra.mxu0 0.0
    %4101 = vmatpush.xpose.msra.mxu0 0.0
    %4102 = vmatpush.xpose.msra.mxu0 0.0
    %4103 = vmatpush.xpose.msra.mxu0 0.0
    %4104 = vmatpush.xpose.msra.mxu0 0.0
    %4105 = vmatpush.xpose.msra.mxu0 0.0
    %4106 = vmatpush.xpose.msra.mxu0 0.0
    %4107 = vmatpush.xpose.msra.mxu0 0.0
    %4108 = vmatpush.xpose.msra.mxu0 %v2604
    %4109 = vmatpush.xpose.msra.mxu0 %v2540
    %4110 = vmatpush.xpose.msra.mxu0 %v2476
    %4111 = vmatpush.xpose.msra.mxu0 %v2412
    %4112 = vmatmul.f32.gmra.mxu0 %v128
    %v4113 = vpop.f32.mrf.mxu0
    %v4114 = vadd.f32 %v4085, %v4113
    %4115 = vmatmul.f32.gmra.mxu0 %v192
    %v4116 = vpop.f32.mrf.mxu0
    %v4117 = vadd.f32 %v4088, %v4116
    %4118 = vmatmul.f32.gmra.mxu0 %v2284
    %v4119 = vpop.f32.mrf.mxu0
    %v4120 = vadd.f32 %v4091, %v4119
    %4121 = vmatmul.f32.gmra.mxu0 %v2348
    %v4122 = vpop.f32.mrf.mxu0
    %v4123 = vadd.f32 %v4094, %v4122
    %4124 = vdwg.mxu0
    %4125 = vmatpush.xpose.msra.mxu0 0.0
    %4126 = vmatpush.xpose.msra.mxu0 0.0
    %4127 = vmatpush.xpose.msra.mxu0 0.0
    %4128 = vmatpush.xpose.msra.mxu0 0.0
    %4129 = vmatpush.xpose.msra.mxu0 0.0
    %4130 = vmatpush.xpose.msra.mxu0 0.0
    %4131 = vmatpush.xpose.msra.mxu0 0.0
    %4132 = vmatpush.xpose.msra.mxu0 0.0
    %4133 = vmatpush.xpose.msra.mxu0 0.0
    %4134 = vmatpush.xpose.msra.mxu0 0.0
    %4135 = vmatpush.xpose.msra.mxu0 0.0
    %4136 = vmatpush.xpose.msra.mxu0 0.0
    %4137 = vmatpush.xpose.msra.mxu0 %v2605
    %4138 = vmatpush.xpose.msra.mxu0 %v2541
    %4139 = vmatpush.xpose.msra.mxu0 %v2477
    %4140 = vmatpush.xpose.msra.mxu0 %v2413
    %4141 = vmatmul.f32.gmra.mxu0 %v129
    %v4142 = vpop.f32.mrf.mxu0
    %v4143 = vadd.f32 %v4114, %v4142
    %4144 = vmatmul.f32.gmra.mxu0 %v193
    %v4145 = vpop.f32.mrf.mxu0
    %v4146 = vadd.f32 %v4117, %v4145
    %4147 = vmatmul.f32.gmra.mxu0 %v2285
    %v4148 = vpop.f32.mrf.mxu0
    %v4149 = vadd.f32 %v4120, %v4148
    %4150 = vmatmul.f32.gmra.mxu0 %v2349
    %v4151 = vpop.f32.mrf.mxu0
    %v4152 = vadd.f32 %v4123, %v4151
    %4153 = vdwg.mxu0
    %4154 = vmatpush.xpose.msra.mxu0 0.0
    %4155 = vmatpush.xpose.msra.mxu0 0.0
    %4156 = vmatpush.xpose.msra.mxu0 0.0
    %4157 = vmatpush.xpose.msra.mxu0 0.0
    %4158 = vmatpush.xpose.msra.mxu0 0.0
    %4159 = vmatpush.xpose.msra.mxu0 0.0
    %4160 = vmatpush.xpose.msra.mxu0 0.0
    %4161 = vmatpush.xpose.msra.mxu0 0.0
    %4162 = vmatpush.xpose.msra.mxu0 0.0
    %4163 = vmatpush.xpose.msra.mxu0 0.0
    %4164 = vmatpush.xpose.msra.mxu0 0.0
    %4165 = vmatpush.xpose.msra.mxu0 0.0
    %4166 = vmatpush.xpose.msra.mxu0 %v2606
    %4167 = vmatpush.xpose.msra.mxu0 %v2542
    %4168 = vmatpush.xpose.msra.mxu0 %v2478
    %4169 = vmatpush.xpose.msra.mxu0 %v2414
    %4170 = vmatmul.f32.gmra.mxu0 %v130
    %v4171 = vpop.f32.mrf.mxu0
    %v4172 = vadd.f32 %v4143, %v4171
    %4173 = vmatmul.f32.gmra.mxu0 %v194
    %v4174 = vpop.f32.mrf.mxu0
    %v4175 = vadd.f32 %v4146, %v4174
    %4176 = vmatmul.f32.gmra.mxu0 %v2286
    %v4177 = vpop.f32.mrf.mxu0
    %v4178 = vadd.f32 %v4149, %v4177
    %4179 = vmatmul.f32.gmra.mxu0 %v2350
    %v4180 = vpop.f32.mrf.mxu0
    %v4181 = vadd.f32 %v4152, %v4180
    %4182 = vdwg.mxu0
    %4183 = vmatpush.xpose.msra.mxu0 0.0
    %4184 = vmatpush.xpose.msra.mxu0 0.0
    %4185 = vmatpush.xpose.msra.mxu0 0.0
    %4186 = vmatpush.xpose.msra.mxu0 0.0
    %4187 = vmatpush.xpose.msra.mxu0 0.0
    %4188 = vmatpush.xpose.msra.mxu0 0.0
    %4189 = vmatpush.xpose.msra.mxu0 0.0
    %4190 = vmatpush.xpose.msra.mxu0 0.0
    %4191 = vmatpush.xpose.msra.mxu0 0.0
    %4192 = vmatpush.xpose.msra.mxu0 0.0
    %4193 = vmatpush.xpose.msra.mxu0 0.0
    %4194 = vmatpush.xpose.msra.mxu0 0.0
    %4195 = vmatpush.xpose.msra.mxu0 %v2607
    %4196 = vmatpush.xpose.msra.mxu0 %v2543
    %4197 = vmatpush.xpose.msra.mxu0 %v2479
    %4198 = vmatpush.xpose.msra.mxu0 %v2415
    %4199 = vmatmul.f32.gmra.mxu0 %v131
    %v4200 = vpop.f32.mrf.mxu0
    %v4201 = vadd.f32 %v4172, %v4200
    %4202 = vmatmul.f32.gmra.mxu0 %v195
    %v4203 = vpop.f32.mrf.mxu0
    %v4204 = vadd.f32 %v4175, %v4203
    %4205 = vmatmul.f32.gmra.mxu0 %v2287
    %v4206 = vpop.f32.mrf.mxu0
    %v4207 = vadd.f32 %v4178, %v4206
    %4208 = vmatmul.f32.gmra.mxu0 %v2351
    %v4209 = vpop.f32.mrf.mxu0
    %v4210 = vadd.f32 %v4181, %v4209
    %4211 = vdwg.mxu0
    %4212 = vmatpush.xpose.msra.mxu0 0.0
    %4213 = vmatpush.xpose.msra.mxu0 0.0
    %4214 = vmatpush.xpose.msra.mxu0 0.0
    %4215 = vmatpush.xpose.msra.mxu0 0.0
    %4216 = vmatpush.xpose.msra.mxu0 0.0
    %4217 = vmatpush.xpose.msra.mxu0 0.0
    %4218 = vmatpush.xpose.msra.mxu0 0.0
    %4219 = vmatpush.xpose.msra.mxu0 0.0
    %4220 = vmatpush.xpose.msra.mxu0 0.0
    %4221 = vmatpush.xpose.msra.mxu0 0.0
    %4222 = vmatpush.xpose.msra.mxu0 0.0
    %4223 = vmatpush.xpose.msra.mxu0 0.0
    %4224 = vmatpush.xpose.msra.mxu0 %v2608
    %4225 = vmatpush.xpose.msra.mxu0 %v2544
    %4226 = vmatpush.xpose.msra.mxu0 %v2480
    %4227 = vmatpush.xpose.msra.mxu0 %v2416
    %4228 = vmatmul.f32.gmra.mxu0 %v132
    %v4229 = vpop.f32.mrf.mxu0
    %v4230 = vadd.f32 %v4201, %v4229
    %4231 = vmatmul.f32.gmra.mxu0 %v196
    %v4232 = vpop.f32.mrf.mxu0
    %v4233 = vadd.f32 %v4204, %v4232
    %4234 = vmatmul.f32.gmra.mxu0 %v2288
    %v4235 = vpop.f32.mrf.mxu0
    %v4236 = vadd.f32 %v4207, %v4235
    %4237 = vmatmul.f32.gmra.mxu0 %v2352
    %v4238 = vpop.f32.mrf.mxu0
    %v4239 = vadd.f32 %v4210, %v4238
    %4240 = vdwg.mxu0
    %4241 = vmatpush.xpose.msra.mxu0 0.0
    %4242 = vmatpush.xpose.msra.mxu0 0.0
    %4243 = vmatpush.xpose.msra.mxu0 0.0
    %4244 = vmatpush.xpose.msra.mxu0 0.0
    %4245 = vmatpush.xpose.msra.mxu0 0.0
    %4246 = vmatpush.xpose.msra.mxu0 0.0
    %4247 = vmatpush.xpose.msra.mxu0 0.0
    %4248 = vmatpush.xpose.msra.mxu0 0.0
    %4249 = vmatpush.xpose.msra.mxu0 0.0
    %4250 = vmatpush.xpose.msra.mxu0 0.0
    %4251 = vmatpush.xpose.msra.mxu0 0.0
    %4252 = vmatpush.xpose.msra.mxu0 0.0
    %4253 = vmatpush.xpose.msra.mxu0 %v2609
    %4254 = vmatpush.xpose.msra.mxu0 %v2545
    %4255 = vmatpush.xpose.msra.mxu0 %v2481
    %4256 = vmatpush.xpose.msra.mxu0 %v2417
    %4257 = vmatmul.f32.gmra.mxu0 %v133
    %v4258 = vpop.f32.mrf.mxu0
    %v4259 = vadd.f32 %v4230, %v4258
    %4260 = vmatmul.f32.gmra.mxu0 %v197
    %v4261 = vpop.f32.mrf.mxu0
    %v4262 = vadd.f32 %v4233, %v4261
    %4263 = vmatmul.f32.gmra.mxu0 %v2289
    %v4264 = vpop.f32.mrf.mxu0
    %v4265 = vadd.f32 %v4236, %v4264
    %4266 = vmatmul.f32.gmra.mxu0 %v2353
    %v4267 = vpop.f32.mrf.mxu0
    %v4268 = vadd.f32 %v4239, %v4267
    %4269 = vdwg.mxu0
    %4270 = vmatpush.xpose.msra.mxu0 0.0
    %4271 = vmatpush.xpose.msra.mxu0 0.0
    %4272 = vmatpush.xpose.msra.mxu0 0.0
    %4273 = vmatpush.xpose.msra.mxu0 0.0
    %4274 = vmatpush.xpose.msra.mxu0 0.0
    %4275 = vmatpush.xpose.msra.mxu0 0.0
    %4276 = vmatpush.xpose.msra.mxu0 0.0
    %4277 = vmatpush.xpose.msra.mxu0 0.0
    %4278 = vmatpush.xpose.msra.mxu0 0.0
    %4279 = vmatpush.xpose.msra.mxu0 0.0
    %4280 = vmatpush.xpose.msra.mxu0 0.0
    %4281 = vmatpush.xpose.msra.mxu0 0.0
    %4282 = vmatpush.xpose.msra.mxu0 %v2610
    %4283 = vmatpush.xpose.msra.mxu0 %v2546
    %4284 = vmatpush.xpose.msra.mxu0 %v2482
    %4285 = vmatpush.xpose.msra.mxu0 %v2418
    %4286 = vmatmul.f32.gmra.mxu0 %v134
    %v4287 = vpop.f32.mrf.mxu0
    %v4288 = vadd.f32 %v4259, %v4287
    %4289 = vmatmul.f32.gmra.mxu0 %v198
    %v4290 = vpop.f32.mrf.mxu0
    %v4291 = vadd.f32 %v4262, %v4290
    %4292 = vmatmul.f32.gmra.mxu0 %v2290
    %v4293 = vpop.f32.mrf.mxu0
    %v4294 = vadd.f32 %v4265, %v4293
    %4295 = vmatmul.f32.gmra.mxu0 %v2354
    %v4296 = vpop.f32.mrf.mxu0
    %v4297 = vadd.f32 %v4268, %v4296
    %4298 = vdwg.mxu0
    %4299 = vmatpush.xpose.msra.mxu0 0.0
    %4300 = vmatpush.xpose.msra.mxu0 0.0
    %4301 = vmatpush.xpose.msra.mxu0 0.0
    %4302 = vmatpush.xpose.msra.mxu0 0.0
    %4303 = vmatpush.xpose.msra.mxu0 0.0
    %4304 = vmatpush.xpose.msra.mxu0 0.0
    %4305 = vmatpush.xpose.msra.mxu0 0.0
    %4306 = vmatpush.xpose.msra.mxu0 0.0
    %4307 = vmatpush.xpose.msra.mxu0 0.0
    %4308 = vmatpush.xpose.msra.mxu0 0.0
    %4309 = vmatpush.xpose.msra.mxu0 0.0
    %4310 = vmatpush.xpose.msra.mxu0 0.0
    %4311 = vmatpush.xpose.msra.mxu0 %v2611
    %4312 = vmatpush.xpose.msra.mxu0 %v2547
    %4313 = vmatpush.xpose.msra.mxu0 %v2483
    %4314 = vmatpush.xpose.msra.mxu0 %v2419
    %4315 = vmatmul.f32.gmra.mxu0 %v135
    %v4316 = vpop.f32.mrf.mxu0
    %v4317 = vadd.f32 %v4288, %v4316
    %4318 = vmatmul.f32.gmra.mxu0 %v199
    %v4319 = vpop.f32.mrf.mxu0
    %v4320 = vadd.f32 %v4291, %v4319
    %4321 = vmatmul.f32.gmra.mxu0 %v2291
    %v4322 = vpop.f32.mrf.mxu0
    %v4323 = vadd.f32 %v4294, %v4322
    %4324 = vmatmul.f32.gmra.mxu0 %v2355
    %v4325 = vpop.f32.mrf.mxu0
    %v4326 = vadd.f32 %v4297, %v4325
    %4327 = vdwg.mxu0
    %4328 = vmatpush.xpose.msra.mxu0 0.0
    %4329 = vmatpush.xpose.msra.mxu0 0.0
    %4330 = vmatpush.xpose.msra.mxu0 0.0
    %4331 = vmatpush.xpose.msra.mxu0 0.0
    %4332 = vmatpush.xpose.msra.mxu0 0.0
    %4333 = vmatpush.xpose.msra.mxu0 0.0
    %4334 = vmatpush.xpose.msra.mxu0 0.0
    %4335 = vmatpush.xpose.msra.mxu0 0.0
    %4336 = vmatpush.xpose.msra.mxu0 0.0
    %4337 = vmatpush.xpose.msra.mxu0 0.0
    %4338 = vmatpush.xpose.msra.mxu0 0.0
    %4339 = vmatpush.xpose.msra.mxu0 0.0
    %4340 = vmatpush.xpose.msra.mxu0 %v2612
    %4341 = vmatpush.xpose.msra.mxu0 %v2548
    %4342 = vmatpush.xpose.msra.mxu0 %v2484
    %4343 = vmatpush.xpose.msra.mxu0 %v2420
    %4344 = vmatmul.f32.gmra.mxu0 %v136
    %v4345 = vpop.f32.mrf.mxu0
    %v4346 = vadd.f32 %v4317, %v4345
    %4347 = vmatmul.f32.gmra.mxu0 %v200
    %v4348 = vpop.f32.mrf.mxu0
    %v4349 = vadd.f32 %v4320, %v4348
    %4350 = vmatmul.f32.gmra.mxu0 %v2292
    %v4351 = vpop.f32.mrf.mxu0
    %v4352 = vadd.f32 %v4323, %v4351
    %4353 = vmatmul.f32.gmra.mxu0 %v2356
    %v4354 = vpop.f32.mrf.mxu0
    %v4355 = vadd.f32 %v4326, %v4354
    %4356 = vdwg.mxu0
    %4357 = vmatpush.xpose.msra.mxu0 0.0
    %4358 = vmatpush.xpose.msra.mxu0 0.0
    %4359 = vmatpush.xpose.msra.mxu0 0.0
    %4360 = vmatpush.xpose.msra.mxu0 0.0
    %4361 = vmatpush.xpose.msra.mxu0 0.0
    %4362 = vmatpush.xpose.msra.mxu0 0.0
    %4363 = vmatpush.xpose.msra.mxu0 0.0
    %4364 = vmatpush.xpose.msra.mxu0 0.0
    %4365 = vmatpush.xpose.msra.mxu0 0.0
    %4366 = vmatpush.xpose.msra.mxu0 0.0
    %4367 = vmatpush.xpose.msra.mxu0 0.0
    %4368 = vmatpush.xpose.msra.mxu0 0.0
    %4369 = vmatpush.xpose.msra.mxu0 %v2613
    %4370 = vmatpush.xpose.msra.mxu0 %v2549
    %4371 = vmatpush.xpose.msra.mxu0 %v2485
    %4372 = vmatpush.xpose.msra.mxu0 %v2421
    %4373 = vmatmul.f32.gmra.mxu0 %v137
    %v4374 = vpop.f32.mrf.mxu0
    %v4375 = vadd.f32 %v4346, %v4374
    %4376 = vmatmul.f32.gmra.mxu0 %v201
    %v4377 = vpop.f32.mrf.mxu0
    %v4378 = vadd.f32 %v4349, %v4377
    %4379 = vmatmul.f32.gmra.mxu0 %v2293
    %v4380 = vpop.f32.mrf.mxu0
    %v4381 = vadd.f32 %v4352, %v4380
    %4382 = vmatmul.f32.gmra.mxu0 %v2357
    %v4383 = vpop.f32.mrf.mxu0
    %v4384 = vadd.f32 %v4355, %v4383
    %4385 = vdwg.mxu0
    %4386 = vmatpush.xpose.msra.mxu0 0.0
    %4387 = vmatpush.xpose.msra.mxu0 0.0
    %4388 = vmatpush.xpose.msra.mxu0 0.0
    %4389 = vmatpush.xpose.msra.mxu0 0.0
    %4390 = vmatpush.xpose.msra.mxu0 0.0
    %4391 = vmatpush.xpose.msra.mxu0 0.0
    %4392 = vmatpush.xpose.msra.mxu0 0.0
    %4393 = vmatpush.xpose.msra.mxu0 0.0
    %4394 = vmatpush.xpose.msra.mxu0 0.0
    %4395 = vmatpush.xpose.msra.mxu0 0.0
    %4396 = vmatpush.xpose.msra.mxu0 0.0
    %4397 = vmatpush.xpose.msra.mxu0 0.0
    %4398 = vmatpush.xpose.msra.mxu0 %v2614
    %4399 = vmatpush.xpose.msra.mxu0 %v2550
    %4400 = vmatpush.xpose.msra.mxu0 %v2486
    %4401 = vmatpush.xpose.msra.mxu0 %v2422
    %4402 = vmatmul.f32.gmra.mxu0 %v138
    %v4403 = vpop.f32.mrf.mxu0
    %v4404 = vadd.f32 %v4375, %v4403
    %4405 = vmatmul.f32.gmra.mxu0 %v202
    %v4406 = vpop.f32.mrf.mxu0
    %v4407 = vadd.f32 %v4378, %v4406
    %4408 = vmatmul.f32.gmra.mxu0 %v2294
    %v4409 = vpop.f32.mrf.mxu0
    %v4410 = vadd.f32 %v4381, %v4409
    %4411 = vmatmul.f32.gmra.mxu0 %v2358
    %v4412 = vpop.f32.mrf.mxu0
    %v4413 = vadd.f32 %v4384, %v4412
    %4414 = vdwg.mxu0
    %4415 = vmatpush.xpose.msra.mxu0 0.0
    %4416 = vmatpush.xpose.msra.mxu0 0.0
    %4417 = vmatpush.xpose.msra.mxu0 0.0
    %4418 = vmatpush.xpose.msra.mxu0 0.0
    %4419 = vmatpush.xpose.msra.mxu0 0.0
    %4420 = vmatpush.xpose.msra.mxu0 0.0
    %4421 = vmatpush.xpose.msra.mxu0 0.0
    %4422 = vmatpush.xpose.msra.mxu0 0.0
    %4423 = vmatpush.xpose.msra.mxu0 0.0
    %4424 = vmatpush.xpose.msra.mxu0 0.0
    %4425 = vmatpush.xpose.msra.mxu0 0.0
    %4426 = vmatpush.xpose.msra.mxu0 0.0
    %4427 = vmatpush.xpose.msra.mxu0 %v2615
    %4428 = vmatpush.xpose.msra.mxu0 %v2551
    %4429 = vmatpush.xpose.msra.mxu0 %v2487
    %4430 = vmatpush.xpose.msra.mxu0 %v2423
    %4431 = vmatmul.f32.gmra.mxu0 %v139
    %v4432 = vpop.f32.mrf.mxu0
    %v4433 = vadd.f32 %v4404, %v4432
    %4434 = vmatmul.f32.gmra.mxu0 %v203
    %v4435 = vpop.f32.mrf.mxu0
    %v4436 = vadd.f32 %v4407, %v4435
    %4437 = vmatmul.f32.gmra.mxu0 %v2295
    %v4438 = vpop.f32.mrf.mxu0
    %v4439 = vadd.f32 %v4410, %v4438
    %4440 = vmatmul.f32.gmra.mxu0 %v2359
    %v4441 = vpop.f32.mrf.mxu0
    %v4442 = vadd.f32 %v4413, %v4441
    %4443 = vdwg.mxu0
    %4444 = vmatpush.xpose.msra.mxu0 0.0
    %4445 = vmatpush.xpose.msra.mxu0 0.0
    %4446 = vmatpush.xpose.msra.mxu0 0.0
    %4447 = vmatpush.xpose.msra.mxu0 0.0
    %4448 = vmatpush.xpose.msra.mxu0 0.0
    %4449 = vmatpush.xpose.msra.mxu0 0.0
    %4450 = vmatpush.xpose.msra.mxu0 0.0
    %4451 = vmatpush.xpose.msra.mxu0 0.0
    %4452 = vmatpush.xpose.msra.mxu0 0.0
    %4453 = vmatpush.xpose.msra.mxu0 0.0
    %4454 = vmatpush.xpose.msra.mxu0 0.0
    %4455 = vmatpush.xpose.msra.mxu0 0.0
    %4456 = vmatpush.xpose.msra.mxu0 %v2616
    %4457 = vmatpush.xpose.msra.mxu0 %v2552
    %4458 = vmatpush.xpose.msra.mxu0 %v2488
    %4459 = vmatpush.xpose.msra.mxu0 %v2424
    %4460 = vmatmul.f32.gmra.mxu0 %v140
    %v4461 = vpop.f32.mrf.mxu0
    %v4462 = vadd.f32 %v4433, %v4461
    %4463 = vmatmul.f32.gmra.mxu0 %v204
    %v4464 = vpop.f32.mrf.mxu0
    %v4465 = vadd.f32 %v4436, %v4464
    %4466 = vmatmul.f32.gmra.mxu0 %v2296
    %v4467 = vpop.f32.mrf.mxu0
    %v4468 = vadd.f32 %v4439, %v4467
    %4469 = vmatmul.f32.gmra.mxu0 %v2360
    %v4470 = vpop.f32.mrf.mxu0
    %v4471 = vadd.f32 %v4442, %v4470
    %4472 = vdwg.mxu0
    %v4473 = vlaneseq
    %v4474 = vshrl.u32 %v4473, 7
    %v4475 = vadd.s32 %v4474, 8
    %v4476 = vadd.s32 %v4474, 16
    %v4477 = vadd.s32 %v4474, 24
    %vm4478 = vcmp.lt.s32.totalorder %v4474, 16
    %vm4479 = vcmp.lt.s32.totalorder %v4475, 16
    %vm4480 = vcmp.lt.s32.totalorder %v4476, 16
    %vm4481 = vcmp.lt.s32.totalorder %v4477, 16
    %v4482 = vsel %vm4478, 0.00390625, 1.0
    %v4483 = vsel %vm4479, 0.00390625, 1.0
    %v4484 = vsel %vm4480, 0.00390625, 1.0
    %v4485 = vsel %vm4481, 0.00390625, 1.0
    %v4486 = vmul.f32 %v4462, %v4482
    %v4487 = vmul.f32 %v4465, %v4483
    %v4488 = vmul.f32 %v4468, %v4484
    %v4489 = vmul.f32 %v4471, %v4485
    %v4490 = vld [vmem:[%s2] sm:$0xff]
    %v4491 = vld [vmem:[%s2 + $0x8] sm:$0xff]
    %v4492 = vld [vmem:[%s2 + $0x10] sm:$0xff]
    %v4493 = vld [vmem:[%s2 + $0x18] sm:$0xff]
    %v4494 = vld [vmem:[%s3] sm:$0x1]
    %v4496 = vperm.slane %v4494, 0
    %vm4498 = vcmask 261120
    %v4500 = vsel %vm4498, %v4486, 0
    %v4503 = vsel %vm4498, %v4487, 0
    %v4506 = vsel %vm4498, %v4488, 0
    %v4509 = vsel %vm4498, %v4489, 0
    %4511 = vmatpush.msra.mxu0 0.0
    %4512 = vmatpush.msra.mxu0 0.0
    %4513 = vmatpush.msra.mxu0 0.0
    %4514 = vmatpush.msra.mxu0 0.0
    %4515 = vmatpush.msra.mxu0 0.0
    %4516 = vmatpush.msra.mxu0 0.0
    %4517 = vmatpush.msra.mxu0 0.0
    %4518 = vmatpush.msra.mxu0 0.0
    %4519 = vmatpush.msra.mxu0 0.0
    %4520 = vmatpush.msra.mxu0 0.0
    %4521 = vmatpush.msra.mxu0 0.0
    %4522 = vmatpush.msra.mxu0 0.0
    %4523 = vmatpush.msra.mxu0 %v4493
    %4524 = vmatpush.msra.mxu0 %v4492
    %4525 = vmatpush.msra.mxu0 %v4491
    %4526 = vmatpush.msra.mxu0 %v4490
    %4527 = vmatmul.f32.gmra.mxu0 %v4500
    %v4528 = vpop.f32.mrf.mxu0
    %v4529 = vadd.f32 %v4496, %v4528
    %4530 = vmatmul.f32.gmra.mxu0 %v4503
    %v4531 = vpop.f32.mrf.mxu0
    %v4532 = vadd.f32 %v4496, %v4531
    %4533 = vmatmul.f32.gmra.mxu0 %v4506
    %v4534 = vpop.f32.mrf.mxu0
    %v4535 = vadd.f32 %v4496, %v4534
    %4536 = vmatmul.f32.gmra.mxu0 %v4509
    %v4537 = vpop.f32.mrf.mxu0
    %v4538 = vadd.f32 %v4496, %v4537
    %4539 = vdwg.mxu0
    %vm4540 = vcmask 80896
    %v4541 = vsel %vm4540, %v4529, -inf
    %4542 = vmax.xlane.f32.xlu0 %v4541
    %v4543 = vpop.xlane.xlu0 %4542
    %v4544 = vsel %vm4540, %v4532, -inf
    %4545 = vmax.xlane.f32.xlu0 %v4544
    %v4546 = vpop.xlane.xlu0 %4545
    %v4547 = vsel %vm4540, %v4535, -inf
    %4548 = vmax.xlane.f32.xlu0 %v4547
    %v4549 = vpop.xlane.xlu0 %4548
    %v4550 = vsel %vm4540, %v4538, -inf
    %4551 = vmax.xlane.f32.xlu0 %v4550
    %v4552 = vpop.xlane.xlu0 %4551
    %v4553 = vsub.f32 %v4529, %v4543
    %v4554 = vsub.f32 %v4532, %v4546
    %v4555 = vsub.f32 %v4535, %v4549
    %v4556 = vsub.f32 %v4538, %v4552
    %v4557 = vmul.f32 %v4553, 1.442695
    %v4558 = vpow.pop %v4557
    %v4559 = vmul.f32 %v4554, 1.442695
    %v4560 = vpow.pop %v4559
    %v4561 = vmul.f32 %v4555, 1.442695
    %v4562 = vpow.pop %v4561
    %v4563 = vmul.f32 %v4556, 1.442695
    %v4564 = vpow.pop %v4563
    %v4565 = vsel %vm4540, %v4558, 0.0
    %4566 = vadd.xlane.f32.xlu0 %v4565
    %v4567 = vpop.xlane.xlu0 %4566
    %v4568 = vsel %vm4540, %v4560, 0.0
    %4569 = vadd.xlane.f32.xlu0 %v4568
    %v4570 = vpop.xlane.xlu0 %4569
    %v4571 = vsel %vm4540, %v4562, 0.0
    %4572 = vadd.xlane.f32.xlu0 %v4571
    %v4573 = vpop.xlane.xlu0 %4572
    %v4574 = vsel %vm4540, %v4564, 0.0
    %4575 = vadd.xlane.f32.xlu0 %v4574
    %v4576 = vpop.xlane.xlu0 %4575
    %v4577 = vrcp.pop %v4567
    %v4578 = vmul.f32 %v4567, %v4577
    %v4579 = vsub.f32 1.0, %v4578
    %v4580 = vmul.f32 %v4577, %v4579
    %v4581 = vadd.f32 %v4577, %v4580
    %vm4582 = vweird.f32 %v4567
    %vm4583 = vweird.f32 %v4577
    %vm4584 = vmor %vm4582, %vm4583
    %v4585 = vsel %vm4584, %v4577, %v4581
    %v4586 = vand.u32 2147483647, %v4567
    %vm4587 = vcmp.eq.f32.partialorder %v4586, 8.507059e+37
    %v4588 = vand.u32 %v4567, 2147483648
    %v4589 = vor.u32 1.1754944e-38, %v4588
    %v4590 = vsel %vm4587, %v4589, %v4585
    %v4591 = vmul.f32 %v4558, %v4590
    %v4592 = vrcp.pop %v4570
    %v4593 = vmul.f32 %v4570, %v4592
    %v4594 = vsub.f32 1.0, %v4593
    %v4595 = vmul.f32 %v4592, %v4594
    %v4596 = vadd.f32 %v4592, %v4595
    %vm4597 = vweird.f32 %v4570
    %vm4598 = vweird.f32 %v4592
    %vm4599 = vmor %vm4597, %vm4598
    %v4600 = vsel %vm4599, %v4592, %v4596
    %v4601 = vand.u32 2147483647, %v4570
    %vm4602 = vcmp.eq.f32.partialorder %v4601, 8.507059e+37
    %v4603 = vand.u32 %v4570, 2147483648
    %v4604 = vor.u32 1.1754944e-38, %v4603
    %v4605 = vsel %vm4602, %v4604, %v4600
    %v4606 = vmul.f32 %v4560, %v4605
    %v4607 = vrcp.pop %v4573
    %v4608 = vmul.f32 %v4573, %v4607
    %v4609 = vsub.f32 1.0, %v4608
    %v4610 = vmul.f32 %v4607, %v4609
    %v4611 = vadd.f32 %v4607, %v4610
    %vm4612 = vweird.f32 %v4573
    %vm4613 = vweird.f32 %v4607
    %vm4614 = vmor %vm4612, %vm4613
    %v4615 = vsel %vm4614, %v4607, %v4611
    %v4616 = vand.u32 2147483647, %v4573
    %vm4617 = vcmp.eq.f32.partialorder %v4616, 8.507059e+37
    %v4618 = vand.u32 %v4573, 2147483648
    %v4619 = vor.u32 1.1754944e-38, %v4618
    %v4620 = vsel %vm4617, %v4619, %v4615
    %v4621 = vmul.f32 %v4562, %v4620
    %v4622 = vrcp.pop %v4576
    %v4623 = vmul.f32 %v4576, %v4622
    %v4624 = vsub.f32 1.0, %v4623
    %v4625 = vmul.f32 %v4622, %v4624
    %v4626 = vadd.f32 %v4622, %v4625
    %vm4627 = vweird.f32 %v4576
    %vm4628 = vweird.f32 %v4622
    %vm4629 = vmor %vm4627, %vm4628
    %v4630 = vsel %vm4629, %v4622, %v4626
    %v4631 = vand.u32 2147483647, %v4576
    %vm4632 = vcmp.eq.f32.partialorder %v4631, 8.507059e+37
    %v4633 = vand.u32 %v4576, 2147483648
    %v4634 = vor.u32 1.1754944e-38, %v4633
    %v4635 = vsel %vm4632, %v4634, %v4630
    %v4636 = vmul.f32 %v4564, %v4635
    %4637 = vrot.lane.b32.xlu0 %v4488, 32
    %v4638 = vpop.permute.xlu0 %4637
    %4639 = vrot.lane.b32.xlu0 %v4489, 32
    %v4640 = vpop.permute.xlu0 %4639
    %4645 = vrot.lane.b32.xlu0 %v4591, 64
    %v4646 = vpop.permute.xlu0 %4645
    %4647 = vrot.lane.b32.xlu0 %v4606, 64
    %v4648 = vpop.permute.xlu0 %4647
    %4653 = vrot.lane.b32.xlu0 %v4621, 74
    %v4654 = vpop.permute.xlu0 %4653
    %4655 = vrot.lane.b32.xlu0 %v4636, 74
    %v4656 = vpop.permute.xlu0 %4655
    %v4659 = vsel %vm4498, %v4486, %v4638
    %v4660 = vsel %vm4498, %v4487, %v4640
    %vm4661 = vcmask 523264
    %v4662 = vsel %vm4661, %v4659, %v4646
    %v4663 = vsel %vm4661, %v4660, %v4648
    %vm4664 = vcmask 605184
    %v4665 = vsel %vm4664, %v4662, %v4654
    %v4666 = vsel %vm4664, %v4663, %v4656
    %vm4667 = vcmask 687104
    %v4668 = vsel %vm4667, %v4665, 0.0
    %v4669 = vsel %vm4667, %v4666, 0.0
    %4670 = vst [vmem:[#allocation8] sm:$0xff] %v4668
    %4671 = vst [vmem:[#allocation8 + $0x8] sm:$0xff] %v4669
    // Predicated region
    $region46: #{tpu_custom_call.1} parent=1 // pred_check
      _
    $region47: #{tpu_custom_call.1} parent=1 // pred_check_branch
      %4673 = sbr.rel (0) target = $region49
    $region48: #{tpu_custom_call.1} parent=1 // pred_region
      %4675 = vsyncadd [#allocation4], 0
      %s4676 = sshll.u32 [#allocation8], 4
      %s4677 = int_to_ptr.vmem [resolvable:$true] %s4676
      %s4678 = sshll.u32 %s8, 4
      %s4679 = int_to_ptr.hbm [resolvable:$true] %s4678
      %4684 = dma.vmem_to_hbm [thread:$0]  %s4677, 256, %s4679, [#allocation4], 128, 128, 8
    $region49: #{tpu_custom_call.1} parent=1 // pred_fallthru
      _
    // Predicated region
    $region50: #{tpu_custom_call.1} parent=1 // pred_check
      _
    $region51: #{tpu_custom_call.1} parent=1 // pred_check_branch
      %4686 = sbr.rel (0) target = $region53
    $region52: #{tpu_custom_call.1} parent=1 // pred_region
      %4688 = dma.done [#allocation4], 256
    $region53: #{tpu_custom_call.1} parent=1 // pred_fallthru
      _
    %4689 = vsyncpa [#allocation3], 1
    %4690 = vsyncpa [#allocation6], 1
    %4691 = vsyncpa [#allocation4], 1

</llo_original>
